<compile_context>
chip_gen: v5e
topology: v5e:2x2
jax: 0.10.0
libtpu: 0.0.40
codegen_flags: <defaults>
</compile_context>

<pallas_src>
import jax
import jax.numpy as jnp
import numpy as np
from jax.experimental import pallas as pl
from jax.experimental.pallas import tpu as pltpu


_KH = _KW = 3
_PAD = 1

# Source-major schedule: source slot s (0 = bn(x), 1..4 = conv1..conv4 output)
# feeds these conv layers (1-based).  After processing source s, conv_{s+1}
# has received every one of its contributions and can be finalized.
_SRC_CONSUMERS = ((1,), (2, 3, 4, 5), (3, 4, 5), (4, 5), (5,))


# ---------------------------------------------------------------------------
# Trace-time weight preparation (pure JAX, runs once per jitted forward)
# ---------------------------------------------------------------------------
def _band_conv_weight(w_hwio, Wo, Wp):
    """HWIO (KH,KW,Cin,Cout) -> (KH, Wp*Cin, Wo*Cout) block-Toeplitz weights.

    With activations stored row-flattened as (Hp, Wp*Cin) (zero-padded), a
    stride-1 'same' conv becomes, for every output row y:
        out[y, x*Cout+co] = sum_dy  padded[y+dy, :] @ band[dy]
    i.e. three row-shifted MXU matmuls with fully lane-dense N = Wo*Cout.
    band[dy, xin*Cin+ci, x*Cout+co] = w[dy, xin-x, ci, co] for 0 <= xin-x < KW.
    """
    KH, KW, Cin, Cout = w_hwio.shape
    wt = jnp.transpose(w_hwio, (0, 2, 3, 1))                        # (KH,Cin,Cout,KW)
    wt = jnp.broadcast_to(wt[:, :, :, None, :], (KH, Cin, Cout, Wo, KW))
    zeros = jnp.zeros((KH, Cin, Cout, Wo, Wp + 1 - KW), wt.dtype)
    g = jnp.concatenate([wt, zeros], axis=-1)                       # (KH,Cin,Cout,Wo,Wp+1)
    # Shear trick: rows of length Wp+1 re-read with row length Wp shift the
    # band right by one column per row -> d[..., x, xin] = w[dy, xin-x, ...]
    g = g.reshape(KH, Cin, Cout, Wo * (Wp + 1))[..., : Wo * Wp]
    d = g.reshape(KH, Cin, Cout, Wo, Wp)
    band = jnp.transpose(d, (0, 4, 1, 3, 2))                        # (KH,Wp,Cin,Wo,Cout)
    return band.reshape(KH, Wp * Cin, Wo * Cout)


def _prepare_weights(p, C, W, Wp):
    """Reshape the module parameters into the kernel's matmul form."""
    # Per-source weight groups, column-ordered exactly like _SRC_CONSUMERS:
    #   source bn -> [conv1]; c1 -> [conv2..conv5]; c2 -> [conv3..conv5]; ...
    src_groups = [
        [p["w1"]],
        [p["w2"],
         p["w3"][:, :, 0 * C:1 * C, :],
         p["w4"][:, :, 0 * C:1 * C, :],
         p["w5"][:, :, 0 * C:1 * C, :]],
        [p["w3"][:, :, 1 * C:2 * C, :],
         p["w4"][:, :, 1 * C:2 * C, :],
         p["w5"][:, :, 1 * C:2 * C, :]],
        [p["w4"][:, :, 2 * C:3 * C, :],
         p["w5"][:, :, 2 * C:3 * C, :]],
        [p["w5"][:, :, 3 * C:4 * C, :]],
    ]
    # One fused banded weight: (KH, Wp*C, 11*W*C); per-source lane offsets are
    # multiples of W*C = 128 so in-kernel slices stay lane-aligned.
    wf = jnp.concatenate(
        [_band_conv_weight(w, W, Wp) for grp in src_groups for w in grp],
        axis=-1)

    # 1x1 head: block-diagonal (W*C, W*C) matrices, one per dense segment,
    # so the head is 5 lane-dense (H, W*C) @ (W*C, W*C) matmuls.
    wh2 = p["wh"][0, 0]                                             # (5C, C)
    eye = jnp.eye(W, dtype=wh2.dtype)
    wh = jnp.stack(
        [jnp.kron(eye, wh2[i * C:(i + 1) * C, :]) for i in range(5)], axis=0)

    biases = jnp.stack([p["b1"], p["b2"], p["b3"], p["b4"], p["b5"], p["bh"]], 0)
    bias_t = jnp.tile(biases, (1, W))                               # (6, W*C), lane = w*C+c
    return wf, wh, bias_t


# ---------------------------------------------------------------------------
# Fused Pallas kernel
# ---------------------------------------------------------------------------
def _make_fused_kernel(H, W, C, Hp, Wp, eps):
    WC = W * C
    # Lane offsets of each source's block inside the fused banded weight.
    offs = []
    o = 0
    for cons in _SRC_CONSUMERS:
        offs.append(o)
        o += len(cons) * WC

    def kernel(xrows_ref, gamma_ref, beta_ref, x_ref, wf_ref, wh_ref, bias_ref,
               o_ref, pads_ref):
        # --- BatchNorm2d (training mode): batch stats over (N,H,W), biased var.
        xall = xrows_ref[...].astype(jnp.float32)                   # (N*H*W, C)
        mean = jnp.mean(xall, axis=0, keepdims=True)
        var = jnp.mean(jnp.square(xall - mean), axis=0, keepdims=True)
        scale = gamma_ref[...].astype(jnp.float32) * jax.lax.rsqrt(var + eps)
        shift = beta_ref[...].astype(jnp.float32) - mean * scale
        scale_t = jnp.concatenate([scale] * W, axis=1)              # (1, W*C)
        shift_t = jnp.concatenate([shift] * W, axis=1)

        # --- Zero-padded activation slots (border rows/cols stay zero).
        pads_ref[...] = jnp.zeros_like(pads_ref)
        bn = x_ref[0].astype(jnp.float32) * scale_t + shift_t       # (H, W*C)
        pads_ref[0, 1:1 + H, C:C + WC] = bn

        # --- Dense block, source-major: each producer activation is matmul'd
        #     once per dy against the concatenated banded weights of all its
        #     consumer convs; the wide result is scattered into per-layer
        #     accumulators at 128-lane-aligned offsets.  The DenseNet concats
        #     are never materialized.
        acc = [None] * 6                                            # acc[k] for conv_k
        feats = []
        for s, consumers in enumerate(_SRC_CONSUMERS):
            width = len(consumers) * WC
            off = offs[s]
            xp = pads_ref[s]                                        # (Hp, Wp*C)
            big = None
            for dy in range(_KH):
                t = jnp.dot(xp[dy:dy + H, :], wf_ref[dy, :, off:off + width],
                            preferred_element_type=jnp.float32)
                big = t if big is None else big + t
            for j, k in enumerate(consumers):
                part = big[:, j * WC:(j + 1) * WC]
                acc[k] = part if acc[k] is None else acc[k] + part
            # Layer s+1 is now complete: bias + ReLU, then stage its padded
            # copy for the remaining consumers (c5 only feeds the head).
            k_done = s + 1
            c = jnp.maximum(acc[k_done] + bias_ref[k_done - 1:k_done, :], 0.0)
            feats.append(c)
            if k_done < 5:
                pads_ref[k_done, 1:1 + H, C:C + WC] = c

        # --- 1x1 head over the (never materialized) concat of c1..c5.
        out = None
        for i in range(5):
            t = jnp.dot(feats[i], wh_ref[i], preferred_element_type=jnp.float32)
            out = t if out is None else out + t
        out = out + bias_ref[5:6, :]
        o_ref[0] = out.astype(o_ref.dtype)

    return kernel


# ---------------------------------------------------------------------------
# Forward (NCHW in / NCHW out)
# ---------------------------------------------------------------------------
def densenet_forward(x_nchw, params, eps=1e-5):
    N, C, H, W = x_nchw.shape
    Hp, Wp = H + 2 * _PAD, W + 2 * _PAD
    WC = W * C

    x_nhwc = jnp.transpose(x_nchw, (0, 2, 3, 1))
    x_rows = x_nhwc.reshape(N * H * W, C)            # for BN batch statistics
    x_flat = x_nhwc.reshape(N, H, WC)                # lane-dense (w*C + c) layout

    wf, wh, bias_t = _prepare_weights(params, C, W, Wp)
    gamma = params["bn_gamma"].reshape(1, C)
    beta = params["bn_beta"].reshape(1, C)

    kernel = _make_fused_kernel(H, W, C, Hp, Wp, eps)
    out_flat = pl.pallas_call(
        kernel,
        out_shape=jax.ShapeDtypeStruct((N, H, WC), x_nchw.dtype),
        grid=(N,),
        in_specs=[
            pl.BlockSpec((N * H * W, C), lambda n: (0, 0)),          # x rows (full batch)
            pl.BlockSpec((1, C), lambda n: (0, 0)),                  # gamma
            pl.BlockSpec((1, C), lambda n: (0, 0)),                  # beta
            pl.BlockSpec((1, H, WC), lambda n: (n, 0, 0)),           # x, per image
            pl.BlockSpec(wf.shape, lambda n: (0, 0, 0)),             # fused banded conv weights
            pl.BlockSpec(wh.shape, lambda n: (0, 0, 0)),             # block-diag head weights
            pl.BlockSpec(bias_t.shape, lambda n: (0, 0)),            # tiled biases
        ],
        out_specs=pl.BlockSpec((1, H, WC), lambda n: (n, 0, 0)),
        scratch_shapes=[pltpu.VMEM((5, Hp, Wp * C), jnp.float32)],   # padded bn,c1..c4
        compiler_params=pltpu.CompilerParams(
            dimension_semantics=("parallel",),
            vmem_limit_bytes=32 * 1024 * 1024,
        ),
    )(x_rows, gamma, beta, x_flat, wf, wh, bias_t)

    out = out_flat.reshape(N, H, W, C)
    return jnp.transpose(out, (0, 3, 1, 2))          # NHWC-flat -> NCHW


# ---------------------------------------------------------------------------
# Pure-JAX reference (for self-check)
# ---------------------------------------------------------------------------
def _conv_ref(x, w, b, pad, relu):
    out = jax.lax.conv_general_dilated(
        x, w, (1, 1), [(pad, pad), (pad, pad)],
        dimension_numbers=("NHWC", "HWIO", "NHWC"),
    ) + b.reshape(1, 1, 1, -1)
    return jnp.maximum(out, 0.0) if relu else out


def densenet_ref(x_nchw, p, eps=1e-5):
    x = jnp.transpose(x_nchw, (0, 2, 3, 1))
    mean = jnp.mean(x, axis=(0, 1, 2), keepdims=True)
    var = jnp.mean(jnp.square(x - mean), axis=(0, 1, 2), keepdims=True)
    bn = (x - mean) * jax.lax.rsqrt(var + eps) * p["bn_gamma"].reshape(1, 1, 1, -1) \
         + p["bn_beta"].reshape(1, 1, 1, -1)
    c1 = _conv_ref(bn, p["w1"], p["b1"], 1, True)
    c2 = _conv_ref(c1, p["w2"], p["b2"], 1, True)
    c2d = jnp.maximum(jnp.concatenate([c1, c2], -1), 0.0)
    c3 = _conv_ref(c2d, p["w3"], p["b3"], 1, True)
    c3d = jnp.maximum(jnp.concatenate([c1, c2, c3], -1), 0.0)
    c4 = _conv_ref(c3d, p["w4"], p["b4"], 1, True)
    c4d = jnp.maximum(jnp.concatenate([c1, c2, c3, c4], -1), 0.0)
    c5 = _conv_ref(c4d, p["w5"], p["b5"], 1, True)
    c5d = jnp.maximum(jnp.concatenate([c1, c2, c3, c4, c5], -1), 0.0)
    out = _conv_ref(c5d, p["wh"], p["bh"], 0, False)
    return jnp.transpose(out, (0, 3, 1, 2))


# ---------------------------------------------------------------------------
# Main
# ---------------------------------------------------------------------------
if __name__ == "__main__":
    N, C, H, W = 2, 8, 16, 16  # out_channels = C, kernel_size = 3 (padding=1)
    key = jax.random.PRNGKey(0)
    ks = jax.random.split(key, 16)

    def winit(k, shape):
        return jax.random.normal(k, shape, jnp.float32) * 0.1

    params = {
        "bn_gamma": winit(ks[0], (C,)) + 1.0,
        "bn_beta": winit(ks[1], (C,)),
        # conv weights stored HWIO (kh, kw, cin, cout)
        "w1": winit(ks[2], (3, 3, C, C)),      "b1": winit(ks[3], (C,)),
        "w2": winit(ks[4], (3, 3, C, C)),      "b2": winit(ks[5], (C,)),
        "w3": winit(ks[6], (3, 3, 2 * C, C)),  "b3": winit(ks[7], (C,)),
        "w4": winit(ks[8], (3, 3, 3 * C, C)),  "b4": winit(ks[9], (C,)),
        "w5": winit(ks[10], (3, 3, 4 * C, C)), "b5": winit(ks[11], (C,)),
        "wh": winit(ks[12], (1, 1, 5 * C, C)), "bh": winit(ks[13], (C,)),
    }

    x = jax.random.normal(ks[14], (N, C, H, W), jnp.float32)

    # TODO(synk): BatchNorm running-mean/var buffer updates (training-side
    # bookkeeping state) are not emitted; only the normalization math is.
    fwd = jax.jit(densenet_forward)
    out = jax.block_until_ready(fwd(x, params))
    ref = jax.block_until_ready(densenet_ref(x, params))

    assert out.shape == (N, C, H, W), out.shape
    np.testing.assert_allclose(np.asarray(out), np.asarray(ref),
                               rtol=2e-3, atol=2e-4)
    print("KERNEL_OK")
</pallas_src>

<mosaic_0001>
module attributes {stable_mosaic.version = 11 : i64} {
  func.func @kernel(%arg0: i32, %arg1: memref<512x8xf32, #tpu.memory_space<vmem>>, %arg2: memref<1x8xf32, #tpu.memory_space<vmem>>, %arg3: memref<1x8xf32, #tpu.memory_space<vmem>>, %arg4: memref<1x16x128xf32, #tpu.memory_space<vmem>>, %arg5: memref<3x144x1408xf32, #tpu.memory_space<vmem>>, %arg6: memref<5x128x128xf32, #tpu.memory_space<vmem>>, %arg7: memref<6x128xf32, #tpu.memory_space<vmem>>, %arg8: memref<1x16x128xf32, #tpu.memory_space<vmem>>, %arg9: memref<5x18x144xf32, #tpu.memory_space<vmem>>) attributes {dimension_semantics = [#tpu.dimension_semantics<parallel>], iteration_bounds = array<i64: 2>, scalar_prefetch = 0 : i64, scratch_operands = 1 : i64, tpu.core_type = #tpu.core_type<tc>, window_params = [{pipeline_mode = #tpu.pipeline_mode<synchronous>, transform_indices = @transform_0, window_bounds = array<i64: 512, 8>}, {pipeline_mode = #tpu.pipeline_mode<synchronous>, transform_indices = @transform_1, window_bounds = array<i64: 1, 8>}, {pipeline_mode = #tpu.pipeline_mode<synchronous>, transform_indices = @transform_2, window_bounds = array<i64: 1, 8>}, {transform_indices = @transform_3, window_bounds = array<i64: 1, 16, 128>}, {pipeline_mode = #tpu.pipeline_mode<synchronous>, transform_indices = @transform_4, window_bounds = array<i64: 3, 144, 1408>}, {pipeline_mode = #tpu.pipeline_mode<synchronous>, transform_indices = @transform_5, window_bounds = array<i64: 5, 128, 128>}, {pipeline_mode = #tpu.pipeline_mode<synchronous>, transform_indices = @transform_6, window_bounds = array<i64: 6, 128>}, {transform_indices = @transform_7, window_bounds = array<i64: 1, 16, 128>}]} {
    %c0 = arith.constant 0 : index
    %c0_0 = arith.constant 0 : index
    %0 = vector.load %arg1[%c0, %c0_0] : memref<512x8xf32, #tpu.memory_space<vmem>>, vector<512x8xf32>
    %cst = arith.constant dense<0.000000e+00> : vector<8xf32>
    %1 = vector.multi_reduction <add>, %0, %cst [0] : vector<512x8xf32> to vector<8xf32>
    %2 = vector.shape_cast %1 : vector<8xf32> to vector<1x8xf32>
    %cst_1 = arith.constant 5.120000e+02 : f32
    %3 = vector.broadcast %cst_1 : f32 to vector<1x8xf32>
    %4 = arith.divf %2, %3 : vector<1x8xf32>
    %5 = vector.broadcast %4 : vector<1x8xf32> to vector<512x8xf32>
    %6 = arith.subf %0, %5 : vector<512x8xf32>
    %7 = arith.mulf %6, %6 : vector<512x8xf32>
    %cst_2 = arith.constant dense<0.000000e+00> : vector<8xf32>
    %8 = vector.multi_reduction <add>, %7, %cst_2 [0] : vector<512x8xf32> to vector<8xf32>
    %9 = vector.shape_cast %8 : vector<8xf32> to vector<1x8xf32>
    %cst_3 = arith.constant 5.120000e+02 : f32
    %10 = vector.broadcast %cst_3 : f32 to vector<1x8xf32>
    %11 = arith.divf %9, %10 : vector<1x8xf32>
    %c0_4 = arith.constant 0 : index
    %c0_5 = arith.constant 0 : index
    %12 = vector.load %arg2[%c0_4, %c0_5] : memref<1x8xf32, #tpu.memory_space<vmem>>, vector<1x8xf32>
    %cst_6 = arith.constant 9.99999974E-6 : f32
    %13 = vector.broadcast %cst_6 : f32 to vector<1x8xf32>
    %14 = arith.addf %11, %13 : vector<1x8xf32>
    %15 = math.rsqrt %14 : vector<1x8xf32>
    %16 = arith.mulf %12, %15 : vector<1x8xf32>
    %c0_7 = arith.constant 0 : index
    %c0_8 = arith.constant 0 : index
    %17 = vector.load %arg3[%c0_7, %c0_8] : memref<1x8xf32, #tpu.memory_space<vmem>>, vector<1x8xf32>
    %18 = arith.mulf %4, %16 : vector<1x8xf32>
    %19 = arith.subf %17, %18 : vector<1x8xf32>
    %20 = tpu.concatenate %16, %16, %16, %16, %16, %16, %16, %16, %16, %16, %16, %16, %16, %16, %16, %16 in 1 : vector<1x8xf32>, vector<1x8xf32>, vector<1x8xf32>, vector<1x8xf32>, vector<1x8xf32>, vector<1x8xf32>, vector<1x8xf32>, vector<1x8xf32>, vector<1x8xf32>, vector<1x8xf32>, vector<1x8xf32>, vector<1x8xf32>, vector<1x8xf32>, vector<1x8xf32>, vector<1x8xf32>, vector<1x8xf32> -> vector<1x128xf32>
    %21 = tpu.concatenate %19, %19, %19, %19, %19, %19, %19, %19, %19, %19, %19, %19, %19, %19, %19, %19 in 1 : vector<1x8xf32>, vector<1x8xf32>, vector<1x8xf32>, vector<1x8xf32>, vector<1x8xf32>, vector<1x8xf32>, vector<1x8xf32>, vector<1x8xf32>, vector<1x8xf32>, vector<1x8xf32>, vector<1x8xf32>, vector<1x8xf32>, vector<1x8xf32>, vector<1x8xf32>, vector<1x8xf32>, vector<1x8xf32> -> vector<1x128xf32>
    %cst_9 = arith.constant 0.000000e+00 : f32
    %22 = vector.broadcast %cst_9 : f32 to vector<5x18x144xf32>
    %c0_10 = arith.constant 0 : index
    %c0_11 = arith.constant 0 : index
    %c0_12 = arith.constant 0 : index
    %23 = vector.load %arg9[%c0_10, %c0_11, %c0_12] : memref<5x18x144xf32, #tpu.memory_space<vmem>>, vector<5x18x144xf32>
    tpu.vector_store %arg9[%c0_10, %c0_11, %c0_12], %22 {strides = array<i32>} : memref<5x18x144xf32, #tpu.memory_space<vmem>>, vector<5x18x144xf32>,
    %c0_13 = arith.constant 0 : index
    %c0_14 = arith.constant 0 : index
    %c0_15 = arith.constant 0 : index
    %24 = vector.load %arg4[%c0_13, %c0_14, %c0_15] : memref<1x16x128xf32, #tpu.memory_space<vmem>>, vector<1x16x128xf32>
    %25 = vector.shape_cast %24 : vector<1x16x128xf32> to vector<16x128xf32>
    %26 = vector.broadcast %20 : vector<1x128xf32> to vector<16x128xf32>
    %27 = arith.mulf %25, %26 : vector<16x128xf32>
    %28 = vector.broadcast %21 : vector<1x128xf32> to vector<16x128xf32>
    %29 = arith.addf %27, %28 : vector<16x128xf32>
    %c0_16 = arith.constant 0 : index
    %c1 = arith.constant 1 : index
    %c8 = arith.constant 8 : index
    %30 = vector.load %arg9[%c0_16, %c1, %c8] : memref<5x18x144xf32, #tpu.memory_space<vmem>>, vector<1x16x128xf32>
    %31 = vector.shape_cast %30 : vector<1x16x128xf32> to vector<16x128xf32>
    %32 = vector.shape_cast %29 : vector<16x128xf32> to vector<1x16x128xf32>
    tpu.vector_store %arg9[%c0_16, %c1, %c8], %32 {strides = array<i32>} : memref<5x18x144xf32, #tpu.memory_space<vmem>>, vector<1x16x128xf32>,
    %c0_17 = arith.constant 0 : index
    %c0_18 = arith.constant 0 : index
    %c0_19 = arith.constant 0 : index
    %33 = vector.load %arg9[%c0_17, %c0_18, %c0_19] : memref<5x18x144xf32, #tpu.memory_space<vmem>>, vector<1x18x144xf32>
    %34 = vector.shape_cast %33 : vector<1x18x144xf32> to vector<18x144xf32>
    %35 = vector.extract_strided_slice %34 {offsets = [0, 0], sizes = [16, 144], strides = [1, 1]} : vector<18x144xf32> to vector<16x144xf32>
    %c0_20 = arith.constant 0 : index
    %c0_21 = arith.constant 0 : index
    %c0_22 = arith.constant 0 : index
    %36 = vector.load %arg5[%c0_20, %c0_21, %c0_22] : memref<3x144x1408xf32, #tpu.memory_space<vmem>>, vector<1x144x128xf32>
    %37 = vector.shape_cast %36 : vector<1x144x128xf32> to vector<144x128xf32>
    %cst_23 = arith.constant dense<0.000000e+00> : vector<16x128xf32>
    %38 = tpu.matmul %35, %37, %cst_23 {dimension_numbers = #tpu.dot_dimension_numbers<[1], [0], [0], [1], [0, 0, 1, 1], [], []>} : vector<16x144xf32>, vector<144x128xf32>, vector<16x128xf32> -> vector<16x128xf32>
    %39 = vector.extract_strided_slice %34 {offsets = [1, 0], sizes = [16, 144], strides = [1, 1]} : vector<18x144xf32> to vector<16x144xf32>
    %c1_24 = arith.constant 1 : index
    %c0_25 = arith.constant 0 : index
    %c0_26 = arith.constant 0 : index
    %40 = vector.load %arg5[%c1_24, %c0_25, %c0_26] : memref<3x144x1408xf32, #tpu.memory_space<vmem>>, vector<1x144x128xf32>
    %41 = vector.shape_cast %40 : vector<1x144x128xf32> to vector<144x128xf32>
    %cst_27 = arith.constant dense<0.000000e+00> : vector<16x128xf32>
    %42 = tpu.matmul %39, %41, %cst_27 {dimension_numbers = #tpu.dot_dimension_numbers<[1], [0], [0], [1], [0, 0, 1, 1], [], []>} : vector<16x144xf32>, vector<144x128xf32>, vector<16x128xf32> -> vector<16x128xf32>
    %43 = arith.addf %38, %42 : vector<16x128xf32>
    %44 = vector.extract_strided_slice %34 {offsets = [2, 0], sizes = [16, 144], strides = [1, 1]} : vector<18x144xf32> to vector<16x144xf32>
    %c2 = arith.constant 2 : index
    %c0_28 = arith.constant 0 : index
    %c0_29 = arith.constant 0 : index
    %45 = vector.load %arg5[%c2, %c0_28, %c0_29] : memref<3x144x1408xf32, #tpu.memory_space<vmem>>, vector<1x144x128xf32>
    %46 = vector.shape_cast %45 : vector<1x144x128xf32> to vector<144x128xf32>
    %cst_30 = arith.constant dense<0.000000e+00> : vector<16x128xf32>
    %47 = tpu.matmul %44, %46, %cst_30 {dimension_numbers = #tpu.dot_dimension_numbers<[1], [0], [0], [1], [0, 0, 1, 1], [], []>} : vector<16x144xf32>, vector<144x128xf32>, vector<16x128xf32> -> vector<16x128xf32>
    %48 = arith.addf %43, %47 : vector<16x128xf32>
    %c0_31 = arith.constant 0 : index
    %c0_32 = arith.constant 0 : index
    %49 = vector.load %arg7[%c0_31, %c0_32] : memref<6x128xf32, #tpu.memory_space<vmem>>, vector<1x128xf32>
    %50 = vector.broadcast %49 : vector<1x128xf32> to vector<16x128xf32>
    %51 = arith.addf %48, %50 : vector<16x128xf32>
    %cst_33 = arith.constant 0.000000e+00 : f32
    %52 = vector.broadcast %cst_33 : f32 to vector<16x128xf32>
    %53 = arith.maximumf %51, %52 : vector<16x128xf32>
    %c1_34 = arith.constant 1 : index
    %c1_35 = arith.constant 1 : index
    %c8_36 = arith.constant 8 : index
    %54 = vector.load %arg9[%c1_34, %c1_35, %c8_36] : memref<5x18x144xf32, #tpu.memory_space<vmem>>, vector<1x16x128xf32>
    %55 = vector.shape_cast %54 : vector<1x16x128xf32> to vector<16x128xf32>
    %56 = vector.shape_cast %53 : vector<16x128xf32> to vector<1x16x128xf32>
    tpu.vector_store %arg9[%c1_34, %c1_35, %c8_36], %56 {strides = array<i32>} : memref<5x18x144xf32, #tpu.memory_space<vmem>>, vector<1x16x128xf32>,
    %c1_37 = arith.constant 1 : index
    %c0_38 = arith.constant 0 : index
    %c0_39 = arith.constant 0 : index
    %57 = vector.load %arg9[%c1_37, %c0_38, %c0_39] : memref<5x18x144xf32, #tpu.memory_space<vmem>>, vector<1x18x144xf32>
    %58 = vector.shape_cast %57 : vector<1x18x144xf32> to vector<18x144xf32>
    %59 = vector.extract_strided_slice %58 {offsets = [0, 0], sizes = [16, 144], strides = [1, 1]} : vector<18x144xf32> to vector<16x144xf32>
    %c0_40 = arith.constant 0 : index
    %c0_41 = arith.constant 0 : index
    %c128 = arith.constant 128 : index
    %60 = vector.load %arg5[%c0_40, %c0_41, %c128] : memref<3x144x1408xf32, #tpu.memory_space<vmem>>, vector<1x144x512xf32>
    %61 = vector.shape_cast %60 : vector<1x144x512xf32> to vector<144x512xf32>
    %cst_42 = arith.constant dense<0.000000e+00> : vector<16x512xf32>
    %62 = tpu.matmul %59, %61, %cst_42 {dimension_numbers = #tpu.dot_dimension_numbers<[1], [0], [0], [1], [0, 0, 1, 1], [], []>} : vector<16x144xf32>, vector<144x512xf32>, vector<16x512xf32> -> vector<16x512xf32>
    %63 = vector.extract_strided_slice %58 {offsets = [1, 0], sizes = [16, 144], strides = [1, 1]} : vector<18x144xf32> to vector<16x144xf32>
    %c1_43 = arith.constant 1 : index
    %c0_44 = arith.constant 0 : index
    %c128_45 = arith.constant 128 : index
    %64 = vector.load %arg5[%c1_43, %c0_44, %c128_45] : memref<3x144x1408xf32, #tpu.memory_space<vmem>>, vector<1x144x512xf32>
    %65 = vector.shape_cast %64 : vector<1x144x512xf32> to vector<144x512xf32>
    %cst_46 = arith.constant dense<0.000000e+00> : vector<16x512xf32>
    %66 = tpu.matmul %63, %65, %cst_46 {dimension_numbers = #tpu.dot_dimension_numbers<[1], [0], [0], [1], [0, 0, 1, 1], [], []>} : vector<16x144xf32>, vector<144x512xf32>, vector<16x512xf32> -> vector<16x512xf32>
    %67 = arith.addf %62, %66 : vector<16x512xf32>
    %68 = vector.extract_strided_slice %58 {offsets = [2, 0], sizes = [16, 144], strides = [1, 1]} : vector<18x144xf32> to vector<16x144xf32>
    %c2_47 = arith.constant 2 : index
    %c0_48 = arith.constant 0 : index
    %c128_49 = arith.constant 128 : index
    %69 = vector.load %arg5[%c2_47, %c0_48, %c128_49] : memref<3x144x1408xf32, #tpu.memory_space<vmem>>, vector<1x144x512xf32>
    %70 = vector.shape_cast %69 : vector<1x144x512xf32> to vector<144x512xf32>
    %cst_50 = arith.constant dense<0.000000e+00> : vector<16x512xf32>
    %71 = tpu.matmul %68, %70, %cst_50 {dimension_numbers = #tpu.dot_dimension_numbers<[1], [0], [0], [1], [0, 0, 1, 1], [], []>} : vector<16x144xf32>, vector<144x512xf32>, vector<16x512xf32> -> vector<16x512xf32>
    %72 = arith.addf %67, %71 : vector<16x512xf32>
    %73 = vector.extract_strided_slice %72 {offsets = [0, 0], sizes = [16, 128], strides = [1, 1]} : vector<16x512xf32> to vector<16x128xf32>
    %74 = vector.extract_strided_slice %72 {offsets = [0, 128], sizes = [16, 128], strides = [1, 1]} : vector<16x512xf32> to vector<16x128xf32>
    %75 = vector.extract_strided_slice %72 {offsets = [0, 256], sizes = [16, 128], strides = [1, 1]} : vector<16x512xf32> to vector<16x128xf32>
    %76 = vector.extract_strided_slice %72 {offsets = [0, 384], sizes = [16, 128], strides = [1, 1]} : vector<16x512xf32> to vector<16x128xf32>
    %c1_51 = arith.constant 1 : index
    %c0_52 = arith.constant 0 : index
    %77 = vector.load %arg7[%c1_51, %c0_52] : memref<6x128xf32, #tpu.memory_space<vmem>>, vector<1x128xf32>
    %78 = vector.broadcast %77 : vector<1x128xf32> to vector<16x128xf32>
    %79 = arith.addf %73, %78 : vector<16x128xf32>
    %cst_53 = arith.constant 0.000000e+00 : f32
    %80 = vector.broadcast %cst_53 : f32 to vector<16x128xf32>
    %81 = arith.maximumf %79, %80 : vector<16x128xf32>
    %c2_54 = arith.constant 2 : index
    %c1_55 = arith.constant 1 : index
    %c8_56 = arith.constant 8 : index
    %82 = vector.load %arg9[%c2_54, %c1_55, %c8_56] : memref<5x18x144xf32, #tpu.memory_space<vmem>>, vector<1x16x128xf32>
    %83 = vector.shape_cast %82 : vector<1x16x128xf32> to vector<16x128xf32>
    %84 = vector.shape_cast %81 : vector<16x128xf32> to vector<1x16x128xf32>
    tpu.vector_store %arg9[%c2_54, %c1_55, %c8_56], %84 {strides = array<i32>} : memref<5x18x144xf32, #tpu.memory_space<vmem>>, vector<1x16x128xf32>,
    %c2_57 = arith.constant 2 : index
    %c0_58 = arith.constant 0 : index
    %c0_59 = arith.constant 0 : index
    %85 = vector.load %arg9[%c2_57, %c0_58, %c0_59] : memref<5x18x144xf32, #tpu.memory_space<vmem>>, vector<1x18x144xf32>
    %86 = vector.shape_cast %85 : vector<1x18x144xf32> to vector<18x144xf32>
    %87 = vector.extract_strided_slice %86 {offsets = [0, 0], sizes = [16, 144], strides = [1, 1]} : vector<18x144xf32> to vector<16x144xf32>
    %c0_60 = arith.constant 0 : index
    %c0_61 = arith.constant 0 : index
    %c640 = arith.constant 640 : index
    %88 = vector.load %arg5[%c0_60, %c0_61, %c640] : memref<3x144x1408xf32, #tpu.memory_space<vmem>>, vector<1x144x384xf32>
    %89 = vector.shape_cast %88 : vector<1x144x384xf32> to vector<144x384xf32>
    %cst_62 = arith.constant dense<0.000000e+00> : vector<16x384xf32>
    %90 = tpu.matmul %87, %89, %cst_62 {dimension_numbers = #tpu.dot_dimension_numbers<[1], [0], [0], [1], [0, 0, 1, 1], [], []>} : vector<16x144xf32>, vector<144x384xf32>, vector<16x384xf32> -> vector<16x384xf32>
    %91 = vector.extract_strided_slice %86 {offsets = [1, 0], sizes = [16, 144], strides = [1, 1]} : vector<18x144xf32> to vector<16x144xf32>
    %c1_63 = arith.constant 1 : index
    %c0_64 = arith.constant 0 : index
    %c640_65 = arith.constant 640 : index
    %92 = vector.load %arg5[%c1_63, %c0_64, %c640_65] : memref<3x144x1408xf32, #tpu.memory_space<vmem>>, vector<1x144x384xf32>
    %93 = vector.shape_cast %92 : vector<1x144x384xf32> to vector<144x384xf32>
    %cst_66 = arith.constant dense<0.000000e+00> : vector<16x384xf32>
    %94 = tpu.matmul %91, %93, %cst_66 {dimension_numbers = #tpu.dot_dimension_numbers<[1], [0], [0], [1], [0, 0, 1, 1], [], []>} : vector<16x144xf32>, vector<144x384xf32>, vector<16x384xf32> -> vector<16x384xf32>
    %95 = arith.addf %90, %94 : vector<16x384xf32>
    %96 = vector.extract_strided_slice %86 {offsets = [2, 0], sizes = [16, 144], strides = [1, 1]} : vector<18x144xf32> to vector<16x144xf32>
    %c2_67 = arith.constant 2 : index
    %c0_68 = arith.constant 0 : index
    %c640_69 = arith.constant 640 : index
    %97 = vector.load %arg5[%c2_67, %c0_68, %c640_69] : memref<3x144x1408xf32, #tpu.memory_space<vmem>>, vector<1x144x384xf32>
    %98 = vector.shape_cast %97 : vector<1x144x384xf32> to vector<144x384xf32>
    %cst_70 = arith.constant dense<0.000000e+00> : vector<16x384xf32>
    %99 = tpu.matmul %96, %98, %cst_70 {dimension_numbers = #tpu.dot_dimension_numbers<[1], [0], [0], [1], [0, 0, 1, 1], [], []>} : vector<16x144xf32>, vector<144x384xf32>, vector<16x384xf32> -> vector<16x384xf32>
    %100 = arith.addf %95, %99 : vector<16x384xf32>
    %101 = vector.extract_strided_slice %100 {offsets = [0, 0], sizes = [16, 128], strides = [1, 1]} : vector<16x384xf32> to vector<16x128xf32>
    %102 = arith.addf %74, %101 : vector<16x128xf32>
    %103 = vector.extract_strided_slice %100 {offsets = [0, 128], sizes = [16, 128], strides = [1, 1]} : vector<16x384xf32> to vector<16x128xf32>
    %104 = arith.addf %75, %103 : vector<16x128xf32>
    %105 = vector.extract_strided_slice %100 {offsets = [0, 256], sizes = [16, 128], strides = [1, 1]} : vector<16x384xf32> to vector<16x128xf32>
    %106 = arith.addf %76, %105 : vector<16x128xf32>
    %c2_71 = arith.constant 2 : index
    %c0_72 = arith.constant 0 : index
    %107 = vector.load %arg7[%c2_71, %c0_72] : memref<6x128xf32, #tpu.memory_space<vmem>>, vector<1x128xf32>
    %108 = vector.broadcast %107 : vector<1x128xf32> to vector<16x128xf32>
    %109 = arith.addf %102, %108 : vector<16x128xf32>
    %cst_73 = arith.constant 0.000000e+00 : f32
    %110 = vector.broadcast %cst_73 : f32 to vector<16x128xf32>
    %111 = arith.maximumf %109, %110 : vector<16x128xf32>
    %c3 = arith.constant 3 : index
    %c1_74 = arith.constant 1 : index
    %c8_75 = arith.constant 8 : index
    %112 = vector.load %arg9[%c3, %c1_74, %c8_75] : memref<5x18x144xf32, #tpu.memory_space<vmem>>, vector<1x16x128xf32>
    %113 = vector.shape_cast %112 : vector<1x16x128xf32> to vector<16x128xf32>
    %114 = vector.shape_cast %111 : vector<16x128xf32> to vector<1x16x128xf32>
    tpu.vector_store %arg9[%c3, %c1_74, %c8_75], %114 {strides = array<i32>} : memref<5x18x144xf32, #tpu.memory_space<vmem>>, vector<1x16x128xf32>,
    %c3_76 = arith.constant 3 : index
    %c0_77 = arith.constant 0 : index
    %c0_78 = arith.constant 0 : index
    %115 = vector.load %arg9[%c3_76, %c0_77, %c0_78] : memref<5x18x144xf32, #tpu.memory_space<vmem>>, vector<1x18x144xf32>
    %116 = vector.shape_cast %115 : vector<1x18x144xf32> to vector<18x144xf32>
    %117 = vector.extract_strided_slice %116 {offsets = [0, 0], sizes = [16, 144], strides = [1, 1]} : vector<18x144xf32> to vector<16x144xf32>
    %c0_79 = arith.constant 0 : index
    %c0_80 = arith.constant 0 : index
    %c1024 = arith.constant 1024 : index
    %118 = vector.load %arg5[%c0_79, %c0_80, %c1024] : memref<3x144x1408xf32, #tpu.memory_space<vmem>>, vector<1x144x256xf32>
    %119 = vector.shape_cast %118 : vector<1x144x256xf32> to vector<144x256xf32>
    %cst_81 = arith.constant dense<0.000000e+00> : vector<16x256xf32>
    %120 = tpu.matmul %117, %119, %cst_81 {dimension_numbers = #tpu.dot_dimension_numbers<[1], [0], [0], [1], [0, 0, 1, 1], [], []>} : vector<16x144xf32>, vector<144x256xf32>, vector<16x256xf32> -> vector<16x256xf32>
    %121 = vector.extract_strided_slice %116 {offsets = [1, 0], sizes = [16, 144], strides = [1, 1]} : vector<18x144xf32> to vector<16x144xf32>
    %c1_82 = arith.constant 1 : index
    %c0_83 = arith.constant 0 : index
    %c1024_84 = arith.constant 1024 : index
    %122 = vector.load %arg5[%c1_82, %c0_83, %c1024_84] : memref<3x144x1408xf32, #tpu.memory_space<vmem>>, vector<1x144x256xf32>
    %123 = vector.shape_cast %122 : vector<1x144x256xf32> to vector<144x256xf32>
    %cst_85 = arith.constant dense<0.000000e+00> : vector<16x256xf32>
    %124 = tpu.matmul %121, %123, %cst_85 {dimension_numbers = #tpu.dot_dimension_numbers<[1], [0], [0], [1], [0, 0, 1, 1], [], []>} : vector<16x144xf32>, vector<144x256xf32>, vector<16x256xf32> -> vector<16x256xf32>
    %125 = arith.addf %120, %124 : vector<16x256xf32>
    %126 = vector.extract_strided_slice %116 {offsets = [2, 0], sizes = [16, 144], strides = [1, 1]} : vector<18x144xf32> to vector<16x144xf32>
    %c2_86 = arith.constant 2 : index
    %c0_87 = arith.constant 0 : index
    %c1024_88 = arith.constant 1024 : index
    %127 = vector.load %arg5[%c2_86, %c0_87, %c1024_88] : memref<3x144x1408xf32, #tpu.memory_space<vmem>>, vector<1x144x256xf32>
    %128 = vector.shape_cast %127 : vector<1x144x256xf32> to vector<144x256xf32>
    %cst_89 = arith.constant dense<0.000000e+00> : vector<16x256xf32>
    %129 = tpu.matmul %126, %128, %cst_89 {dimension_numbers = #tpu.dot_dimension_numbers<[1], [0], [0], [1], [0, 0, 1, 1], [], []>} : vector<16x144xf32>, vector<144x256xf32>, vector<16x256xf32> -> vector<16x256xf32>
    %130 = arith.addf %125, %129 : vector<16x256xf32>
    %131 = vector.extract_strided_slice %130 {offsets = [0, 0], sizes = [16, 128], strides = [1, 1]} : vector<16x256xf32> to vector<16x128xf32>
    %132 = arith.addf %104, %131 : vector<16x128xf32>
    %133 = vector.extract_strided_slice %130 {offsets = [0, 128], sizes = [16, 128], strides = [1, 1]} : vector<16x256xf32> to vector<16x128xf32>
    %134 = arith.addf %106, %133 : vector<16x128xf32>
    %c3_90 = arith.constant 3 : index
    %c0_91 = arith.constant 0 : index
    %135 = vector.load %arg7[%c3_90, %c0_91] : memref<6x128xf32, #tpu.memory_space<vmem>>, vector<1x128xf32>
    %136 = vector.broadcast %135 : vector<1x128xf32> to vector<16x128xf32>
    %137 = arith.addf %132, %136 : vector<16x128xf32>
    %cst_92 = arith.constant 0.000000e+00 : f32
    %138 = vector.broadcast %cst_92 : f32 to vector<16x128xf32>
    %139 = arith.maximumf %137, %138 : vector<16x128xf32>
    %c4 = arith.constant 4 : index
    %c1_93 = arith.constant 1 : index
    %c8_94 = arith.constant 8 : index
    %140 = vector.load %arg9[%c4, %c1_93, %c8_94] : memref<5x18x144xf32, #tpu.memory_space<vmem>>, vector<1x16x128xf32>
    %141 = vector.shape_cast %140 : vector<1x16x128xf32> to vector<16x128xf32>
    %142 = vector.shape_cast %139 : vector<16x128xf32> to vector<1x16x128xf32>
    tpu.vector_store %arg9[%c4, %c1_93, %c8_94], %142 {strides = array<i32>} : memref<5x18x144xf32, #tpu.memory_space<vmem>>, vector<1x16x128xf32>,
    %c4_95 = arith.constant 4 : index
    %c0_96 = arith.constant 0 : index
    %c0_97 = arith.constant 0 : index
    %143 = vector.load %arg9[%c4_95, %c0_96, %c0_97] : memref<5x18x144xf32, #tpu.memory_space<vmem>>, vector<1x18x144xf32>
    %144 = vector.shape_cast %143 : vector<1x18x144xf32> to vector<18x144xf32>
    %145 = vector.extract_strided_slice %144 {offsets = [0, 0], sizes = [16, 144], strides = [1, 1]} : vector<18x144xf32> to vector<16x144xf32>
    %c0_98 = arith.constant 0 : index
    %c0_99 = arith.constant 0 : index
    %c1280 = arith.constant 1280 : index
    %146 = vector.load %arg5[%c0_98, %c0_99, %c1280] : memref<3x144x1408xf32, #tpu.memory_space<vmem>>, vector<1x144x128xf32>
    %147 = vector.shape_cast %146 : vector<1x144x128xf32> to vector<144x128xf32>
    %cst_100 = arith.constant dense<0.000000e+00> : vector<16x128xf32>
    %148 = tpu.matmul %145, %147, %cst_100 {dimension_numbers = #tpu.dot_dimension_numbers<[1], [0], [0], [1], [0, 0, 1, 1], [], []>} : vector<16x144xf32>, vector<144x128xf32>, vector<16x128xf32> -> vector<16x128xf32>
    %149 = vector.extract_strided_slice %144 {offsets = [1, 0], sizes = [16, 144], strides = [1, 1]} : vector<18x144xf32> to vector<16x144xf32>
    %c1_101 = arith.constant 1 : index
    %c0_102 = arith.constant 0 : index
    %c1280_103 = arith.constant 1280 : index
    %150 = vector.load %arg5[%c1_101, %c0_102, %c1280_103] : memref<3x144x1408xf32, #tpu.memory_space<vmem>>, vector<1x144x128xf32>
    %151 = vector.shape_cast %150 : vector<1x144x128xf32> to vector<144x128xf32>
    %cst_104 = arith.constant dense<0.000000e+00> : vector<16x128xf32>
    %152 = tpu.matmul %149, %151, %cst_104 {dimension_numbers = #tpu.dot_dimension_numbers<[1], [0], [0], [1], [0, 0, 1, 1], [], []>} : vector<16x144xf32>, vector<144x128xf32>, vector<16x128xf32> -> vector<16x128xf32>
    %153 = arith.addf %148, %152 : vector<16x128xf32>
    %154 = vector.extract_strided_slice %144 {offsets = [2, 0], sizes = [16, 144], strides = [1, 1]} : vector<18x144xf32> to vector<16x144xf32>
    %c2_105 = arith.constant 2 : index
    %c0_106 = arith.constant 0 : index
    %c1280_107 = arith.constant 1280 : index
    %155 = vector.load %arg5[%c2_105, %c0_106, %c1280_107] : memref<3x144x1408xf32, #tpu.memory_space<vmem>>, vector<1x144x128xf32>
    %156 = vector.shape_cast %155 : vector<1x144x128xf32> to vector<144x128xf32>
    %cst_108 = arith.constant dense<0.000000e+00> : vector<16x128xf32>
    %157 = tpu.matmul %154, %156, %cst_108 {dimension_numbers = #tpu.dot_dimension_numbers<[1], [0], [0], [1], [0, 0, 1, 1], [], []>} : vector<16x144xf32>, vector<144x128xf32>, vector<16x128xf32> -> vector<16x128xf32>
    %158 = arith.addf %153, %157 : vector<16x128xf32>
    %159 = arith.addf %134, %158 : vector<16x128xf32>
    %c4_109 = arith.constant 4 : index
    %c0_110 = arith.constant 0 : index
    %160 = vector.load %arg7[%c4_109, %c0_110] : memref<6x128xf32, #tpu.memory_space<vmem>>, vector<1x128xf32>
    %161 = vector.broadcast %160 : vector<1x128xf32> to vector<16x128xf32>
    %162 = arith.addf %159, %161 : vector<16x128xf32>
    %cst_111 = arith.constant 0.000000e+00 : f32
    %163 = vector.broadcast %cst_111 : f32 to vector<16x128xf32>
    %164 = arith.maximumf %162, %163 : vector<16x128xf32>
    %c0_112 = arith.constant 0 : index
    %c0_113 = arith.constant 0 : index
    %c0_114 = arith.constant 0 : index
    %165 = vector.load %arg6[%c0_112, %c0_113, %c0_114] : memref<5x128x128xf32, #tpu.memory_space<vmem>>, vector<1x128x128xf32>
    %166 = vector.shape_cast %165 : vector<1x128x128xf32> to vector<128x128xf32>
    %cst_115 = arith.constant dense<0.000000e+00> : vector<16x128xf32>
    %167 = tpu.matmul %53, %166, %cst_115 {dimension_numbers = #tpu.dot_dimension_numbers<[1], [0], [0], [1], [0, 0, 1, 1], [], []>} : vector<16x128xf32>, vector<128x128xf32>, vector<16x128xf32> -> vector<16x128xf32>
    %c1_116 = arith.constant 1 : index
    %c0_117 = arith.constant 0 : index
    %c0_118 = arith.constant 0 : index
    %168 = vector.load %arg6[%c1_116, %c0_117, %c0_118] : memref<5x128x128xf32, #tpu.memory_space<vmem>>, vector<1x128x128xf32>
    %169 = vector.shape_cast %168 : vector<1x128x128xf32> to vector<128x128xf32>
    %cst_119 = arith.constant dense<0.000000e+00> : vector<16x128xf32>
    %170 = tpu.matmul %81, %169, %cst_119 {dimension_numbers = #tpu.dot_dimension_numbers<[1], [0], [0], [1], [0, 0, 1, 1], [], []>} : vector<16x128xf32>, vector<128x128xf32>, vector<16x128xf32> -> vector<16x128xf32>
    %171 = arith.addf %167, %170 : vector<16x128xf32>
    %c2_120 = arith.constant 2 : index
    %c0_121 = arith.constant 0 : index
    %c0_122 = arith.constant 0 : index
    %172 = vector.load %arg6[%c2_120, %c0_121, %c0_122] : memref<5x128x128xf32, #tpu.memory_space<vmem>>, vector<1x128x128xf32>
    %173 = vector.shape_cast %172 : vector<1x128x128xf32> to vector<128x128xf32>
    %cst_123 = arith.constant dense<0.000000e+00> : vector<16x128xf32>
    %174 = tpu.matmul %111, %173, %cst_123 {dimension_numbers = #tpu.dot_dimension_numbers<[1], [0], [0], [1], [0, 0, 1, 1], [], []>} : vector<16x128xf32>, vector<128x128xf32>, vector<16x128xf32> -> vector<16x128xf32>
    %175 = arith.addf %171, %174 : vector<16x128xf32>
    %c3_124 = arith.constant 3 : index
    %c0_125 = arith.constant 0 : index
    %c0_126 = arith.constant 0 : index
    %176 = vector.load %arg6[%c3_124, %c0_125, %c0_126] : memref<5x128x128xf32, #tpu.memory_space<vmem>>, vector<1x128x128xf32>
    %177 = vector.shape_cast %176 : vector<1x128x128xf32> to vector<128x128xf32>
    %cst_127 = arith.constant dense<0.000000e+00> : vector<16x128xf32>
    %178 = tpu.matmul %139, %177, %cst_127 {dimension_numbers = #tpu.dot_dimension_numbers<[1], [0], [0], [1], [0, 0, 1, 1], [], []>} : vector<16x128xf32>, vector<128x128xf32>, vector<16x128xf32> -> vector<16x128xf32>
    %179 = arith.addf %175, %178 : vector<16x128xf32>
    %c4_128 = arith.constant 4 : index
    %c0_129 = arith.constant 0 : index
    %c0_130 = arith.constant 0 : index
    %180 = vector.load %arg6[%c4_128, %c0_129, %c0_130] : memref<5x128x128xf32, #tpu.memory_space<vmem>>, vector<1x128x128xf32>
    %181 = vector.shape_cast %180 : vector<1x128x128xf32> to vector<128x128xf32>
    %cst_131 = arith.constant dense<0.000000e+00> : vector<16x128xf32>
    %182 = tpu.matmul %164, %181, %cst_131 {dimension_numbers = #tpu.dot_dimension_numbers<[1], [0], [0], [1], [0, 0, 1, 1], [], []>} : vector<16x128xf32>, vector<128x128xf32>, vector<16x128xf32> -> vector<16x128xf32>
    %183 = arith.addf %179, %182 : vector<16x128xf32>
    %c5 = arith.constant 5 : index
    %c0_132 = arith.constant 0 : index
    %184 = vector.load %arg7[%c5, %c0_132] : memref<6x128xf32, #tpu.memory_space<vmem>>, vector<1x128xf32>
    %185 = vector.broadcast %184 : vector<1x128xf32> to vector<16x128xf32>
    %186 = arith.addf %183, %185 : vector<16x128xf32>
    %c0_133 = arith.constant 0 : index
    %c0_134 = arith.constant 0 : index
    %c0_135 = arith.constant 0 : index
    %187 = vector.load %arg8[%c0_133, %c0_134, %c0_135] : memref<1x16x128xf32, #tpu.memory_space<vmem>>, vector<1x16x128xf32>
    %188 = vector.shape_cast %187 : vector<1x16x128xf32> to vector<16x128xf32>
    %189 = vector.shape_cast %186 : vector<16x128xf32> to vector<1x16x128xf32>
    tpu.vector_store %arg8[%c0_133, %c0_134, %c0_135], %189 {strides = array<i32>} : memref<1x16x128xf32, #tpu.memory_space<vmem>>, vector<1x16x128xf32>,
    return
  }
  func.func @transform_0(%arg0: i32) -> (i32, i32) {
    %c0_i32 = arith.constant 0 : i32
    %c0_i32_0 = arith.constant 0 : i32
    %c0_i32_1 = arith.constant 0 : i32
    return %c0_i32, %c0_i32_0 : i32, i32
  }
  func.func @transform_1(%arg0: i32) -> (i32, i32) {
    %c0_i32 = arith.constant 0 : i32
    %c0_i32_0 = arith.constant 0 : i32
    %c0_i32_1 = arith.constant 0 : i32
    return %c0_i32, %c0_i32_0 : i32, i32
  }
  func.func @transform_2(%arg0: i32) -> (i32, i32) {
    %c0_i32 = arith.constant 0 : i32
    %c0_i32_0 = arith.constant 0 : i32
    %c0_i32_1 = arith.constant 0 : i32
    return %c0_i32, %c0_i32_0 : i32, i32
  }
  func.func @transform_3(%arg0: i32) -> (i32, i32, i32) {
    %c0_i32 = arith.constant 0 : i32
    %c0_i32_0 = arith.constant 0 : i32
    %c0_i32_1 = arith.constant 0 : i32
    return %arg0, %c0_i32, %c0_i32_0 : i32, i32, i32
  }
  func.func @transform_4(%arg0: i32) -> (i32, i32, i32) {
    %c0_i32 = arith.constant 0 : i32
    %c0_i32_0 = arith.constant 0 : i32
    %c0_i32_1 = arith.constant 0 : i32
    %c0_i32_2 = arith.constant 0 : i32
    return %c0_i32, %c0_i32_0, %c0_i32_1 : i32, i32, i32
  }
  func.func @transform_5(%arg0: i32) -> (i32, i32, i32) {
    %c0_i32 = arith.constant 0 : i32
    %c0_i32_0 = arith.constant 0 : i32
    %c0_i32_1 = arith.constant 0 : i32
    %c0_i32_2 = arith.constant 0 : i32
    return %c0_i32, %c0_i32_0, %c0_i32_1 : i32, i32, i32
  }
  func.func @transform_6(%arg0: i32) -> (i32, i32) {
    %c0_i32 = arith.constant 0 : i32
    %c0_i32_0 = arith.constant 0 : i32
    %c0_i32_1 = arith.constant 0 : i32
    return %c0_i32, %c0_i32_0 : i32, i32
  }
  func.func @transform_7(%arg0: i32) -> (i32, i32, i32) {
    %c0_i32 = arith.constant 0 : i32
    %c0_i32_0 = arith.constant 0 : i32
    %c0_i32_1 = arith.constant 0 : i32
    return %arg0, %c0_i32, %c0_i32_0 : i32, i32, i32
  }
}

</mosaic_0001>

<llo_original>
// kernel: tile.9
$region0: #{tile.9}
  %s0 = inlined_call_operand.vmem [shape: f32[6,16,8], index: 0, kind: input, shape index: {}]
  %s1 = inlined_call_operand.vmem [shape: f32[6,128], index: 1, kind: output, shape index: {}]
  %s2 = smov 3
  %v3 = vld [vmem:[%s0] ss:$16 sm:%s2]
  %s4 = smov 12
  %v5 = vld [vmem:[%s0] ss:$16 sm:%s4]
  %vm6 = vcmask 1043458
  %v7 = vsel %vm6, %v5, %v3
  %s8 = smov 48
  %v9 = vld [vmem:[%s0] ss:$16 sm:%s8]
  %vm10 = vcmask 1045508
  %v11 = vsel %vm10, %v9, %v7
  %vm12 = vcmask 64512
  %13 = vst.msk [vmem:[%s1] sm:$0x3f] %vm12, %v11
  %s14 = scalar_lea.vmem %s0, 15
  %s15 = smov 3
  %v16 = vld [vmem:[%s14] ss:$16 sm:%s15]
  %s17 = scalar_lea.vmem %s0, 15
  %s18 = smov 12
  %v19 = vld [vmem:[%s17] ss:$16 sm:%s18]
  %vm20 = vcmask 1043458
  %v21 = vsel %vm20, %v19, %v16
  %s22 = scalar_lea.vmem %s0, 15
  %s23 = smov 48
  %v24 = vld [vmem:[%s22] ss:$16 sm:%s23]
  %vm25 = vcmask 1045508
  %v26 = vsel %vm25, %v24, %v21
  %27 = vrot.lane.b32.xlu0 %v26, 120
  %v28 = vpop.permute.xlu0 %27
  %vm29 = vcmask 1048512
  %30 = vst.msk [vmem:[%s1] sm:$0x3f] %vm29, %v28
  %s31 = scalar_lea.vmem %s0, 14
  %s32 = smov 3
  %v33 = vld [vmem:[%s31] ss:$16 sm:%s32]
  %s34 = scalar_lea.vmem %s0, 14
  %s35 = smov 12
  %v36 = vld [vmem:[%s34] ss:$16 sm:%s35]
  %vm37 = vcmask 1043458
  %v38 = vsel %vm37, %v36, %v33
  %s39 = scalar_lea.vmem %s0, 14
  %s40 = smov 48
  %v41 = vld [vmem:[%s39] ss:$16 sm:%s40]
  %vm42 = vcmask 1045508
  %v43 = vsel %vm42, %v41, %v38
  %44 = vrot.lane.b32.xlu0 %v43, 112
  %v45 = vpop.permute.xlu0 %44
  %vm46 = vcmask 982912
  %47 = vst.msk [vmem:[%s1] sm:$0x3f] %vm46, %v45
  %s48 = scalar_lea.vmem %s0, 13
  %s49 = smov 3
  %v50 = vld [vmem:[%s48] ss:$16 sm:%s49]
  %s51 = scalar_lea.vmem %s0, 13
  %s52 = smov 12
  %v53 = vld [vmem:[%s51] ss:$16 sm:%s52]
  %vm54 = vcmask 1043458
  %v55 = vsel %vm54, %v53, %v50
  %s56 = scalar_lea.vmem %s0, 13
  %s57 = smov 48
  %v58 = vld [vmem:[%s56] ss:$16 sm:%s57]
  %vm59 = vcmask 1045508
  %v60 = vsel %vm59, %v58, %v55
  %61 = vrot.lane.b32.xlu0 %v60, 104
  %v62 = vpop.permute.xlu0 %61
  %vm63 = vcmask 917312
  %64 = vst.msk [vmem:[%s1] sm:$0x3f] %vm63, %v62
  %s65 = scalar_lea.vmem %s0, 12
  %s66 = smov 3
  %v67 = vld [vmem:[%s65] ss:$16 sm:%s66]
  %s68 = scalar_lea.vmem %s0, 12
  %s69 = smov 12
  %v70 = vld [vmem:[%s68] ss:$16 sm:%s69]
  %vm71 = vcmask 1043458
  %v72 = vsel %vm71, %v70, %v67
  %s73 = scalar_lea.vmem %s0, 12
  %s74 = smov 48
  %v75 = vld [vmem:[%s73] ss:$16 sm:%s74]
  %vm76 = vcmask 1045508
  %v77 = vsel %vm76, %v75, %v72
  %78 = vrot.lane.b32.xlu0 %v77, 96
  %v79 = vpop.permute.xlu0 %78
  %vm80 = vcmask 851712
  %81 = vst.msk [vmem:[%s1] sm:$0x3f] %vm80, %v79
  %s82 = scalar_lea.vmem %s0, 11
  %s83 = smov 3
  %v84 = vld [vmem:[%s82] ss:$16 sm:%s83]
  %s85 = scalar_lea.vmem %s0, 11
  %s86 = smov 12
  %v87 = vld [vmem:[%s85] ss:$16 sm:%s86]
  %vm88 = vcmask 1043458
  %v89 = vsel %vm88, %v87, %v84
  %s90 = scalar_lea.vmem %s0, 11
  %s91 = smov 48
  %v92 = vld [vmem:[%s90] ss:$16 sm:%s91]
  %vm93 = vcmask 1045508
  %v94 = vsel %vm93, %v92, %v89
  %95 = vrot.lane.b32.xlu0 %v94, 88
  %v96 = vpop.permute.xlu0 %95
  %vm97 = vcmask 786112
  %98 = vst.msk [vmem:[%s1] sm:$0x3f] %vm97, %v96
  %s99 = scalar_lea.vmem %s0, 10
  %s100 = smov 3
  %v101 = vld [vmem:[%s99] ss:$16 sm:%s100]
  %s102 = scalar_lea.vmem %s0, 10
  %s103 = smov 12
  %v104 = vld [vmem:[%s102] ss:$16 sm:%s103]
  %vm105 = vcmask 1043458
  %v106 = vsel %vm105, %v104, %v101
  %s107 = scalar_lea.vmem %s0, 10
  %s108 = smov 48
  %v109 = vld [vmem:[%s107] ss:$16 sm:%s108]
  %vm110 = vcmask 1045508
  %v111 = vsel %vm110, %v109, %v106
  %112 = vrot.lane.b32.xlu0 %v111, 80
  %v113 = vpop.permute.xlu0 %112
  %vm114 = vcmask 720512
  %115 = vst.msk [vmem:[%s1] sm:$0x3f] %vm114, %v113
  %s116 = scalar_lea.vmem %s0, 9
  %s117 = smov 3
  %v118 = vld [vmem:[%s116] ss:$16 sm:%s117]
  %s119 = scalar_lea.vmem %s0, 9
  %s120 = smov 12
  %v121 = vld [vmem:[%s119] ss:$16 sm:%s120]
  %vm122 = vcmask 1043458
  %v123 = vsel %vm122, %v121, %v118
  %s124 = scalar_lea.vmem %s0, 9
  %s125 = smov 48
  %v126 = vld [vmem:[%s124] ss:$16 sm:%s125]
  %vm127 = vcmask 1045508
  %v128 = vsel %vm127, %v126, %v123
  %129 = vrot.lane.b32.xlu0 %v128, 72
  %v130 = vpop.permute.xlu0 %129
  %vm131 = vcmask 654912
  %132 = vst.msk [vmem:[%s1] sm:$0x3f] %vm131, %v130
  %s133 = scalar_lea.vmem %s0, 8
  %s134 = smov 3
  %v135 = vld [vmem:[%s133] ss:$16 sm:%s134]
  %s136 = scalar_lea.vmem %s0, 8
  %s137 = smov 12
  %v138 = vld [vmem:[%s136] ss:$16 sm:%s137]
  %vm139 = vcmask 1043458
  %v140 = vsel %vm139, %v138, %v135
  %s141 = scalar_lea.vmem %s0, 8
  %s142 = smov 48
  %v143 = vld [vmem:[%s141] ss:$16 sm:%s142]
  %vm144 = vcmask 1045508
  %v145 = vsel %vm144, %v143, %v140
  %146 = vrot.lane.b32.xlu0 %v145, 64
  %v147 = vpop.permute.xlu0 %146
  %vm148 = vcmask 589312
  %149 = vst.msk [vmem:[%s1] sm:$0x3f] %vm148, %v147
  %s150 = scalar_lea.vmem %s0, 7
  %s151 = smov 3
  %v152 = vld [vmem:[%s150] ss:$16 sm:%s151]
  %s153 = scalar_lea.vmem %s0, 7
  %s154 = smov 12
  %v155 = vld [vmem:[%s153] ss:$16 sm:%s154]
  %vm156 = vcmask 1043458
  %v157 = vsel %vm156, %v155, %v152
  %s158 = scalar_lea.vmem %s0, 7
  %s159 = smov 48
  %v160 = vld [vmem:[%s158] ss:$16 sm:%s159]
  %vm161 = vcmask 1045508
  %v162 = vsel %vm161, %v160, %v157
  %163 = vrot.lane.b32.xlu0 %v162, 56
  %v164 = vpop.permute.xlu0 %163
  %vm165 = vcmask 523712
  %166 = vst.msk [vmem:[%s1] sm:$0x3f] %vm165, %v164
  %s167 = scalar_lea.vmem %s0, 6
  %s168 = smov 3
  %v169 = vld [vmem:[%s167] ss:$16 sm:%s168]
  %s170 = scalar_lea.vmem %s0, 6
  %s171 = smov 12
  %v172 = vld [vmem:[%s170] ss:$16 sm:%s171]
  %vm173 = vcmask 1043458
  %v174 = vsel %vm173, %v172, %v169
  %s175 = scalar_lea.vmem %s0, 6
  %s176 = smov 48
  %v177 = vld [vmem:[%s175] ss:$16 sm:%s176]
  %vm178 = vcmask 1045508
  %v179 = vsel %vm178, %v177, %v174
  %180 = vrot.lane.b32.xlu0 %v179, 48
  %v181 = vpop.permute.xlu0 %180
  %vm182 = vcmask 458112
  %183 = vst.msk [vmem:[%s1] sm:$0x3f] %vm182, %v181
  %s184 = scalar_lea.vmem %s0, 5
  %s185 = smov 3
  %v186 = vld [vmem:[%s184] ss:$16 sm:%s185]
  %s187 = scalar_lea.vmem %s0, 5
  %s188 = smov 12
  %v189 = vld [vmem:[%s187] ss:$16 sm:%s188]
  %vm190 = vcmask 1043458
  %v191 = vsel %vm190, %v189, %v186
  %s192 = scalar_lea.vmem %s0, 5
  %s193 = smov 48
  %v194 = vld [vmem:[%s192] ss:$16 sm:%s193]
  %vm195 = vcmask 1045508
  %v196 = vsel %vm195, %v194, %v191
  %197 = vrot.lane.b32.xlu0 %v196, 40
  %v198 = vpop.permute.xlu0 %197
  %vm199 = vcmask 392512
  %200 = vst.msk [vmem:[%s1] sm:$0x3f] %vm199, %v198
  %s201 = scalar_lea.vmem %s0, 4
  %s202 = smov 3
  %v203 = vld [vmem:[%s201] ss:$16 sm:%s202]
  %s204 = scalar_lea.vmem %s0, 4
  %s205 = smov 12
  %v206 = vld [vmem:[%s204] ss:$16 sm:%s205]
  %vm207 = vcmask 1043458
  %v208 = vsel %vm207, %v206, %v203
  %s209 = scalar_lea.vmem %s0, 4
  %s210 = smov 48
  %v211 = vld [vmem:[%s209] ss:$16 sm:%s210]
  %vm212 = vcmask 1045508
  %v213 = vsel %vm212, %v211, %v208
  %214 = vrot.lane.b32.xlu0 %v213, 32
  %v215 = vpop.permute.xlu0 %214
  %vm216 = vcmask 326912
  %217 = vst.msk [vmem:[%s1] sm:$0x3f] %vm216, %v215
  %s218 = scalar_lea.vmem %s0, 3
  %s219 = smov 3
  %v220 = vld [vmem:[%s218] ss:$16 sm:%s219]
  %s221 = scalar_lea.vmem %s0, 3
  %s222 = smov 12
  %v223 = vld [vmem:[%s221] ss:$16 sm:%s222]
  %vm224 = vcmask 1043458
  %v225 = vsel %vm224, %v223, %v220
  %s226 = scalar_lea.vmem %s0, 3
  %s227 = smov 48
  %v228 = vld [vmem:[%s226] ss:$16 sm:%s227]
  %vm229 = vcmask 1045508
  %v230 = vsel %vm229, %v228, %v225
  %231 = vrot.lane.b32.xlu0 %v230, 24
  %v232 = vpop.permute.xlu0 %231
  %vm233 = vcmask 261312
  %234 = vst.msk [vmem:[%s1] sm:$0x3f] %vm233, %v232
  %s235 = scalar_lea.vmem %s0, 2
  %s236 = smov 3
  %v237 = vld [vmem:[%s235] ss:$16 sm:%s236]
  %s238 = scalar_lea.vmem %s0, 2
  %s239 = smov 12
  %v240 = vld [vmem:[%s238] ss:$16 sm:%s239]
  %vm241 = vcmask 1043458
  %v242 = vsel %vm241, %v240, %v237
  %s243 = scalar_lea.vmem %s0, 2
  %s244 = smov 48
  %v245 = vld [vmem:[%s243] ss:$16 sm:%s244]
  %vm246 = vcmask 1045508
  %v247 = vsel %vm246, %v245, %v242
  %248 = vrot.lane.b32.xlu0 %v247, 16
  %v249 = vpop.permute.xlu0 %248
  %vm250 = vcmask 195712
  %251 = vst.msk [vmem:[%s1] sm:$0x3f] %vm250, %v249
  %s252 = scalar_lea.vmem %s0, 1
  %s253 = smov 3
  %v254 = vld [vmem:[%s252] ss:$16 sm:%s253]
  %s255 = scalar_lea.vmem %s0, 1
  %s256 = smov 12
  %v257 = vld [vmem:[%s255] ss:$16 sm:%s256]
  %vm258 = vcmask 1043458
  %v259 = vsel %vm258, %v257, %v254
  %s260 = scalar_lea.vmem %s0, 1
  %s261 = smov 48
  %v262 = vld [vmem:[%s260] ss:$16 sm:%s261]
  %vm263 = vcmask 1045508
  %v264 = vsel %vm263, %v262, %v259
  %265 = vrot.lane.b32.xlu0 %v264, 8
  %v266 = vpop.permute.xlu0 %265
  %vm267 = vcmask 130112
  %268 = vst.msk [vmem:[%s1] sm:$0x3f] %vm267, %v266

// kernel: densenet_forward.1
$region0: #{densenet_forward.1}
  #allocation0 [shape = 'u32[]', space=smem, size = 0x4, offset = 0x4, fixed_abs, tag = 'smem constant byte address 0x4 - core index']
  #allocation1 [shape = 'u32[72,128]{1,0:T(1,128)}', space=vmem, size = 0x9000, scoped, tag = 'internal scratch']
  #allocation2 [shape = 'f32[5,18,144]{2,1,0:T(8,128)}', space=vmem, size = 0x1e000, scoped, tag = 'scratch operand']
  %s0 = inlined_call_operand.vmem [shape: f32[512,8], index: 0, kind: input, shape index: {}]
  %s1 = inlined_call_operand.vmem [shape: f32[1,8], index: 1, kind: input, shape index: {}]
  %s2 = inlined_call_operand.vmem [shape: f32[1,8], index: 2, kind: input, shape index: {}]
  %s3 = inlined_call_operand.vmem [shape: f32[2,16,128], index: 3, kind: input, shape index: {}]
  %s4 = inlined_call_operand.vmem [shape: f32[3,144,1408], index: 4, kind: input, shape index: {}]
  %s5 = inlined_call_operand.vmem [shape: f32[5,128,128], index: 5, kind: input, shape index: {}]
  %s6 = inlined_call_operand.vmem [shape: f32[6,128], index: 6, kind: input, shape index: {}]
  %s7 = inlined_call_operand.vmem [shape: f32[2,16,128], index: 7, kind: output, shape index: {}]
  %s8 = sld [smem:[#allocation0]]
  $region61: #{densenet_forward.1} parent=0
    _
  %s10 = ssub.s32 1, %s8
  %s11 = scalar_select 0, %s10, %s8
  loop: start=0, step=1, limit=4
  $region2: #{densenet_forward.1} parent=0 // loop_pre_header
    _
  $region3: #{densenet_forward.1} parent=0 // loop_header
    %s13 = sphi 0, %s17
    %p14 = scmp.ge.s32.totalorder %s13, 4
    %s21 = sphi 0, %s21
    %s23 = sphi 0, %s21
    %s24 = sphi 0, %s23
    %s38 = sphi 0, %s24
    %s42 = sphi 0, %s42
    %s44 = sphi 0, %s42
    %s45 = sphi 0, %s44
    %s59 = sphi 0, %s45
    %s63 = sphi 0, %s63
    %s65 = sphi 0, %s63
    %s66 = sphi 0, %s65
    %s80 = sphi 0, %s66
    %s86 = sphi 0, %s88
    %s89 = sphi 0, %s86
    %s90 = sphi 0, %s89
    %s106 = sphi 0, %s90
    %s110 = sphi 0, %s110
    %s112 = sphi 0, %s110
    %s113 = sphi 0, %s112
    %s127 = sphi 0, %s113
    %s131 = sphi 0, %s131
    %s133 = sphi 0, %s131
    %s134 = sphi 0, %s133
    %s148 = sphi 0, %s134
    %s152 = sphi 0, %s152
    %s154 = sphi 0, %s152
    %s155 = sphi 0, %s154
    %s169 = sphi 0, %s155
    %s175 = sphi 0, %s177
    %s178 = sphi 0, %s175
    %s179 = sphi 0, %s178
    %s195 = sphi 0, %s179
  $region4: #{densenet_forward.1} parent=0 // loop_header_branch
    %16 = sbr.rel (%p14) target = $region8
  $region5: #{densenet_forward.1} parent=0 // loop_body
    %s18 = ssub.s32 %s13, 1
    %s19 = ssub.s32 %s13, 2
    %s20 = sadd.s32 %s13, 1
    %s22 = sadd.s32 %s21, 1
    %p25 = scmp.eq.s32.totalorder %s13, 1
    %p26 = scmp.ne.s32.totalorder %s21, %s23
    %p27 = scmp.eq.s32.totalorder %s13, 0
    %p28 = por %p26, %p27
    %p29 = scmp.ne.s32.totalorder %s21, %s23
    %p30 = scmp.eq.s32.totalorder %s18, 1
    %p31 = por %p29, %p30
    %p32 = scmp.ne.s32.totalorder %s23, %s24
    %p33 = scmp.eq.s32.totalorder %s18, 0
    %p34 = por %p32, %p33
    %p35 = scmp.ne.s32.totalorder %s23, %s24
    %p36 = scmp.eq.s32.totalorder %s19, 1
    %p37 = por %p35, %p36
    %p39 = scmp.ne.s32.totalorder %s24, %s38
    %p40 = scmp.eq.s32.totalorder %s19, 0
    %p41 = por %p39, %p40
    %s43 = sadd.s32 %s42, 1
    %p46 = scmp.eq.s32.totalorder %s13, 1
    %p47 = scmp.ne.s32.totalorder %s42, %s44
    %p48 = scmp.eq.s32.totalorder %s13, 0
    %p49 = por %p47, %p48
    %p50 = scmp.ne.s32.totalorder %s42, %s44
    %p51 = scmp.eq.s32.totalorder %s18, 1
    %p52 = por %p50, %p51
    %p53 = scmp.ne.s32.totalorder %s44, %s45
    %p54 = scmp.eq.s32.totalorder %s18, 0
    %p55 = por %p53, %p54
    %p56 = scmp.ne.s32.totalorder %s44, %s45
    %p57 = scmp.eq.s32.totalorder %s19, 1
    %p58 = por %p56, %p57
    %p60 = scmp.ne.s32.totalorder %s45, %s59
    %p61 = scmp.eq.s32.totalorder %s19, 0
    %p62 = por %p60, %p61
    %s64 = sadd.s32 %s63, 1
    %p67 = scmp.eq.s32.totalorder %s13, 1
    %p68 = scmp.ne.s32.totalorder %s63, %s65
    %p69 = scmp.eq.s32.totalorder %s13, 0
    %p70 = por %p68, %p69
    %p71 = scmp.ne.s32.totalorder %s63, %s65
    %p72 = scmp.eq.s32.totalorder %s18, 1
    %p73 = por %p71, %p72
    %p74 = scmp.ne.s32.totalorder %s65, %s66
    %p75 = scmp.eq.s32.totalorder %s18, 0
    %p76 = por %p74, %p75
    %p77 = scmp.ne.s32.totalorder %s65, %s66
    %p78 = scmp.eq.s32.totalorder %s19, 1
    %p79 = por %p77, %p78
    %p81 = scmp.ne.s32.totalorder %s66, %s80
    %p82 = scmp.eq.s32.totalorder %s19, 0
    %p83 = por %p81, %p82
    %s84 = ssub.s32 %s13, %s20
    %p85 = scmp.eq.s32.totalorder %s84, 0
    %s87 = sadd.s32 %s86, 1
    %s88 = scalar_select %p85, %s86, %s87
    %p91 = pneg %p85
    %p92 = scmp.eq.s32.totalorder %s13, 1
    %p93 = por %p91, %p92
    %p94 = scmp.ne.s32.totalorder %s86, %s89
    %p95 = scmp.eq.s32.totalorder %s13, 0
    %p96 = por %p94, %p95
    %p97 = scmp.ne.s32.totalorder %s86, %s89
    %p98 = scmp.eq.s32.totalorder %s18, 1
    %p99 = por %p97, %p98
    %p100 = scmp.ne.s32.totalorder %s89, %s90
    %p101 = scmp.eq.s32.totalorder %s18, 0
    %p102 = por %p100, %p101
    %p103 = scmp.ne.s32.totalorder %s89, %s90
    %p104 = scmp.eq.s32.totalorder %s19, 1
    %p105 = por %p103, %p104
    %p107 = scmp.ne.s32.totalorder %s90, %s106
    %p108 = scmp.eq.s32.totalorder %s19, 0
    %p109 = por %p107, %p108
    %s111 = sadd.s32 %s110, 1
    %p114 = scmp.eq.s32.totalorder %s13, 1
    %p115 = scmp.ne.s32.totalorder %s110, %s112
    %p116 = scmp.eq.s32.totalorder %s13, 0
    %p117 = por %p115, %p116
    %p118 = scmp.ne.s32.totalorder %s110, %s112
    %p119 = scmp.eq.s32.totalorder %s18, 1
    %p120 = por %p118, %p119
    %p121 = scmp.ne.s32.totalorder %s112, %s113
    %p122 = scmp.eq.s32.totalorder %s18, 0
    %p123 = por %p121, %p122
    %p124 = scmp.ne.s32.totalorder %s112, %s113
    %p125 = scmp.eq.s32.totalorder %s19, 1
    %p126 = por %p124, %p125
    %p128 = scmp.ne.s32.totalorder %s113, %s127
    %p129 = scmp.eq.s32.totalorder %s19, 0
    %p130 = por %p128, %p129
    %s132 = sadd.s32 %s131, 1
    %p135 = scmp.eq.s32.totalorder %s13, 1
    %p136 = scmp.ne.s32.totalorder %s131, %s133
    %p137 = scmp.eq.s32.totalorder %s13, 0
    %p138 = por %p136, %p137
    %p139 = scmp.ne.s32.totalorder %s131, %s133
    %p140 = scmp.eq.s32.totalorder %s18, 1
    %p141 = por %p139, %p140
    %p142 = scmp.ne.s32.totalorder %s133, %s134
    %p143 = scmp.eq.s32.totalorder %s18, 0
    %p144 = por %p142, %p143
    %p145 = scmp.ne.s32.totalorder %s133, %s134
    %p146 = scmp.eq.s32.totalorder %s19, 1
    %p147 = por %p145, %p146
    %p149 = scmp.ne.s32.totalorder %s134, %s148
    %p150 = scmp.eq.s32.totalorder %s19, 0
    %p151 = por %p149, %p150
    %s153 = sadd.s32 %s152, 1
    %p156 = scmp.eq.s32.totalorder %s13, 1
    %p157 = scmp.ne.s32.totalorder %s152, %s154
    %p158 = scmp.eq.s32.totalorder %s13, 0
    %p159 = por %p157, %p158
    %p160 = scmp.ne.s32.totalorder %s152, %s154
    %p161 = scmp.eq.s32.totalorder %s18, 1
    %p162 = por %p160, %p161
    %p163 = scmp.ne.s32.totalorder %s154, %s155
    %p164 = scmp.eq.s32.totalorder %s18, 0
    %p165 = por %p163, %p164
    %p166 = scmp.ne.s32.totalorder %s154, %s155
    %p167 = scmp.eq.s32.totalorder %s19, 1
    %p168 = por %p166, %p167
    %p170 = scmp.ne.s32.totalorder %s155, %s169
    %p171 = scmp.eq.s32.totalorder %s19, 0
    %p172 = por %p170, %p171
    %s173 = ssub.s32 %s13, %s20
    %p174 = scmp.eq.s32.totalorder %s173, 0
    %s176 = sadd.s32 %s175, 1
    %s177 = scalar_select %p174, %s175, %s176
    %p180 = pneg %p174
    %p181 = scmp.eq.s32.totalorder %s13, 1
    %p182 = por %p180, %p181
    %p183 = scmp.ne.s32.totalorder %s175, %s178
    %p184 = scmp.eq.s32.totalorder %s13, 0
    %p185 = por %p183, %p184
    %p186 = scmp.ne.s32.totalorder %s175, %s178
    %p187 = scmp.eq.s32.totalorder %s18, 1
    %p188 = por %p186, %p187
    %p189 = scmp.ne.s32.totalorder %s178, %s179
    %p190 = scmp.eq.s32.totalorder %s18, 0
    %p191 = por %p189, %p190
    %p192 = scmp.ne.s32.totalorder %s178, %s179
    %p193 = scmp.eq.s32.totalorder %s19, 1
    %p194 = por %p192, %p193
    %p196 = scmp.ne.s32.totalorder %s179, %s195
    %p197 = scmp.eq.s32.totalorder %s19, 0
    %p198 = por %p196, %p197
    %p199 = scmp.le.s32.totalorder 1, %s13
    %p200 = scmp.lt.s32.totalorder %s13, 3
    %p201 = pnand %p199, %p200
    %p202 = pneg %p201
    // Predicated region
    $region9: #{densenet_forward.1} parent=5 // pred_check
      _
    $region10: #{densenet_forward.1} parent=5 // pred_check_branch
      %204 = sbr.rel (%p201) target = $region12
    $region11: #{densenet_forward.1} parent=5 // pred_region
      %s205 = ssub.s32 %s13, 1
      // Predicated region
      $region13: #{densenet_forward.1} parent=11 // pred_check
        %p206 = pneg %p34
      $region14: #{densenet_forward.1} parent=11 // pred_check_branch
        %208 = sbr.rel (%p206) target = $region16
      $region15: #{densenet_forward.1} parent=11 // pred_region
        _
      $region16: #{densenet_forward.1} parent=11 // pred_fallthru
        _
      // Predicated region
      $region17: #{densenet_forward.1} parent=11 // pred_check
        %p209 = pneg %p55
      $region18: #{densenet_forward.1} parent=11 // pred_check_branch
        %211 = sbr.rel (%p209) target = $region20
      $region19: #{densenet_forward.1} parent=11 // pred_region
        _
      $region20: #{densenet_forward.1} parent=11 // pred_fallthru
        _
      // Predicated region
      $region21: #{densenet_forward.1} parent=11 // pred_check
        %p212 = pneg %p76
      $region22: #{densenet_forward.1} parent=11 // pred_check_branch
        %214 = sbr.rel (%p212) target = $region24
      $region23: #{densenet_forward.1} parent=11 // pred_region
        _
      $region24: #{densenet_forward.1} parent=11 // pred_fallthru
        _
      // Predicated region
      $region25: #{densenet_forward.1} parent=11 // pred_check
        %p215 = pneg %p123
      $region26: #{densenet_forward.1} parent=11 // pred_check_branch
        %217 = sbr.rel (%p215) target = $region28
      $region27: #{densenet_forward.1} parent=11 // pred_region
        _
      $region28: #{densenet_forward.1} parent=11 // pred_fallthru
        _
      // Predicated region
      $region29: #{densenet_forward.1} parent=11 // pred_check
        %p218 = pneg %p144
      $region30: #{densenet_forward.1} parent=11 // pred_check_branch
        %220 = sbr.rel (%p218) target = $region32
      $region31: #{densenet_forward.1} parent=11 // pred_region
        _
      $region32: #{densenet_forward.1} parent=11 // pred_fallthru
        _
      // Predicated region
      $region33: #{densenet_forward.1} parent=11 // pred_check
        %p221 = pneg %p165
      $region34: #{densenet_forward.1} parent=11 // pred_check_branch
        %223 = sbr.rel (%p221) target = $region36
      $region35: #{densenet_forward.1} parent=11 // pred_region
        _
      $region36: #{densenet_forward.1} parent=11 // pred_fallthru
        _
    $region12: #{densenet_forward.1} parent=5 // pred_fallthru
      _
    %p224 = scmp.lt.s32.totalorder %s13, 2
    // Predicated region
    $region37: #{densenet_forward.1} parent=5 // pred_check
      %p225 = pneg %p224
    $region38: #{densenet_forward.1} parent=5 // pred_check_branch
      %227 = sbr.rel (%p225) target = $region40
    $region39: #{densenet_forward.1} parent=5 // pred_region
      // Predicated region
      $region41: #{densenet_forward.1} parent=39 // pred_check
        %p228 = pneg %p96
      $region42: #{densenet_forward.1} parent=39 // pred_check_branch
        %230 = sbr.rel (%p228) target = $region44
      $region43: #{densenet_forward.1} parent=39 // pred_region
        %p231 = scmp.lt.s32.totalorder %s13, 1
        %s232 = scalar_select %p231, %s13, 1
        %s233 = smul.addr %s232, 2
        %s234 = smul.addr %s233, 8
        %s235 = scalar_lea.vmem %s3, %s234
      $region44: #{densenet_forward.1} parent=39 // pred_fallthru
        _
    $region40: #{densenet_forward.1} parent=5 // pred_fallthru
      _
    %p236 = scmp.le.s32.totalorder 1, %s13
    %p237 = scmp.lt.s32.totalorder %s13, 3
    %p238 = pnand %p236, %p237
    %p239 = pneg %p238
    // Predicated region
    $region45: #{densenet_forward.1} parent=5 // pred_check
      _
    $region46: #{densenet_forward.1} parent=5 // pred_check_branch
      %241 = sbr.rel (%p238) target = $region48
    $region47: #{densenet_forward.1} parent=5 // pred_region
      %s242 = ssub.s32 %s13, 1
      %p243 = pneg %p34
      %p244 = pneg %p31
      %p245 = pneg %p55
      %p246 = pneg %p52
      %p247 = pneg %p76
      %p248 = pneg %p73
      %p249 = scmp.lt.s32.totalorder %s18, 1
      %s250 = scalar_select %p249, %s18, 1
      %s251 = smul.addr %s250, 2
      %s252 = smul.addr %s251, 8
      %s253 = scalar_lea.vmem %s3, %s252
      %p254 = pneg %p102
      %p255 = pneg %p99
      %p256 = pneg %p123
      %p257 = pneg %p120
      %p258 = pneg %p144
      %p259 = pneg %p141
      %p260 = pneg %p165
      %p261 = pneg %p162
      %p262 = pneg %p191
      %p263 = pneg %p188
      %p264 = scmp.lt.s32.totalorder %s18, 1
      %s265 = scalar_select %p264, %s18, 1
      %s266 = smul.addr %s265, 2
      %s267 = smul.addr %s266, 8
      %s268 = scalar_lea.vmem %s7, %s267
      %p269 = scmp.lt.s32.totalorder %s18, 1
      %s270 = scalar_select %p269, %s18, 1
      %s271 = smul.addr %s270, 2
      %s272 = smul.addr %s271, 8
      %s273 = scalar_lea.vmem %s3, %s272
      %p274 = scmp.lt.s32.totalorder %s18, 1
      %s275 = scalar_select %p274, %s18, 1
      %s276 = smul.addr %s275, 2
      %s277 = smul.addr %s276, 8
      %s278 = scalar_lea.vmem %s7, %s277
      %v279 = vld [vmem:[%s0] sm:$0xff]
      %v280 = vld [vmem:[%s0 + $0x8] sm:$0xff]
      %v281 = vld [vmem:[%s0 + $0x10] sm:$0xff]
      %v282 = vld [vmem:[%s0 + $0x18] sm:$0xff]
      %v283 = vld [vmem:[%s0 + $0x20] sm:$0xff]
      %v284 = vld [vmem:[%s0 + $0x28] sm:$0xff]
      %v285 = vld [vmem:[%s0 + $0x30] sm:$0xff]
      %v286 = vld [vmem:[%s0 + $0x38] sm:$0xff]
      %v287 = vld [vmem:[%s0 + $0x40] sm:$0xff]
      %v288 = vld [vmem:[%s0 + $0x48] sm:$0xff]
      %v289 = vld [vmem:[%s0 + $0x50] sm:$0xff]
      %v290 = vld [vmem:[%s0 + $0x58] sm:$0xff]
      %v291 = vld [vmem:[%s0 + $0x60] sm:$0xff]
      %v292 = vld [vmem:[%s0 + $0x68] sm:$0xff]
      %v293 = vld [vmem:[%s0 + $0x70] sm:$0xff]
      %v294 = vld [vmem:[%s0 + $0x78] sm:$0xff]
      %v295 = vld [vmem:[%s0 + $0x80] sm:$0xff]
      %v296 = vld [vmem:[%s0 + $0x88] sm:$0xff]
      %v297 = vld [vmem:[%s0 + $0x90] sm:$0xff]
      %v298 = vld [vmem:[%s0 + $0x98] sm:$0xff]
      %v299 = vld [vmem:[%s0 + $0xa0] sm:$0xff]
      %v300 = vld [vmem:[%s0 + $0xa8] sm:$0xff]
      %v301 = vld [vmem:[%s0 + $0xb0] sm:$0xff]
      %v302 = vld [vmem:[%s0 + $0xb8] sm:$0xff]
      %v303 = vld [vmem:[%s0 + $0xc0] sm:$0xff]
      %v304 = vld [vmem:[%s0 + $0xc8] sm:$0xff]
      %v305 = vld [vmem:[%s0 + $0xd0] sm:$0xff]
      %v306 = vld [vmem:[%s0 + $0xd8] sm:$0xff]
      %v307 = vld [vmem:[%s0 + $0xe0] sm:$0xff]
      %v308 = vld [vmem:[%s0 + $0xe8] sm:$0xff]
      %v309 = vld [vmem:[%s0 + $0xf0] sm:$0xff]
      %v310 = vld [vmem:[%s0 + $0xf8] sm:$0xff]
      %v311 = vld [vmem:[%s0 + $0x100] sm:$0xff]
      %v312 = vld [vmem:[%s0 + $0x108] sm:$0xff]
      %v313 = vld [vmem:[%s0 + $0x110] sm:$0xff]
      %v314 = vld [vmem:[%s0 + $0x118] sm:$0xff]
      %v315 = vld [vmem:[%s0 + $0x120] sm:$0xff]
      %v316 = vld [vmem:[%s0 + $0x128] sm:$0xff]
      %v317 = vld [vmem:[%s0 + $0x130] sm:$0xff]
      %v318 = vld [vmem:[%s0 + $0x138] sm:$0xff]
      %v319 = vld [vmem:[%s0 + $0x140] sm:$0xff]
      %v320 = vld [vmem:[%s0 + $0x148] sm:$0xff]
      %v321 = vld [vmem:[%s0 + $0x150] sm:$0xff]
      %v322 = vld [vmem:[%s0 + $0x158] sm:$0xff]
      %v323 = vld [vmem:[%s0 + $0x160] sm:$0xff]
      %v324 = vld [vmem:[%s0 + $0x168] sm:$0xff]
      %v325 = vld [vmem:[%s0 + $0x170] sm:$0xff]
      %v326 = vld [vmem:[%s0 + $0x178] sm:$0xff]
      %v327 = vld [vmem:[%s0 + $0x180] sm:$0xff]
      %v328 = vld [vmem:[%s0 + $0x188] sm:$0xff]
      %v329 = vld [vmem:[%s0 + $0x190] sm:$0xff]
      %v330 = vld [vmem:[%s0 + $0x198] sm:$0xff]
      %v331 = vld [vmem:[%s0 + $0x1a0] sm:$0xff]
      %v332 = vld [vmem:[%s0 + $0x1a8] sm:$0xff]
      %v333 = vld [vmem:[%s0 + $0x1b0] sm:$0xff]
      %v334 = vld [vmem:[%s0 + $0x1b8] sm:$0xff]
      %v335 = vld [vmem:[%s0 + $0x1c0] sm:$0xff]
      %v336 = vld [vmem:[%s0 + $0x1c8] sm:$0xff]
      %v337 = vld [vmem:[%s0 + $0x1d0] sm:$0xff]
      %v338 = vld [vmem:[%s0 + $0x1d8] sm:$0xff]
      %v339 = vld [vmem:[%s0 + $0x1e0] sm:$0xff]
      %v340 = vld [vmem:[%s0 + $0x1e8] sm:$0xff]
      %v341 = vld [vmem:[%s0 + $0x1f0] sm:$0xff]
      %v342 = vld [vmem:[%s0 + $0x1f8] sm:$0xff]
      %vm343 = vcmask 64512
      %v344 = vsel %vm343, %v279, 0.0
      %v345 = vsel %vm343, %v280, 0.0
      %v346 = vadd.f32 %v344, %v345
      %v347 = vsel %vm343, %v281, 0.0
      %v348 = vadd.f32 %v346, %v347
      %v349 = vsel %vm343, %v282, 0.0
      %v350 = vadd.f32 %v348, %v349
      %v351 = vsel %vm343, %v283, 0.0
      %v352 = vadd.f32 %v350, %v351
      %v353 = vsel %vm343, %v284, 0.0
      %v354 = vadd.f32 %v352, %v353
      %v355 = vsel %vm343, %v285, 0.0
      %v356 = vadd.f32 %v354, %v355
      %v357 = vsel %vm343, %v286, 0.0
      %v358 = vadd.f32 %v356, %v357
      %v359 = vsel %vm343, %v287, 0.0
      %v360 = vadd.f32 %v358, %v359
      %v361 = vsel %vm343, %v288, 0.0
      %v362 = vadd.f32 %v360, %v361
      %v363 = vsel %vm343, %v289, 0.0
      %v364 = vadd.f32 %v362, %v363
      %v365 = vsel %vm343, %v290, 0.0
      %v366 = vadd.f32 %v364, %v365
      %v367 = vsel %vm343, %v291, 0.0
      %v368 = vadd.f32 %v366, %v367
      %v369 = vsel %vm343, %v292, 0.0
      %v370 = vadd.f32 %v368, %v369
      %v371 = vsel %vm343, %v293, 0.0
      %v372 = vadd.f32 %v370, %v371
      %v373 = vsel %vm343, %v294, 0.0
      %v374 = vadd.f32 %v372, %v373
      %v375 = vsel %vm343, %v295, 0.0
      %v376 = vadd.f32 %v374, %v375
      %v377 = vsel %vm343, %v296, 0.0
      %v378 = vadd.f32 %v376, %v377
      %v379 = vsel %vm343, %v297, 0.0
      %v380 = vadd.f32 %v378, %v379
      %v381 = vsel %vm343, %v298, 0.0
      %v382 = vadd.f32 %v380, %v381
      %v383 = vsel %vm343, %v299, 0.0
      %v384 = vadd.f32 %v382, %v383
      %v385 = vsel %vm343, %v300, 0.0
      %v386 = vadd.f32 %v384, %v385
      %v387 = vsel %vm343, %v301, 0.0
      %v388 = vadd.f32 %v386, %v387
      %v389 = vsel %vm343, %v302, 0.0
      %v390 = vadd.f32 %v388, %v389
      %v391 = vsel %vm343, %v303, 0.0
      %v392 = vadd.f32 %v390, %v391
      %v393 = vsel %vm343, %v304, 0.0
      %v394 = vadd.f32 %v392, %v393
      %v395 = vsel %vm343, %v305, 0.0
      %v396 = vadd.f32 %v394, %v395
      %v397 = vsel %vm343, %v306, 0.0
      %v398 = vadd.f32 %v396, %v397
      %v399 = vsel %vm343, %v307, 0.0
      %v400 = vadd.f32 %v398, %v399
      %v401 = vsel %vm343, %v308, 0.0
      %v402 = vadd.f32 %v400, %v401
      %v403 = vsel %vm343, %v309, 0.0
      %v404 = vadd.f32 %v402, %v403
      %v405 = vsel %vm343, %v310, 0.0
      %v406 = vadd.f32 %v404, %v405
      %v407 = vsel %vm343, %v311, 0.0
      %v408 = vadd.f32 %v406, %v407
      %v409 = vsel %vm343, %v312, 0.0
      %v410 = vadd.f32 %v408, %v409
      %v411 = vsel %vm343, %v313, 0.0
      %v412 = vadd.f32 %v410, %v411
      %v413 = vsel %vm343, %v314, 0.0
      %v414 = vadd.f32 %v412, %v413
      %v415 = vsel %vm343, %v315, 0.0
      %v416 = vadd.f32 %v414, %v415
      %v417 = vsel %vm343, %v316, 0.0
      %v418 = vadd.f32 %v416, %v417
      %v419 = vsel %vm343, %v317, 0.0
      %v420 = vadd.f32 %v418, %v419
      %v421 = vsel %vm343, %v318, 0.0
      %v422 = vadd.f32 %v420, %v421
      %v423 = vsel %vm343, %v319, 0.0
      %v424 = vadd.f32 %v422, %v423
      %v425 = vsel %vm343, %v320, 0.0
      %v426 = vadd.f32 %v424, %v425
      %v427 = vsel %vm343, %v321, 0.0
      %v428 = vadd.f32 %v426, %v427
      %v429 = vsel %vm343, %v322, 0.0
      %v430 = vadd.f32 %v428, %v429
      %v431 = vsel %vm343, %v323, 0.0
      %v432 = vadd.f32 %v430, %v431
      %v433 = vsel %vm343, %v324, 0.0
      %v434 = vadd.f32 %v432, %v433
      %v435 = vsel %vm343, %v325, 0.0
      %v436 = vadd.f32 %v434, %v435
      %v437 = vsel %vm343, %v326, 0.0
      %v438 = vadd.f32 %v436, %v437
      %v439 = vsel %vm343, %v327, 0.0
      %v440 = vadd.f32 %v438, %v439
      %v441 = vsel %vm343, %v328, 0.0
      %v442 = vadd.f32 %v440, %v441
      %v443 = vsel %vm343, %v329, 0.0
      %v444 = vadd.f32 %v442, %v443
      %v445 = vsel %vm343, %v330, 0.0
      %v446 = vadd.f32 %v444, %v445
      %v447 = vsel %vm343, %v331, 0.0
      %v448 = vadd.f32 %v446, %v447
      %v449 = vsel %vm343, %v332, 0.0
      %v450 = vadd.f32 %v448, %v449
      %v451 = vsel %vm343, %v333, 0.0
      %v452 = vadd.f32 %v450, %v451
      %v453 = vsel %vm343, %v334, 0.0
      %v454 = vadd.f32 %v452, %v453
      %v455 = vsel %vm343, %v335, 0.0
      %v456 = vadd.f32 %v454, %v455
      %v457 = vsel %vm343, %v336, 0.0
      %v458 = vadd.f32 %v456, %v457
      %v459 = vsel %vm343, %v337, 0.0
      %v460 = vadd.f32 %v458, %v459
      %v461 = vsel %vm343, %v338, 0.0
      %v462 = vadd.f32 %v460, %v461
      %v463 = vsel %vm343, %v339, 0.0
      %v464 = vadd.f32 %v462, %v463
      %v465 = vsel %vm343, %v340, 0.0
      %v466 = vadd.f32 %v464, %v465
      %v467 = vsel %vm343, %v341, 0.0
      %v468 = vadd.f32 %v466, %v467
      %v469 = vsel %vm343, %v342, 0.0
      %v470 = vadd.f32 %v468, %v469
      %v471 = vrot.slane %v470, 4
      %v472 = vadd.f32 %v470, %v471
      %v473 = vrot.slane %v472, 2
      %v474 = vadd.f32 %v472, %v473
      %v475 = vrot.slane %v474, 1
      %v476 = vadd.f32 %v474, %v475
      %v477 = vrcp.pop 512.0
      %v478 = vmul.f32 512.0, %v477
      %v479 = vsub.f32 1.0, %v478
      %v480 = vmul.f32 %v477, %v479
      %v481 = vadd.f32 %v477, %v480
      %vm482 = vweird.f32 %v477
      %v483 = vsel %vm482, %v477, %v481
      %v484 = vmul.f32 %v476, %v483
      %v485 = vsub.f32 %v279, %v484
      %v486 = vsub.f32 %v280, %v484
      %v487 = vsub.f32 %v281, %v484
      %v488 = vsub.f32 %v282, %v484
      %v489 = vsub.f32 %v283, %v484
      %v490 = vsub.f32 %v284, %v484
      %v491 = vsub.f32 %v285, %v484
      %v492 = vsub.f32 %v286, %v484
      %v493 = vsub.f32 %v287, %v484
      %v494 = vsub.f32 %v288, %v484
      %v495 = vsub.f32 %v289, %v484
      %v496 = vsub.f32 %v290, %v484
      %v497 = vsub.f32 %v291, %v484
      %v498 = vsub.f32 %v292, %v484
      %v499 = vsub.f32 %v293, %v484
      %v500 = vsub.f32 %v294, %v484
      %v501 = vsub.f32 %v295, %v484
      %v502 = vsub.f32 %v296, %v484
      %v503 = vsub.f32 %v297, %v484
      %v504 = vsub.f32 %v298, %v484
      %v505 = vsub.f32 %v299, %v484
      %v506 = vsub.f32 %v300, %v484
      %v507 = vsub.f32 %v301, %v484
      %v508 = vsub.f32 %v302, %v484
      %v509 = vsub.f32 %v303, %v484
      %v510 = vsub.f32 %v304, %v484
      %v511 = vsub.f32 %v305, %v484
      %v512 = vsub.f32 %v306, %v484
      %v513 = vsub.f32 %v307, %v484
      %v514 = vsub.f32 %v308, %v484
      %v515 = vsub.f32 %v309, %v484
      %v516 = vsub.f32 %v310, %v484
      %v517 = vsub.f32 %v311, %v484
      %v518 = vsub.f32 %v312, %v484
      %v519 = vsub.f32 %v313, %v484
      %v520 = vsub.f32 %v314, %v484
      %v521 = vsub.f32 %v315, %v484
      %v522 = vsub.f32 %v316, %v484
      %v523 = vsub.f32 %v317, %v484
      %v524 = vsub.f32 %v318, %v484
      %v525 = vsub.f32 %v319, %v484
      %v526 = vsub.f32 %v320, %v484
      %v527 = vsub.f32 %v321, %v484
      %v528 = vsub.f32 %v322, %v484
      %v529 = vsub.f32 %v323, %v484
      %v530 = vsub.f32 %v324, %v484
      %v531 = vsub.f32 %v325, %v484
      %v532 = vsub.f32 %v326, %v484
      %v533 = vsub.f32 %v327, %v484
      %v534 = vsub.f32 %v328, %v484
      %v535 = vsub.f32 %v329, %v484
      %v536 = vsub.f32 %v330, %v484
      %v537 = vsub.f32 %v331, %v484
      %v538 = vsub.f32 %v332, %v484
      %v539 = vsub.f32 %v333, %v484
      %v540 = vsub.f32 %v334, %v484
      %v541 = vsub.f32 %v335, %v484
      %v542 = vsub.f32 %v336, %v484
      %v543 = vsub.f32 %v337, %v484
      %v544 = vsub.f32 %v338, %v484
      %v545 = vsub.f32 %v339, %v484
      %v546 = vsub.f32 %v340, %v484
      %v547 = vsub.f32 %v341, %v484
      %v548 = vsub.f32 %v342, %v484
      %v549 = vmul.f32 %v485, %v485
      %v550 = vmul.f32 %v486, %v486
      %v551 = vmul.f32 %v487, %v487
      %v552 = vmul.f32 %v488, %v488
      %v553 = vmul.f32 %v489, %v489
      %v554 = vmul.f32 %v490, %v490
      %v555 = vmul.f32 %v491, %v491
      %v556 = vmul.f32 %v492, %v492
      %v557 = vmul.f32 %v493, %v493
      %v558 = vmul.f32 %v494, %v494
      %v559 = vmul.f32 %v495, %v495
      %v560 = vmul.f32 %v496, %v496
      %v561 = vmul.f32 %v497, %v497
      %v562 = vmul.f32 %v498, %v498
      %v563 = vmul.f32 %v499, %v499
      %v564 = vmul.f32 %v500, %v500
      %v565 = vmul.f32 %v501, %v501
      %v566 = vmul.f32 %v502, %v502
      %v567 = vmul.f32 %v503, %v503
      %v568 = vmul.f32 %v504, %v504
      %v569 = vmul.f32 %v505, %v505
      %v570 = vmul.f32 %v506, %v506
      %v571 = vmul.f32 %v507, %v507
      %v572 = vmul.f32 %v508, %v508
      %v573 = vmul.f32 %v509, %v509
      %v574 = vmul.f32 %v510, %v510
      %v575 = vmul.f32 %v511, %v511
      %v576 = vmul.f32 %v512, %v512
      %v577 = vmul.f32 %v513, %v513
      %v578 = vmul.f32 %v514, %v514
      %v579 = vmul.f32 %v515, %v515
      %v580 = vmul.f32 %v516, %v516
      %v581 = vmul.f32 %v517, %v517
      %v582 = vmul.f32 %v518, %v518
      %v583 = vmul.f32 %v519, %v519
      %v584 = vmul.f32 %v520, %v520
      %v585 = vmul.f32 %v521, %v521
      %v586 = vmul.f32 %v522, %v522
      %v587 = vmul.f32 %v523, %v523
      %v588 = vmul.f32 %v524, %v524
      %v589 = vmul.f32 %v525, %v525
      %v590 = vmul.f32 %v526, %v526
      %v591 = vmul.f32 %v527, %v527
      %v592 = vmul.f32 %v528, %v528
      %v593 = vmul.f32 %v529, %v529
      %v594 = vmul.f32 %v530, %v530
      %v595 = vmul.f32 %v531, %v531
      %v596 = vmul.f32 %v532, %v532
      %v597 = vmul.f32 %v533, %v533
      %v598 = vmul.f32 %v534, %v534
      %v599 = vmul.f32 %v535, %v535
      %v600 = vmul.f32 %v536, %v536
      %v601 = vmul.f32 %v537, %v537
      %v602 = vmul.f32 %v538, %v538
      %v603 = vmul.f32 %v539, %v539
      %v604 = vmul.f32 %v540, %v540
      %v605 = vmul.f32 %v541, %v541
      %v606 = vmul.f32 %v542, %v542
      %v607 = vmul.f32 %v543, %v543
      %v608 = vmul.f32 %v544, %v544
      %v609 = vmul.f32 %v545, %v545
      %v610 = vmul.f32 %v546, %v546
      %v611 = vmul.f32 %v547, %v547
      %v612 = vmul.f32 %v548, %v548
      %v613 = vsel %vm343, %v549, 0.0
      %v614 = vsel %vm343, %v550, 0.0
      %v615 = vadd.f32 %v613, %v614
      %v616 = vsel %vm343, %v551, 0.0
      %v617 = vadd.f32 %v615, %v616
      %v618 = vsel %vm343, %v552, 0.0
      %v619 = vadd.f32 %v617, %v618
      %v620 = vsel %vm343, %v553, 0.0
      %v621 = vadd.f32 %v619, %v620
      %v622 = vsel %vm343, %v554, 0.0
      %v623 = vadd.f32 %v621, %v622
      %v624 = vsel %vm343, %v555, 0.0
      %v625 = vadd.f32 %v623, %v624
      %v626 = vsel %vm343, %v556, 0.0
      %v627 = vadd.f32 %v625, %v626
      %v628 = vsel %vm343, %v557, 0.0
      %v629 = vadd.f32 %v627, %v628
      %v630 = vsel %vm343, %v558, 0.0
      %v631 = vadd.f32 %v629, %v630
      %v632 = vsel %vm343, %v559, 0.0
      %v633 = vadd.f32 %v631, %v632
      %v634 = vsel %vm343, %v560, 0.0
      %v635 = vadd.f32 %v633, %v634
      %v636 = vsel %vm343, %v561, 0.0
      %v637 = vadd.f32 %v635, %v636
      %v638 = vsel %vm343, %v562, 0.0
      %v639 = vadd.f32 %v637, %v638
      %v640 = vsel %vm343, %v563, 0.0
      %v641 = vadd.f32 %v639, %v640
      %v642 = vsel %vm343, %v564, 0.0
      %v643 = vadd.f32 %v641, %v642
      %v644 = vsel %vm343, %v565, 0.0
      %v645 = vadd.f32 %v643, %v644
      %v646 = vsel %vm343, %v566, 0.0
      %v647 = vadd.f32 %v645, %v646
      %v648 = vsel %vm343, %v567, 0.0
      %v649 = vadd.f32 %v647, %v648
      %v650 = vsel %vm343, %v568, 0.0
      %v651 = vadd.f32 %v649, %v650
      %v652 = vsel %vm343, %v569, 0.0
      %v653 = vadd.f32 %v651, %v652
      %v654 = vsel %vm343, %v570, 0.0
      %v655 = vadd.f32 %v653, %v654
      %v656 = vsel %vm343, %v571, 0.0
      %v657 = vadd.f32 %v655, %v656
      %v658 = vsel %vm343, %v572, 0.0
      %v659 = vadd.f32 %v657, %v658
      %v660 = vsel %vm343, %v573, 0.0
      %v661 = vadd.f32 %v659, %v660
      %v662 = vsel %vm343, %v574, 0.0
      %v663 = vadd.f32 %v661, %v662
      %v664 = vsel %vm343, %v575, 0.0
      %v665 = vadd.f32 %v663, %v664
      %v666 = vsel %vm343, %v576, 0.0
      %v667 = vadd.f32 %v665, %v666
      %v668 = vsel %vm343, %v577, 0.0
      %v669 = vadd.f32 %v667, %v668
      %v670 = vsel %vm343, %v578, 0.0
      %v671 = vadd.f32 %v669, %v670
      %v672 = vsel %vm343, %v579, 0.0
      %v673 = vadd.f32 %v671, %v672
      %v674 = vsel %vm343, %v580, 0.0
      %v675 = vadd.f32 %v673, %v674
      %v676 = vsel %vm343, %v581, 0.0
      %v677 = vadd.f32 %v675, %v676
      %v678 = vsel %vm343, %v582, 0.0
      %v679 = vadd.f32 %v677, %v678
      %v680 = vsel %vm343, %v583, 0.0
      %v681 = vadd.f32 %v679, %v680
      %v682 = vsel %vm343, %v584, 0.0
      %v683 = vadd.f32 %v681, %v682
      %v684 = vsel %vm343, %v585, 0.0
      %v685 = vadd.f32 %v683, %v684
      %v686 = vsel %vm343, %v586, 0.0
      %v687 = vadd.f32 %v685, %v686
      %v688 = vsel %vm343, %v587, 0.0
      %v689 = vadd.f32 %v687, %v688
      %v690 = vsel %vm343, %v588, 0.0
      %v691 = vadd.f32 %v689, %v690
      %v692 = vsel %vm343, %v589, 0.0
      %v693 = vadd.f32 %v691, %v692
      %v694 = vsel %vm343, %v590, 0.0
      %v695 = vadd.f32 %v693, %v694
      %v696 = vsel %vm343, %v591, 0.0
      %v697 = vadd.f32 %v695, %v696
      %v698 = vsel %vm343, %v592, 0.0
      %v699 = vadd.f32 %v697, %v698
      %v700 = vsel %vm343, %v593, 0.0
      %v701 = vadd.f32 %v699, %v700
      %v702 = vsel %vm343, %v594, 0.0
      %v703 = vadd.f32 %v701, %v702
      %v704 = vsel %vm343, %v595, 0.0
      %v705 = vadd.f32 %v703, %v704
      %v706 = vsel %vm343, %v596, 0.0
      %v707 = vadd.f32 %v705, %v706
      %v708 = vsel %vm343, %v597, 0.0
      %v709 = vadd.f32 %v707, %v708
      %v710 = vsel %vm343, %v598, 0.0
      %v711 = vadd.f32 %v709, %v710
      %v712 = vsel %vm343, %v599, 0.0
      %v713 = vadd.f32 %v711, %v712
      %v714 = vsel %vm343, %v600, 0.0
      %v715 = vadd.f32 %v713, %v714
      %v716 = vsel %vm343, %v601, 0.0
      %v717 = vadd.f32 %v715, %v716
      %v718 = vsel %vm343, %v602, 0.0
      %v719 = vadd.f32 %v717, %v718
      %v720 = vsel %vm343, %v603, 0.0
      %v721 = vadd.f32 %v719, %v720
      %v722 = vsel %vm343, %v604, 0.0
      %v723 = vadd.f32 %v721, %v722
      %v724 = vsel %vm343, %v605, 0.0
      %v725 = vadd.f32 %v723, %v724
      %v726 = vsel %vm343, %v606, 0.0
      %v727 = vadd.f32 %v725, %v726
      %v728 = vsel %vm343, %v607, 0.0
      %v729 = vadd.f32 %v727, %v728
      %v730 = vsel %vm343, %v608, 0.0
      %v731 = vadd.f32 %v729, %v730
      %v732 = vsel %vm343, %v609, 0.0
      %v733 = vadd.f32 %v731, %v732
      %v734 = vsel %vm343, %v610, 0.0
      %v735 = vadd.f32 %v733, %v734
      %v736 = vsel %vm343, %v611, 0.0
      %v737 = vadd.f32 %v735, %v736
      %v738 = vsel %vm343, %v612, 0.0
      %v739 = vadd.f32 %v737, %v738
      %v740 = vrot.slane %v739, 4
      %v741 = vadd.f32 %v739, %v740
      %v742 = vrot.slane %v741, 2
      %v743 = vadd.f32 %v741, %v742
      %v744 = vrot.slane %v743, 1
      %v745 = vadd.f32 %v743, %v744
      %v746 = vmul.f32 %v745, %v483
      %v747 = vld [vmem:[%s1] sm:$0x1]
      %v748 = vadd.f32 %v746, 1e-05
      %v749 = vrsqrt.pop %v748
      %v750 = vmul.f32 %v749, %v748
      %v751 = vmul.f32 %v750, %v749
      %v752 = vmul.f32 0.5, %v751
      %v753 = vsub.f32 1.5, %v752
      %v754 = vmul.f32 %v749, %v753
      %vm755 = vweird.f32 %v748
      %vm756 = vweird.f32 %v749
      %vm757 = vmor %vm755, %vm756
      %v758 = vsel %vm757, %v749, %v754
      %v759 = vmul.f32 %v747, %v758
      %v760 = vld [vmem:[%s2] sm:$0x1]
      %v761 = vmul.f32 %v484, %v759
      %v762 = vsub.f32 %v760, %v761
      %v764 = vperm.slane %v759, 0
      %765 = vrot.lane.b32.xlu0 %v764, 8
      %v766 = vpop.permute.xlu0 %765
      %768 = vrot.lane.b32.xlu0 %v764, 16
      %v769 = vpop.permute.xlu0 %768
      %771 = vrot.lane.b32.xlu0 %v764, 24
      %v772 = vpop.permute.xlu0 %771
      %774 = vrot.lane.b32.xlu0 %v764, 32
      %v775 = vpop.permute.xlu0 %774
      %777 = vrot.lane.b32.xlu0 %v764, 40
      %v778 = vpop.permute.xlu0 %777
      %780 = vrot.lane.b32.xlu0 %v764, 48
      %v781 = vpop.permute.xlu0 %780
      %783 = vrot.lane.b32.xlu0 %v764, 56
      %v784 = vpop.permute.xlu0 %783
      %786 = vrot.lane.b32.xlu0 %v764, 64
      %v787 = vpop.permute.xlu0 %786
      %789 = vrot.lane.b32.xlu0 %v764, 72
      %v790 = vpop.permute.xlu0 %789
      %792 = vrot.lane.b32.xlu0 %v764, 80
      %v793 = vpop.permute.xlu0 %792
      %795 = vrot.lane.b32.xlu0 %v764, 88
      %v796 = vpop.permute.xlu0 %795
      %798 = vrot.lane.b32.xlu0 %v764, 96
      %v799 = vpop.permute.xlu0 %798
      %801 = vrot.lane.b32.xlu0 %v764, 104
      %v802 = vpop.permute.xlu0 %801
      %804 = vrot.lane.b32.xlu0 %v764, 112
      %v805 = vpop.permute.xlu0 %804
      %807 = vrot.lane.b32.xlu0 %v764, 120
      %v808 = vpop.permute.xlu0 %807
      %v810 = vsel %vm343, %v759, %v766
      %vm811 = vcmask 130048
      %v812 = vsel %vm811, %v810, %v769
      %vm813 = vcmask 195584
      %v814 = vsel %vm813, %v812, %v772
      %vm815 = vcmask 261120
      %v816 = vsel %vm815, %v814, %v775
      %vm817 = vcmask 326656
      %v818 = vsel %vm817, %v816, %v778
      %vm819 = vcmask 392192
      %v820 = vsel %vm819, %v818, %v781
      %vm821 = vcmask 457728
      %v822 = vsel %vm821, %v820, %v784
      %vm823 = vcmask 523264
      %v824 = vsel %vm823, %v822, %v787
      %vm825 = vcmask 588800
      %v826 = vsel %vm825, %v824, %v790
      %vm827 = vcmask 654336
      %v828 = vsel %vm827, %v826, %v793
      %vm829 = vcmask 719872
      %v830 = vsel %vm829, %v828, %v796
      %vm831 = vcmask 785408
      %v832 = vsel %vm831, %v830, %v799
      %vm833 = vcmask 850944
      %v834 = vsel %vm833, %v832, %v802
      %vm835 = vcmask 916480
      %v836 = vsel %vm835, %v834, %v805
      %vm837 = vcmask 982016
      %v838 = vsel %vm837, %v836, %v808
      %v840 = vperm.slane %v762, 0
      %841 = vrot.lane.b32.xlu0 %v840, 8
      %v842 = vpop.permute.xlu0 %841
      %844 = vrot.lane.b32.xlu0 %v840, 16
      %v845 = vpop.permute.xlu0 %844
      %847 = vrot.lane.b32.xlu0 %v840, 24
      %v848 = vpop.permute.xlu0 %847
      %850 = vrot.lane.b32.xlu0 %v840, 32
      %v851 = vpop.permute.xlu0 %850
      %853 = vrot.lane.b32.xlu0 %v840, 40
      %v854 = vpop.permute.xlu0 %853
      %856 = vrot.lane.b32.xlu0 %v840, 48
      %v857 = vpop.permute.xlu0 %856
      %859 = vrot.lane.b32.xlu0 %v840, 56
      %v860 = vpop.permute.xlu0 %859
      %862 = vrot.lane.b32.xlu0 %v840, 64
      %v863 = vpop.permute.xlu0 %862
      %865 = vrot.lane.b32.xlu0 %v840, 72
      %v866 = vpop.permute.xlu0 %865
      %868 = vrot.lane.b32.xlu0 %v840, 80
      %v869 = vpop.permute.xlu0 %868
      %871 = vrot.lane.b32.xlu0 %v840, 88
      %v872 = vpop.permute.xlu0 %871
      %874 = vrot.lane.b32.xlu0 %v840, 96
      %v875 = vpop.permute.xlu0 %874
      %877 = vrot.lane.b32.xlu0 %v840, 104
      %v878 = vpop.permute.xlu0 %877
      %880 = vrot.lane.b32.xlu0 %v840, 112
      %v881 = vpop.permute.xlu0 %880
      %883 = vrot.lane.b32.xlu0 %v840, 120
      %v884 = vpop.permute.xlu0 %883
      %v886 = vsel %vm343, %v762, %v842
      %v887 = vsel %vm811, %v886, %v845
      %v888 = vsel %vm813, %v887, %v848
      %v889 = vsel %vm815, %v888, %v851
      %v890 = vsel %vm817, %v889, %v854
      %v891 = vsel %vm819, %v890, %v857
      %v892 = vsel %vm821, %v891, %v860
      %v893 = vsel %vm823, %v892, %v863
      %v894 = vsel %vm825, %v893, %v866
      %v895 = vsel %vm827, %v894, %v869
      %v896 = vsel %vm829, %v895, %v872
      %v897 = vsel %vm831, %v896, %v875
      %v898 = vsel %vm833, %v897, %v878
      %v899 = vsel %vm835, %v898, %v881
      %v900 = vsel %vm837, %v899, %v884
      %901 = vst [vmem:[#allocation2] sm:$0xff] 0.0
      %902 = vst.msk [vmem:[#allocation2 + $0x8] sm:$0xff] %vm811, 0.0
      %903 = vst [vmem:[#allocation2 + $0x10] sm:$0xff] 0.0
      %904 = vst.msk [vmem:[#allocation2 + $0x18] sm:$0xff] %vm811, 0.0
      %905 = vst [vmem:[#allocation2 + $0x20] sm:$0x3] 0.0
      %vm906 = vcmask 123904
      %907 = vst.msk [vmem:[#allocation2 + $0x28] sm:$0x3] %vm906, 0.0
      %908 = vst [vmem:[#allocation2 + $0x30] sm:$0xff] 0.0
      %909 = vst.msk [vmem:[#allocation2 + $0x38] sm:$0xff] %vm811, 0.0
      %910 = vst [vmem:[#allocation2 + $0x40] sm:$0xff] 0.0
      %911 = vst.msk [vmem:[#allocation2 + $0x48] sm:$0xff] %vm811, 0.0
      %912 = vst [vmem:[#allocation2 + $0x50] sm:$0x3] 0.0
      %913 = vst.msk [vmem:[#allocation2 + $0x58] sm:$0x3] %vm906, 0.0
      %914 = vst [vmem:[#allocation2 + $0x60] sm:$0xff] 0.0
      %915 = vst.msk [vmem:[#allocation2 + $0x68] sm:$0xff] %vm811, 0.0
      %916 = vst [vmem:[#allocation2 + $0x70] sm:$0xff] 0.0
      %917 = vst.msk [vmem:[#allocation2 + $0x78] sm:$0xff] %vm811, 0.0
      %918 = vst [vmem:[#allocation2 + $0x80] sm:$0x3] 0.0
      %919 = vst.msk [vmem:[#allocation2 + $0x88] sm:$0x3] %vm906, 0.0
      %920 = vst [vmem:[#allocation2 + $0x90] sm:$0xff] 0.0
      %921 = vst.msk [vmem:[#allocation2 + $0x98] sm:$0xff] %vm811, 0.0
      %922 = vst [vmem:[#allocation2 + $0xa0] sm:$0xff] 0.0
      %923 = vst.msk [vmem:[#allocation2 + $0xa8] sm:$0xff] %vm811, 0.0
      %924 = vst [vmem:[#allocation2 + $0xb0] sm:$0x3] 0.0
      %925 = vst.msk [vmem:[#allocation2 + $0xb8] sm:$0x3] %vm906, 0.0
      %926 = vst [vmem:[#allocation2 + $0xc0] sm:$0xff] 0.0
      %927 = vst.msk [vmem:[#allocation2 + $0xc8] sm:$0xff] %vm811, 0.0
      %928 = vst [vmem:[#allocation2 + $0xd0] sm:$0xff] 0.0
      %929 = vst.msk [vmem:[#allocation2 + $0xd8] sm:$0xff] %vm811, 0.0
      %930 = vst [vmem:[#allocation2 + $0xe0] sm:$0x3] 0.0
      %931 = vst.msk [vmem:[#allocation2 + $0xe8] sm:$0x3] %vm906, 0.0
      %v932 = vld [vmem:[%s273] sm:$0xff]
      %v933 = vld [vmem:[%s273 + $0x8] sm:$0xff]
      %v934 = vperm.slane %v838, 0
      %v935 = vmul.f32 %v932, %v934
      %v936 = vmul.f32 %v933, %v934
      %v937 = vperm.slane %v900, 0
      %v938 = vadd.f32 %v935, %v937
      %v939 = vadd.f32 %v936, %v937
      %vm942 = vcmask 1040384
      %v943 = vrot.slane %v938, 7
      %v944 = vrot.slane %v939, 7
      %v945 = vsel %vm942, %v943, %v944
      %946 = vrot.lane.b32.xlu0 %v943, 8
      %v947 = vpop.permute.xlu0 %946
      %948 = vrot.lane.b32.xlu0 %v945, 8
      %v949 = vpop.permute.xlu0 %948
      %950 = vrot.lane.b32.xlu0 %v944, 8
      %v951 = vpop.permute.xlu0 %950
      %vm955 = vcmask 1047617
      %956 = vst.msk [vmem:[#allocation2] sm:$0xfe] %vm955, %v947
      %vm957 = vcmask 64513
      %958 = vst.msk [vmem:[#allocation2 + $0x8] sm:$0xfe] %vm957, %v947
      %vm959 = vcmask 1047616
      %960 = vst.msk [vmem:[#allocation2 + $0x10] sm:$0xff] %vm959, %v949
      %961 = vst.msk [vmem:[#allocation2 + $0x18] sm:$0xff] %vm343, %v949
      %vm962 = vcmask 1040448
      %963 = vst.msk [vmem:[#allocation2 + $0x20] sm:$0x1] %vm962, %v951
      %vm964 = vcmask 57344
      %965 = vst.msk [vmem:[#allocation2 + $0x28] sm:$0x1] %vm964, %v951
      %v966 = vld [vmem:[#allocation2] sm:$0xff]
      %v967 = vld [vmem:[#allocation2 + $0x8] sm:$0xff]
      %v968 = vld [vmem:[#allocation2 + $0x10] sm:$0xff]
      %v969 = vld [vmem:[#allocation2 + $0x18] sm:$0xff]
      %v970 = vld [vmem:[#allocation2 + $0x20] sm:$0x3]
      %v971 = vld [vmem:[#allocation2 + $0x28] sm:$0x3]
      %v972 = vld [vmem:[%s4] sm:$0xff]
      %v973 = vld [vmem:[%s4 + $0x58] sm:$0xff]
      %v974 = vld [vmem:[%s4 + $0xb0] sm:$0xff]
      %v975 = vld [vmem:[%s4 + $0x108] sm:$0xff]
      %v976 = vld [vmem:[%s4 + $0x160] sm:$0xff]
      %v977 = vld [vmem:[%s4 + $0x1b8] sm:$0xff]
      %v978 = vld [vmem:[%s4 + $0x210] sm:$0xff]
      %v979 = vld [vmem:[%s4 + $0x268] sm:$0xff]
      %v980 = vld [vmem:[%s4 + $0x2c0] sm:$0xff]
      %v981 = vld [vmem:[%s4 + $0x318] sm:$0xff]
      %v982 = vld [vmem:[%s4 + $0x370] sm:$0xff]
      %v983 = vld [vmem:[%s4 + $0x3c8] sm:$0xff]
      %v984 = vld [vmem:[%s4 + $0x420] sm:$0xff]
      %v985 = vld [vmem:[%s4 + $0x478] sm:$0xff]
      %v986 = vld [vmem:[%s4 + $0x4d0] sm:$0xff]
      %v987 = vld [vmem:[%s4 + $0x528] sm:$0xff]
      %v988 = vld [vmem:[%s4 + $0x580] sm:$0xff]
      %v989 = vld [vmem:[%s4 + $0x5d8] sm:$0xff]
      %s990 = scalar_lea.vmem %s4, 1584
      %v991 = vld [vmem:[%s990] sm:$0xff]
      %v992 = vld [vmem:[%s990 + $0x58] sm:$0xff]
      %v993 = vld [vmem:[%s990 + $0xb0] sm:$0xff]
      %v994 = vld [vmem:[%s990 + $0x108] sm:$0xff]
      %v995 = vld [vmem:[%s990 + $0x160] sm:$0xff]
      %v996 = vld [vmem:[%s990 + $0x1b8] sm:$0xff]
      %v997 = vld [vmem:[%s990 + $0x210] sm:$0xff]
      %v998 = vld [vmem:[%s990 + $0x268] sm:$0xff]
      %v999 = vld [vmem:[%s990 + $0x2c0] sm:$0xff]
      %v1000 = vld [vmem:[%s990 + $0x318] sm:$0xff]
      %v1001 = vld [vmem:[%s990 + $0x370] sm:$0xff]
      %v1002 = vld [vmem:[%s990 + $0x3c8] sm:$0xff]
      %v1003 = vld [vmem:[%s990 + $0x420] sm:$0xff]
      %v1004 = vld [vmem:[%s990 + $0x478] sm:$0xff]
      %v1005 = vld [vmem:[%s990 + $0x4d0] sm:$0xff]
      %v1006 = vld [vmem:[%s990 + $0x528] sm:$0xff]
      %v1007 = vld [vmem:[%s990 + $0x580] sm:$0xff]
      %v1008 = vld [vmem:[%s990 + $0x5d8] sm:$0xff]
      %vm1015 = vcmask 1046528
      %v1016 = vrot.slane %v966, 1
      %v1017 = vrot.slane %v968, 1
      %v1018 = vsel %vm1015, %v1016, %v1017
      %v1019 = vrot.slane %v967, 1
      %v1020 = vrot.slane %v969, 1
      %v1021 = vsel %vm1015, %v1019, %v1020
      %v1022 = vrot.slane %v970, 1
      %v1023 = vsel %vm1015, %v1017, %v1022
      %v1024 = vrot.slane %v971, 1
      %v1025 = vsel %vm1015, %v1020, %v1024
      %v1028 = vsel %vm811, %v1021, 0
      %v1030 = vsel %vm811, %v1025, 0
      %1032 = vmatpush.msra.mxu0 %v1006
      %1033 = vmatpush.msra.mxu0 %v1005
      %1034 = vmatpush.msra.mxu0 %v1004
      %1035 = vmatpush.msra.mxu0 %v1003
      %1036 = vmatpush.msra.mxu0 %v1002
      %1037 = vmatpush.msra.mxu0 %v1001
      %1038 = vmatpush.msra.mxu0 %v1000
      %1039 = vmatpush.msra.mxu0 %v999
      %1040 = vmatpush.msra.mxu0 %v998
      %1041 = vmatpush.msra.mxu0 %v997
      %1042 = vmatpush.msra.mxu0 %v996
      %1043 = vmatpush.msra.mxu0 %v995
      %1044 = vmatpush.msra.mxu0 %v994
      %1045 = vmatpush.msra.mxu0 %v993
      %1046 = vmatpush.msra.mxu0 %v992
      %1047 = vmatpush.msra.mxu0 %v991
      %1048 = vmatmul.f32.gmra.mxu0 %v1018
      %v1049 = vpop.f32.mrf.mxu0
      %v1050 = vadd.f32 0.0, %v1049
      %1051 = vmatmul.f32.gmra.mxu0 %v1023
      %v1052 = vpop.f32.mrf.mxu0
      %v1053 = vadd.f32 0.0, %v1052
      %1054 = vdwg.mxu0
      %1055 = vmatpush.msra.mxu0 0.0
      %1056 = vmatpush.msra.mxu0 0.0
      %1057 = vmatpush.msra.mxu0 0.0
      %1058 = vmatpush.msra.mxu0 0.0
      %1059 = vmatpush.msra.mxu0 0.0
      %1060 = vmatpush.msra.mxu0 0.0
      %1061 = vmatpush.msra.mxu0 0.0
      %1062 = vmatpush.msra.mxu0 0.0
      %1063 = vmatpush.msra.mxu0 0.0
      %1064 = vmatpush.msra.mxu0 0.0
      %1065 = vmatpush.msra.mxu0 0.0
      %1066 = vmatpush.msra.mxu0 0.0
      %1067 = vmatpush.msra.mxu0 0.0
      %1068 = vmatpush.msra.mxu0 0.0
      %1069 = vmatpush.msra.mxu0 %v1008
      %1070 = vmatpush.msra.mxu0 %v1007
      %1071 = vmatmul.f32.gmra.mxu0 %v1028
      %v1072 = vpop.f32.mrf.mxu0
      %v1073 = vadd.f32 %v1050, %v1072
      %1074 = vmatmul.f32.gmra.mxu0 %v1030
      %v1075 = vpop.f32.mrf.mxu0
      %v1076 = vadd.f32 %v1053, %v1075
      %1077 = vdwg.mxu0
      %v1078 = vsel %vm811, %v967, 0
      %v1080 = vsel %vm811, %v969, 0
      %1082 = vmatpush.msra.mxu0 %v987
      %1083 = vmatpush.msra.mxu0 %v986
      %1084 = vmatpush.msra.mxu0 %v985
      %1085 = vmatpush.msra.mxu0 %v984
      %1086 = vmatpush.msra.mxu0 %v983
      %1087 = vmatpush.msra.mxu0 %v982
      %1088 = vmatpush.msra.mxu0 %v981
      %1089 = vmatpush.msra.mxu0 %v980
      %1090 = vmatpush.msra.mxu0 %v979
      %1091 = vmatpush.msra.mxu0 %v978
      %1092 = vmatpush.msra.mxu0 %v977
      %1093 = vmatpush.msra.mxu0 %v976
      %1094 = vmatpush.msra.mxu0 %v975
      %1095 = vmatpush.msra.mxu0 %v974
      %1096 = vmatpush.msra.mxu0 %v973
      %1097 = vmatpush.msra.mxu0 %v972
      %1098 = vmatmul.f32.gmra.mxu0 %v966
      %v1099 = vpop.f32.mrf.mxu0
      %v1100 = vadd.f32 %v1073, %v1099
      %1101 = vmatmul.f32.gmra.mxu0 %v968
      %v1102 = vpop.f32.mrf.mxu0
      %v1103 = vadd.f32 %v1076, %v1102
      %1104 = vdwg.mxu0
      %1105 = vmatpush.msra.mxu0 0.0
      %1106 = vmatpush.msra.mxu0 0.0
      %1107 = vmatpush.msra.mxu0 0.0
      %1108 = vmatpush.msra.mxu0 0.0
      %1109 = vmatpush.msra.mxu0 0.0
      %1110 = vmatpush.msra.mxu0 0.0
      %1111 = vmatpush.msra.mxu0 0.0
      %1112 = vmatpush.msra.mxu0 0.0
      %1113 = vmatpush.msra.mxu0 0.0
      %1114 = vmatpush.msra.mxu0 0.0
      %1115 = vmatpush.msra.mxu0 0.0
      %1116 = vmatpush.msra.mxu0 0.0
      %1117 = vmatpush.msra.mxu0 0.0
      %1118 = vmatpush.msra.mxu0 0.0
      %1119 = vmatpush.msra.mxu0 %v989
      %1120 = vmatpush.msra.mxu0 %v988
      %1121 = vmatmul.f32.gmra.mxu0 %v1078
      %v1122 = vpop.f32.mrf.mxu0
      %v1123 = vadd.f32 %v1100, %v1122
      %1124 = vmatmul.f32.gmra.mxu0 %v1080
      %v1125 = vpop.f32.mrf.mxu0
      %v1126 = vadd.f32 %v1103, %v1125
      %1127 = vdwg.mxu0
      %s1128 = scalar_lea.vmem %s4, 3168
      %v1129 = vld [vmem:[%s1128] sm:$0xff]
      %v1130 = vld [vmem:[%s1128 + $0x58] sm:$0xff]
      %v1131 = vld [vmem:[%s1128 + $0xb0] sm:$0xff]
      %v1132 = vld [vmem:[%s1128 + $0x108] sm:$0xff]
      %v1133 = vld [vmem:[%s1128 + $0x160] sm:$0xff]
      %v1134 = vld [vmem:[%s1128 + $0x1b8] sm:$0xff]
      %v1135 = vld [vmem:[%s1128 + $0x210] sm:$0xff]
      %v1136 = vld [vmem:[%s1128 + $0x268] sm:$0xff]
      %v1137 = vld [vmem:[%s1128 + $0x2c0] sm:$0xff]
      %v1138 = vld [vmem:[%s1128 + $0x318] sm:$0xff]
      %v1139 = vld [vmem:[%s1128 + $0x370] sm:$0xff]
      %v1140 = vld [vmem:[%s1128 + $0x3c8] sm:$0xff]
      %v1141 = vld [vmem:[%s1128 + $0x420] sm:$0xff]
      %v1142 = vld [vmem:[%s1128 + $0x478] sm:$0xff]
      %v1143 = vld [vmem:[%s1128 + $0x4d0] sm:$0xff]
      %v1144 = vld [vmem:[%s1128 + $0x528] sm:$0xff]
      %v1145 = vld [vmem:[%s1128 + $0x580] sm:$0xff]
      %v1146 = vld [vmem:[%s1128 + $0x5d8] sm:$0xff]
      %vm1147 = vcmask 1045504
      %v1148 = vrot.slane %v966, 2
      %v1149 = vrot.slane %v968, 2
      %v1150 = vsel %vm1147, %v1148, %v1149
      %v1151 = vrot.slane %v967, 2
      %v1152 = vrot.slane %v969, 2
      %v1153 = vsel %vm1147, %v1151, %v1152
      %v1154 = vrot.slane %v970, 2
      %v1155 = vsel %vm1147, %v1149, %v1154
      %v1156 = vrot.slane %v971, 2
      %v1157 = vsel %vm1147, %v1152, %v1156
      %v1160 = vsel %vm811, %v1153, 0
      %v1162 = vsel %vm811, %v1157, 0
      %1164 = vmatpush.msra.mxu0 %v1144
      %1165 = vmatpush.msra.mxu0 %v1143
      %1166 = vmatpush.msra.mxu0 %v1142
      %1167 = vmatpush.msra.mxu0 %v1141
      %1168 = vmatpush.msra.mxu0 %v1140
      %1169 = vmatpush.msra.mxu0 %v1139
      %1170 = vmatpush.msra.mxu0 %v1138
      %1171 = vmatpush.msra.mxu0 %v1137
      %1172 = vmatpush.msra.mxu0 %v1136
      %1173 = vmatpush.msra.mxu0 %v1135
      %1174 = vmatpush.msra.mxu0 %v1134
      %1175 = vmatpush.msra.mxu0 %v1133
      %1176 = vmatpush.msra.mxu0 %v1132
      %1177 = vmatpush.msra.mxu0 %v1131
      %1178 = vmatpush.msra.mxu0 %v1130
      %1179 = vmatpush.msra.mxu0 %v1129
      %1180 = vmatmul.f32.gmra.mxu0 %v1150
      %v1181 = vpop.f32.mrf.mxu0
      %v1182 = vadd.f32 0.0, %v1181
      %1183 = vmatmul.f32.gmra.mxu0 %v1155
      %v1184 = vpop.f32.mrf.mxu0
      %v1185 = vadd.f32 0.0, %v1184
      %1186 = vdwg.mxu0
      %1187 = vmatpush.msra.mxu0 0.0
      %1188 = vmatpush.msra.mxu0 0.0
      %1189 = vmatpush.msra.mxu0 0.0
      %1190 = vmatpush.msra.mxu0 0.0
      %1191 = vmatpush.msra.mxu0 0.0
      %1192 = vmatpush.msra.mxu0 0.0
      %1193 = vmatpush.msra.mxu0 0.0
      %1194 = vmatpush.msra.mxu0 0.0
      %1195 = vmatpush.msra.mxu0 0.0
      %1196 = vmatpush.msra.mxu0 0.0
      %1197 = vmatpush.msra.mxu0 0.0
      %1198 = vmatpush.msra.mxu0 0.0
      %1199 = vmatpush.msra.mxu0 0.0
      %1200 = vmatpush.msra.mxu0 0.0
      %1201 = vmatpush.msra.mxu0 %v1146
      %1202 = vmatpush.msra.mxu0 %v1145
      %1203 = vmatmul.f32.gmra.mxu0 %v1160
      %v1204 = vpop.f32.mrf.mxu0
      %v1205 = vadd.f32 %v1182, %v1204
      %1206 = vmatmul.f32.gmra.mxu0 %v1162
      %v1207 = vpop.f32.mrf.mxu0
      %v1208 = vadd.f32 %v1185, %v1207
      %1209 = vdwg.mxu0
      %v1210 = vadd.f32 %v1123, %v1205
      %v1211 = vadd.f32 %v1126, %v1208
      %v1212 = vld [vmem:[%s6] sm:$0x1]
      %v1213 = vperm.slane %v1212, 0
      %v1214 = vadd.f32 %v1210, %v1213
      %v1215 = vadd.f32 %v1211, %v1213
      %v1216 = vmax.f32 %v1214, 0.0
      %v1217 = vmax.f32 %v1215, 0.0
      %v1220 = vrot.slane %v1216, 7
      %v1221 = vrot.slane %v1217, 7
      %v1222 = vsel %vm942, %v1220, %v1221
      %1223 = vrot.lane.b32.xlu0 %v1220, 8
      %v1224 = vpop.permute.xlu0 %1223
      %1225 = vrot.lane.b32.xlu0 %v1222, 8
      %v1226 = vpop.permute.xlu0 %1225
      %1227 = vrot.lane.b32.xlu0 %v1221, 8
      %v1228 = vpop.permute.xlu0 %1227
      %s1232 = scalar_lea.vmem [#allocation2], 48
      %1233 = vst.msk [vmem:[%s1232] sm:$0xfe] %vm955, %v1224
      %1234 = vst.msk [vmem:[%s1232 + $0x8] sm:$0xfe] %vm957, %v1224
      %1235 = vst.msk [vmem:[%s1232 + $0x10] sm:$0xff] %vm959, %v1226
      %1236 = vst.msk [vmem:[%s1232 + $0x18] sm:$0xff] %vm343, %v1226
      %1237 = vst.msk [vmem:[%s1232 + $0x20] sm:$0x1] %vm962, %v1228
      %1238 = vst.msk [vmem:[%s1232 + $0x28] sm:$0x1] %vm964, %v1228
      %v1239 = vld [vmem:[%s1232] sm:$0xff]
      %v1240 = vld [vmem:[%s1232 + $0x8] sm:$0xff]
      %v1241 = vld [vmem:[%s1232 + $0x10] sm:$0xff]
      %v1242 = vld [vmem:[%s1232 + $0x18] sm:$0xff]
      %v1243 = vld [vmem:[%s1232 + $0x20] sm:$0x3]
      %v1244 = vld [vmem:[%s1232 + $0x28] sm:$0x3]
      %v1245 = vld [vmem:[%s4 + $0x8] sm:$0xff]
      %v1246 = vld [vmem:[%s4 + $0x10] sm:$0xff]
      %v1247 = vld [vmem:[%s4 + $0x18] sm:$0xff]
      %v1248 = vld [vmem:[%s4 + $0x20] sm:$0xff]
      %v1249 = vld [vmem:[%s4 + $0x60] sm:$0xff]
      %v1250 = vld [vmem:[%s4 + $0x68] sm:$0xff]
      %v1251 = vld [vmem:[%s4 + $0x70] sm:$0xff]
      %v1252 = vld [vmem:[%s4 + $0x78] sm:$0xff]
      %v1253 = vld [vmem:[%s4 + $0xb8] sm:$0xff]
      %v1254 = vld [vmem:[%s4 + $0xc0] sm:$0xff]
      %v1255 = vld [vmem:[%s4 + $0xc8] sm:$0xff]
      %v1256 = vld [vmem:[%s4 + $0xd0] sm:$0xff]
      %v1257 = vld [vmem:[%s4 + $0x110] sm:$0xff]
      %v1258 = vld [vmem:[%s4 + $0x118] sm:$0xff]
      %v1259 = vld [vmem:[%s4 + $0x120] sm:$0xff]
      %v1260 = vld [vmem:[%s4 + $0x128] sm:$0xff]
      %v1261 = vld [vmem:[%s4 + $0x168] sm:$0xff]
      %v1262 = vld [vmem:[%s4 + $0x170] sm:$0xff]
      %v1263 = vld [vmem:[%s4 + $0x178] sm:$0xff]
      %v1264 = vld [vmem:[%s4 + $0x180] sm:$0xff]
      %v1265 = vld [vmem:[%s4 + $0x1c0] sm:$0xff]
      %v1266 = vld [vmem:[%s4 + $0x1c8] sm:$0xff]
      %v1267 = vld [vmem:[%s4 + $0x1d0] sm:$0xff]
      %v1268 = vld [vmem:[%s4 + $0x1d8] sm:$0xff]
      %v1269 = vld [vmem:[%s4 + $0x218] sm:$0xff]
      %v1270 = vld [vmem:[%s4 + $0x220] sm:$0xff]
      %v1271 = vld [vmem:[%s4 + $0x228] sm:$0xff]
      %v1272 = vld [vmem:[%s4 + $0x230] sm:$0xff]
      %v1273 = vld [vmem:[%s4 + $0x270] sm:$0xff]
      %v1274 = vld [vmem:[%s4 + $0x278] sm:$0xff]
      %v1275 = vld [vmem:[%s4 + $0x280] sm:$0xff]
      %v1276 = vld [vmem:[%s4 + $0x288] sm:$0xff]
      %v1277 = vld [vmem:[%s4 + $0x2c8] sm:$0xff]
      %v1278 = vld [vmem:[%s4 + $0x2d0] sm:$0xff]
      %v1279 = vld [vmem:[%s4 + $0x2d8] sm:$0xff]
      %v1280 = vld [vmem:[%s4 + $0x2e0] sm:$0xff]
      %v1281 = vld [vmem:[%s4 + $0x320] sm:$0xff]
      %v1282 = vld [vmem:[%s4 + $0x328] sm:$0xff]
      %v1283 = vld [vmem:[%s4 + $0x330] sm:$0xff]
      %v1284 = vld [vmem:[%s4 + $0x338] sm:$0xff]
      %v1285 = vld [vmem:[%s4 + $0x378] sm:$0xff]
      %v1286 = vld [vmem:[%s4 + $0x380] sm:$0xff]
      %v1287 = vld [vmem:[%s4 + $0x388] sm:$0xff]
      %v1288 = vld [vmem:[%s4 + $0x390] sm:$0xff]
      %v1289 = vld [vmem:[%s4 + $0x3d0] sm:$0xff]
      %v1290 = vld [vmem:[%s4 + $0x3d8] sm:$0xff]
      %v1291 = vld [vmem:[%s4 + $0x3e0] sm:$0xff]
      %v1292 = vld [vmem:[%s4 + $0x3e8] sm:$0xff]
      %v1293 = vld [vmem:[%s4 + $0x428] sm:$0xff]
      %v1294 = vld [vmem:[%s4 + $0x430] sm:$0xff]
      %v1295 = vld [vmem:[%s4 + $0x438] sm:$0xff]
      %v1296 = vld [vmem:[%s4 + $0x440] sm:$0xff]
      %v1297 = vld [vmem:[%s4 + $0x480] sm:$0xff]
      %v1298 = vld [vmem:[%s4 + $0x488] sm:$0xff]
      %v1299 = vld [vmem:[%s4 + $0x490] sm:$0xff]
      %v1300 = vld [vmem:[%s4 + $0x498] sm:$0xff]
      %v1301 = vld [vmem:[%s4 + $0x4d8] sm:$0xff]
      %v1302 = vld [vmem:[%s4 + $0x4e0] sm:$0xff]
      %v1303 = vld [vmem:[%s4 + $0x4e8] sm:$0xff]
      %v1304 = vld [vmem:[%s4 + $0x4f0] sm:$0xff]
      %v1305 = vld [vmem:[%s4 + $0x530] sm:$0xff]
      %v1306 = vld [vmem:[%s4 + $0x538] sm:$0xff]
      %v1307 = vld [vmem:[%s4 + $0x540] sm:$0xff]
      %v1308 = vld [vmem:[%s4 + $0x548] sm:$0xff]
      %v1309 = vld [vmem:[%s4 + $0x588] sm:$0xff]
      %v1310 = vld [vmem:[%s4 + $0x590] sm:$0xff]
      %v1311 = vld [vmem:[%s4 + $0x598] sm:$0xff]
      %v1312 = vld [vmem:[%s4 + $0x5a0] sm:$0xff]
      %v1313 = vld [vmem:[%s4 + $0x5e0] sm:$0xff]
      %v1314 = vld [vmem:[%s4 + $0x5e8] sm:$0xff]
      %v1315 = vld [vmem:[%s4 + $0x5f0] sm:$0xff]
      %v1316 = vld [vmem:[%s4 + $0x5f8] sm:$0xff]
      %v1317 = vld [vmem:[%s990 + $0x8] sm:$0xff]
      %v1318 = vld [vmem:[%s990 + $0x10] sm:$0xff]
      %v1319 = vld [vmem:[%s990 + $0x18] sm:$0xff]
      %v1320 = vld [vmem:[%s990 + $0x20] sm:$0xff]
      %v1321 = vld [vmem:[%s990 + $0x60] sm:$0xff]
      %v1322 = vld [vmem:[%s990 + $0x68] sm:$0xff]
      %v1323 = vld [vmem:[%s990 + $0x70] sm:$0xff]
      %v1324 = vld [vmem:[%s990 + $0x78] sm:$0xff]
      %v1325 = vld [vmem:[%s990 + $0xb8] sm:$0xff]
      %v1326 = vld [vmem:[%s990 + $0xc0] sm:$0xff]
      %v1327 = vld [vmem:[%s990 + $0xc8] sm:$0xff]
      %v1328 = vld [vmem:[%s990 + $0xd0] sm:$0xff]
      %v1329 = vld [vmem:[%s990 + $0x110] sm:$0xff]
      %v1330 = vld [vmem:[%s990 + $0x118] sm:$0xff]
      %v1331 = vld [vmem:[%s990 + $0x120] sm:$0xff]
      %v1332 = vld [vmem:[%s990 + $0x128] sm:$0xff]
      %v1333 = vld [vmem:[%s990 + $0x168] sm:$0xff]
      %v1334 = vld [vmem:[%s990 + $0x170] sm:$0xff]
      %v1335 = vld [vmem:[%s990 + $0x178] sm:$0xff]
      %v1336 = vld [vmem:[%s990 + $0x180] sm:$0xff]
      %v1337 = vld [vmem:[%s990 + $0x1c0] sm:$0xff]
      %v1338 = vld [vmem:[%s990 + $0x1c8] sm:$0xff]
      %v1339 = vld [vmem:[%s990 + $0x1d0] sm:$0xff]
      %v1340 = vld [vmem:[%s990 + $0x1d8] sm:$0xff]
      %v1341 = vld [vmem:[%s990 + $0x218] sm:$0xff]
      %v1342 = vld [vmem:[%s990 + $0x220] sm:$0xff]
      %v1343 = vld [vmem:[%s990 + $0x228] sm:$0xff]
      %v1344 = vld [vmem:[%s990 + $0x230] sm:$0xff]
      %v1345 = vld [vmem:[%s990 + $0x270] sm:$0xff]
      %v1346 = vld [vmem:[%s990 + $0x278] sm:$0xff]
      %v1347 = vld [vmem:[%s990 + $0x280] sm:$0xff]
      %v1348 = vld [vmem:[%s990 + $0x288] sm:$0xff]
      %v1349 = vld [vmem:[%s990 + $0x2c8] sm:$0xff]
      %v1350 = vld [vmem:[%s990 + $0x2d0] sm:$0xff]
      %v1351 = vld [vmem:[%s990 + $0x2d8] sm:$0xff]
      %v1352 = vld [vmem:[%s990 + $0x2e0] sm:$0xff]
      %v1353 = vld [vmem:[%s990 + $0x320] sm:$0xff]
      %v1354 = vld [vmem:[%s990 + $0x328] sm:$0xff]
      %v1355 = vld [vmem:[%s990 + $0x330] sm:$0xff]
      %v1356 = vld [vmem:[%s990 + $0x338] sm:$0xff]
      %v1357 = vld [vmem:[%s990 + $0x378] sm:$0xff]
      %v1358 = vld [vmem:[%s990 + $0x380] sm:$0xff]
      %v1359 = vld [vmem:[%s990 + $0x388] sm:$0xff]
      %v1360 = vld [vmem:[%s990 + $0x390] sm:$0xff]
      %v1361 = vld [vmem:[%s990 + $0x3d0] sm:$0xff]
      %v1362 = vld [vmem:[%s990 + $0x3d8] sm:$0xff]
      %v1363 = vld [vmem:[%s990 + $0x3e0] sm:$0xff]
      %v1364 = vld [vmem:[%s990 + $0x3e8] sm:$0xff]
      %v1365 = vld [vmem:[%s990 + $0x428] sm:$0xff]
      %v1366 = vld [vmem:[%s990 + $0x430] sm:$0xff]
      %v1367 = vld [vmem:[%s990 + $0x438] sm:$0xff]
      %v1368 = vld [vmem:[%s990 + $0x440] sm:$0xff]
      %v1369 = vld [vmem:[%s990 + $0x480] sm:$0xff]
      %v1370 = vld [vmem:[%s990 + $0x488] sm:$0xff]
      %v1371 = vld [vmem:[%s990 + $0x490] sm:$0xff]
      %v1372 = vld [vmem:[%s990 + $0x498] sm:$0xff]
      %v1373 = vld [vmem:[%s990 + $0x4d8] sm:$0xff]
      %v1374 = vld [vmem:[%s990 + $0x4e0] sm:$0xff]
      %v1375 = vld [vmem:[%s990 + $0x4e8] sm:$0xff]
      %v1376 = vld [vmem:[%s990 + $0x4f0] sm:$0xff]
      %v1377 = vld [vmem:[%s990 + $0x530] sm:$0xff]
      %v1378 = vld [vmem:[%s990 + $0x538] sm:$0xff]
      %v1379 = vld [vmem:[%s990 + $0x540] sm:$0xff]
      %v1380 = vld [vmem:[%s990 + $0x548] sm:$0xff]
      %v1381 = vld [vmem:[%s990 + $0x588] sm:$0xff]
      %v1382 = vld [vmem:[%s990 + $0x590] sm:$0xff]
      %v1383 = vld [vmem:[%s990 + $0x598] sm:$0xff]
      %v1384 = vld [vmem:[%s990 + $0x5a0] sm:$0xff]
      %v1385 = vld [vmem:[%s990 + $0x5e0] sm:$0xff]
      %v1386 = vld [vmem:[%s990 + $0x5e8] sm:$0xff]
      %v1387 = vld [vmem:[%s990 + $0x5f0] sm:$0xff]
      %v1388 = vld [vmem:[%s990 + $0x5f8] sm:$0xff]
      %v1395 = vrot.slane %v1239, 1
      %v1396 = vrot.slane %v1241, 1
      %v1397 = vsel %vm1015, %v1395, %v1396
      %v1398 = vrot.slane %v1240, 1
      %v1399 = vrot.slane %v1242, 1
      %v1400 = vsel %vm1015, %v1398, %v1399
      %v1401 = vrot.slane %v1243, 1
      %v1402 = vsel %vm1015, %v1396, %v1401
      %v1403 = vrot.slane %v1244, 1
      %v1404 = vsel %vm1015, %v1399, %v1403
      %v1407 = vsel %vm811, %v1400, 0
      %v1409 = vsel %vm811, %v1404, 0
      %1411 = vmatpush.msra.mxu0 %v1377
      %1412 = vmatpush.msra.mxu0 %v1373
      %1413 = vmatpush.msra.mxu0 %v1369
      %1414 = vmatpush.msra.mxu0 %v1365
      %1415 = vmatpush.msra.mxu0 %v1361
      %1416 = vmatpush.msra.mxu0 %v1357
      %1417 = vmatpush.msra.mxu0 %v1353
      %1418 = vmatpush.msra.mxu0 %v1349
      %1419 = vmatpush.msra.mxu0 %v1345
      %1420 = vmatpush.msra.mxu0 %v1341
      %1421 = vmatpush.msra.mxu0 %v1337
      %1422 = vmatpush.msra.mxu0 %v1333
      %1423 = vmatpush.msra.mxu0 %v1329
      %1424 = vmatpush.msra.mxu0 %v1325
      %1425 = vmatpush.msra.mxu0 %v1321
      %1426 = vmatpush.msra.mxu0 %v1317
      %1427 = vmatmul.f32.gmra.mxu0 %v1397
      %v1428 = vpop.f32.mrf.mxu0
      %v1429 = vadd.f32 0.0, %v1428
      %1430 = vmatmul.f32.gmra.mxu0 %v1402
      %v1431 = vpop.f32.mrf.mxu0
      %v1432 = vadd.f32 0.0, %v1431
      %1433 = vdwg.mxu0
      %1434 = vmatpush.msra.mxu0 0.0
      %1435 = vmatpush.msra.mxu0 0.0
      %1436 = vmatpush.msra.mxu0 0.0
      %1437 = vmatpush.msra.mxu0 0.0
      %1438 = vmatpush.msra.mxu0 0.0
      %1439 = vmatpush.msra.mxu0 0.0
      %1440 = vmatpush.msra.mxu0 0.0
      %1441 = vmatpush.msra.mxu0 0.0
      %1442 = vmatpush.msra.mxu0 0.0
      %1443 = vmatpush.msra.mxu0 0.0
      %1444 = vmatpush.msra.mxu0 0.0
      %1445 = vmatpush.msra.mxu0 0.0
      %1446 = vmatpush.msra.mxu0 0.0
      %1447 = vmatpush.msra.mxu0 0.0
      %1448 = vmatpush.msra.mxu0 %v1385
      %1449 = vmatpush.msra.mxu0 %v1381
      %1450 = vmatmul.f32.gmra.mxu0 %v1407
      %v1451 = vpop.f32.mrf.mxu0
      %v1452 = vadd.f32 %v1429, %v1451
      %1453 = vmatmul.f32.gmra.mxu0 %v1409
      %v1454 = vpop.f32.mrf.mxu0
      %v1455 = vadd.f32 %v1432, %v1454
      %1456 = vdwg.mxu0
      %1457 = vmatpush.msra.mxu0 %v1378
      %1458 = vmatpush.msra.mxu0 %v1374
      %1459 = vmatpush.msra.mxu0 %v1370
      %1460 = vmatpush.msra.mxu0 %v1366
      %1461 = vmatpush.msra.mxu0 %v1362
      %1462 = vmatpush.msra.mxu0 %v1358
      %1463 = vmatpush.msra.mxu0 %v1354
      %1464 = vmatpush.msra.mxu0 %v1350
      %1465 = vmatpush.msra.mxu0 %v1346
      %1466 = vmatpush.msra.mxu0 %v1342
      %1467 = vmatpush.msra.mxu0 %v1338
      %1468 = vmatpush.msra.mxu0 %v1334
      %1469 = vmatpush.msra.mxu0 %v1330
      %1470 = vmatpush.msra.mxu0 %v1326
      %1471 = vmatpush.msra.mxu0 %v1322
      %1472 = vmatpush.msra.mxu0 %v1318
      %1473 = vmatmul.f32.gmra.mxu0 %v1397
      %v1474 = vpop.f32.mrf.mxu0
      %v1475 = vadd.f32 0.0, %v1474
      %1476 = vmatmul.f32.gmra.mxu0 %v1402
      %v1477 = vpop.f32.mrf.mxu0
      %v1478 = vadd.f32 0.0, %v1477
      %1479 = vdwg.mxu0
      %1480 = vmatpush.msra.mxu0 0.0
      %1481 = vmatpush.msra.mxu0 0.0
      %1482 = vmatpush.msra.mxu0 0.0
      %1483 = vmatpush.msra.mxu0 0.0
      %1484 = vmatpush.msra.mxu0 0.0
      %1485 = vmatpush.msra.mxu0 0.0
      %1486 = vmatpush.msra.mxu0 0.0
      %1487 = vmatpush.msra.mxu0 0.0
      %1488 = vmatpush.msra.mxu0 0.0
      %1489 = vmatpush.msra.mxu0 0.0
      %1490 = vmatpush.msra.mxu0 0.0
      %1491 = vmatpush.msra.mxu0 0.0
      %1492 = vmatpush.msra.mxu0 0.0
      %1493 = vmatpush.msra.mxu0 0.0
      %1494 = vmatpush.msra.mxu0 %v1386
      %1495 = vmatpush.msra.mxu0 %v1382
      %1496 = vmatmul.f32.gmra.mxu0 %v1407
      %v1497 = vpop.f32.mrf.mxu0
      %v1498 = vadd.f32 %v1475, %v1497
      %1499 = vmatmul.f32.gmra.mxu0 %v1409
      %v1500 = vpop.f32.mrf.mxu0
      %v1501 = vadd.f32 %v1478, %v1500
      %1502 = vdwg.mxu0
      %1503 = vmatpush.msra.mxu0 %v1379
      %1504 = vmatpush.msra.mxu0 %v1375
      %1505 = vmatpush.msra.mxu0 %v1371
      %1506 = vmatpush.msra.mxu0 %v1367
      %1507 = vmatpush.msra.mxu0 %v1363
      %1508 = vmatpush.msra.mxu0 %v1359
      %1509 = vmatpush.msra.mxu0 %v1355
      %1510 = vmatpush.msra.mxu0 %v1351
      %1511 = vmatpush.msra.mxu0 %v1347
      %1512 = vmatpush.msra.mxu0 %v1343
      %1513 = vmatpush.msra.mxu0 %v1339
      %1514 = vmatpush.msra.mxu0 %v1335
      %1515 = vmatpush.msra.mxu0 %v1331
      %1516 = vmatpush.msra.mxu0 %v1327
      %1517 = vmatpush.msra.mxu0 %v1323
      %1518 = vmatpush.msra.mxu0 %v1319
      %1519 = vmatmul.f32.gmra.mxu0 %v1397
      %v1520 = vpop.f32.mrf.mxu0
      %v1521 = vadd.f32 0.0, %v1520
      %1522 = vmatmul.f32.gmra.mxu0 %v1402
      %v1523 = vpop.f32.mrf.mxu0
      %v1524 = vadd.f32 0.0, %v1523
      %1525 = vdwg.mxu0
      %1526 = vmatpush.msra.mxu0 0.0
      %1527 = vmatpush.msra.mxu0 0.0
      %1528 = vmatpush.msra.mxu0 0.0
      %1529 = vmatpush.msra.mxu0 0.0
      %1530 = vmatpush.msra.mxu0 0.0
      %1531 = vmatpush.msra.mxu0 0.0
      %1532 = vmatpush.msra.mxu0 0.0
      %1533 = vmatpush.msra.mxu0 0.0
      %1534 = vmatpush.msra.mxu0 0.0
      %1535 = vmatpush.msra.mxu0 0.0
      %1536 = vmatpush.msra.mxu0 0.0
      %1537 = vmatpush.msra.mxu0 0.0
      %1538 = vmatpush.msra.mxu0 0.0
      %1539 = vmatpush.msra.mxu0 0.0
      %1540 = vmatpush.msra.mxu0 %v1387
      %1541 = vmatpush.msra.mxu0 %v1383
      %1542 = vmatmul.f32.gmra.mxu0 %v1407
      %v1543 = vpop.f32.mrf.mxu0
      %v1544 = vadd.f32 %v1521, %v1543
      %1545 = vmatmul.f32.gmra.mxu0 %v1409
      %v1546 = vpop.f32.mrf.mxu0
      %v1547 = vadd.f32 %v1524, %v1546
      %1548 = vdwg.mxu0
      %1549 = vmatpush.msra.mxu0 %v1380
      %1550 = vmatpush.msra.mxu0 %v1376
      %1551 = vmatpush.msra.mxu0 %v1372
      %1552 = vmatpush.msra.mxu0 %v1368
      %1553 = vmatpush.msra.mxu0 %v1364
      %1554 = vmatpush.msra.mxu0 %v1360
      %1555 = vmatpush.msra.mxu0 %v1356
      %1556 = vmatpush.msra.mxu0 %v1352
      %1557 = vmatpush.msra.mxu0 %v1348
      %1558 = vmatpush.msra.mxu0 %v1344
      %1559 = vmatpush.msra.mxu0 %v1340
      %1560 = vmatpush.msra.mxu0 %v1336
      %1561 = vmatpush.msra.mxu0 %v1332
      %1562 = vmatpush.msra.mxu0 %v1328
      %1563 = vmatpush.msra.mxu0 %v1324
      %1564 = vmatpush.msra.mxu0 %v1320
      %1565 = vmatmul.f32.gmra.mxu0 %v1397
      %v1566 = vpop.f32.mrf.mxu0
      %v1567 = vadd.f32 0.0, %v1566
      %1568 = vmatmul.f32.gmra.mxu0 %v1402
      %v1569 = vpop.f32.mrf.mxu0
      %v1570 = vadd.f32 0.0, %v1569
      %1571 = vdwg.mxu0
      %1572 = vmatpush.msra.mxu0 0.0
      %1573 = vmatpush.msra.mxu0 0.0
      %1574 = vmatpush.msra.mxu0 0.0
      %1575 = vmatpush.msra.mxu0 0.0
      %1576 = vmatpush.msra.mxu0 0.0
      %1577 = vmatpush.msra.mxu0 0.0
      %1578 = vmatpush.msra.mxu0 0.0
      %1579 = vmatpush.msra.mxu0 0.0
      %1580 = vmatpush.msra.mxu0 0.0
      %1581 = vmatpush.msra.mxu0 0.0
      %1582 = vmatpush.msra.mxu0 0.0
      %1583 = vmatpush.msra.mxu0 0.0
      %1584 = vmatpush.msra.mxu0 0.0
      %1585 = vmatpush.msra.mxu0 0.0
      %1586 = vmatpush.msra.mxu0 %v1388
      %1587 = vmatpush.msra.mxu0 %v1384
      %1588 = vmatmul.f32.gmra.mxu0 %v1407
      %v1589 = vpop.f32.mrf.mxu0
      %v1590 = vadd.f32 %v1567, %v1589
      %1591 = vmatmul.f32.gmra.mxu0 %v1409
      %v1592 = vpop.f32.mrf.mxu0
      %v1593 = vadd.f32 %v1570, %v1592
      %1594 = vdwg.mxu0
      %v1595 = vsel %vm811, %v1240, 0
      %v1597 = vsel %vm811, %v1242, 0
      %1599 = vmatpush.msra.mxu0 %v1305
      %1600 = vmatpush.msra.mxu0 %v1301
      %1601 = vmatpush.msra.mxu0 %v1297
      %1602 = vmatpush.msra.mxu0 %v1293
      %1603 = vmatpush.msra.mxu0 %v1289
      %1604 = vmatpush.msra.mxu0 %v1285
      %1605 = vmatpush.msra.mxu0 %v1281
      %1606 = vmatpush.msra.mxu0 %v1277
      %1607 = vmatpush.msra.mxu0 %v1273
      %1608 = vmatpush.msra.mxu0 %v1269
      %1609 = vmatpush.msra.mxu0 %v1265
      %1610 = vmatpush.msra.mxu0 %v1261
      %1611 = vmatpush.msra.mxu0 %v1257
      %1612 = vmatpush.msra.mxu0 %v1253
      %1613 = vmatpush.msra.mxu0 %v1249
      %1614 = vmatpush.msra.mxu0 %v1245
      %1615 = vmatmul.f32.gmra.mxu0 %v1239
      %v1616 = vpop.f32.mrf.mxu0
      %v1617 = vadd.f32 %v1452, %v1616
      %1618 = vmatmul.f32.gmra.mxu0 %v1241
      %v1619 = vpop.f32.mrf.mxu0
      %v1620 = vadd.f32 %v1455, %v1619
      %1621 = vdwg.mxu0
      %1622 = vmatpush.msra.mxu0 0.0
      %1623 = vmatpush.msra.mxu0 0.0
      %1624 = vmatpush.msra.mxu0 0.0
      %1625 = vmatpush.msra.mxu0 0.0
      %1626 = vmatpush.msra.mxu0 0.0
      %1627 = vmatpush.msra.mxu0 0.0
      %1628 = vmatpush.msra.mxu0 0.0
      %1629 = vmatpush.msra.mxu0 0.0
      %1630 = vmatpush.msra.mxu0 0.0
      %1631 = vmatpush.msra.mxu0 0.0
      %1632 = vmatpush.msra.mxu0 0.0
      %1633 = vmatpush.msra.mxu0 0.0
      %1634 = vmatpush.msra.mxu0 0.0
      %1635 = vmatpush.msra.mxu0 0.0
      %1636 = vmatpush.msra.mxu0 %v1313
      %1637 = vmatpush.msra.mxu0 %v1309
      %1638 = vmatmul.f32.gmra.mxu0 %v1595
      %v1639 = vpop.f32.mrf.mxu0
      %v1640 = vadd.f32 %v1617, %v1639
      %1641 = vmatmul.f32.gmra.mxu0 %v1597
      %v1642 = vpop.f32.mrf.mxu0
      %v1643 = vadd.f32 %v1620, %v1642
      %1644 = vdwg.mxu0
      %1645 = vmatpush.msra.mxu0 %v1306
      %1646 = vmatpush.msra.mxu0 %v1302
      %1647 = vmatpush.msra.mxu0 %v1298
      %1648 = vmatpush.msra.mxu0 %v1294
      %1649 = vmatpush.msra.mxu0 %v1290
      %1650 = vmatpush.msra.mxu0 %v1286
      %1651 = vmatpush.msra.mxu0 %v1282
      %1652 = vmatpush.msra.mxu0 %v1278
      %1653 = vmatpush.msra.mxu0 %v1274
      %1654 = vmatpush.msra.mxu0 %v1270
      %1655 = vmatpush.msra.mxu0 %v1266
      %1656 = vmatpush.msra.mxu0 %v1262
      %1657 = vmatpush.msra.mxu0 %v1258
      %1658 = vmatpush.msra.mxu0 %v1254
      %1659 = vmatpush.msra.mxu0 %v1250
      %1660 = vmatpush.msra.mxu0 %v1246
      %1661 = vmatmul.f32.gmra.mxu0 %v1239
      %v1662 = vpop.f32.mrf.mxu0
      %v1663 = vadd.f32 %v1498, %v1662
      %1664 = vmatmul.f32.gmra.mxu0 %v1241
      %v1665 = vpop.f32.mrf.mxu0
      %v1666 = vadd.f32 %v1501, %v1665
      %1667 = vdwg.mxu0
      %1668 = vmatpush.msra.mxu0 0.0
      %1669 = vmatpush.msra.mxu0 0.0
      %1670 = vmatpush.msra.mxu0 0.0
      %1671 = vmatpush.msra.mxu0 0.0
      %1672 = vmatpush.msra.mxu0 0.0
      %1673 = vmatpush.msra.mxu0 0.0
      %1674 = vmatpush.msra.mxu0 0.0
      %1675 = vmatpush.msra.mxu0 0.0
      %1676 = vmatpush.msra.mxu0 0.0
      %1677 = vmatpush.msra.mxu0 0.0
      %1678 = vmatpush.msra.mxu0 0.0
      %1679 = vmatpush.msra.mxu0 0.0
      %1680 = vmatpush.msra.mxu0 0.0
      %1681 = vmatpush.msra.mxu0 0.0
      %1682 = vmatpush.msra.mxu0 %v1314
      %1683 = vmatpush.msra.mxu0 %v1310
      %1684 = vmatmul.f32.gmra.mxu0 %v1595
      %v1685 = vpop.f32.mrf.mxu0
      %v1686 = vadd.f32 %v1663, %v1685
      %1687 = vmatmul.f32.gmra.mxu0 %v1597
      %v1688 = vpop.f32.mrf.mxu0
      %v1689 = vadd.f32 %v1666, %v1688
      %1690 = vdwg.mxu0
      %1691 = vmatpush.msra.mxu0 %v1307
      %1692 = vmatpush.msra.mxu0 %v1303
      %1693 = vmatpush.msra.mxu0 %v1299
      %1694 = vmatpush.msra.mxu0 %v1295
      %1695 = vmatpush.msra.mxu0 %v1291
      %1696 = vmatpush.msra.mxu0 %v1287
      %1697 = vmatpush.msra.mxu0 %v1283
      %1698 = vmatpush.msra.mxu0 %v1279
      %1699 = vmatpush.msra.mxu0 %v1275
      %1700 = vmatpush.msra.mxu0 %v1271
      %1701 = vmatpush.msra.mxu0 %v1267
      %1702 = vmatpush.msra.mxu0 %v1263
      %1703 = vmatpush.msra.mxu0 %v1259
      %1704 = vmatpush.msra.mxu0 %v1255
      %1705 = vmatpush.msra.mxu0 %v1251
      %1706 = vmatpush.msra.mxu0 %v1247
      %1707 = vmatmul.f32.gmra.mxu0 %v1239
      %v1708 = vpop.f32.mrf.mxu0
      %v1709 = vadd.f32 %v1544, %v1708
      %1710 = vmatmul.f32.gmra.mxu0 %v1241
      %v1711 = vpop.f32.mrf.mxu0
      %v1712 = vadd.f32 %v1547, %v1711
      %1713 = vdwg.mxu0
      %1714 = vmatpush.msra.mxu0 0.0
      %1715 = vmatpush.msra.mxu0 0.0
      %1716 = vmatpush.msra.mxu0 0.0
      %1717 = vmatpush.msra.mxu0 0.0
      %1718 = vmatpush.msra.mxu0 0.0
      %1719 = vmatpush.msra.mxu0 0.0
      %1720 = vmatpush.msra.mxu0 0.0
      %1721 = vmatpush.msra.mxu0 0.0
      %1722 = vmatpush.msra.mxu0 0.0
      %1723 = vmatpush.msra.mxu0 0.0
      %1724 = vmatpush.msra.mxu0 0.0
      %1725 = vmatpush.msra.mxu0 0.0
      %1726 = vmatpush.msra.mxu0 0.0
      %1727 = vmatpush.msra.mxu0 0.0
      %1728 = vmatpush.msra.mxu0 %v1315
      %1729 = vmatpush.msra.mxu0 %v1311
      %1730 = vmatmul.f32.gmra.mxu0 %v1595
      %v1731 = vpop.f32.mrf.mxu0
      %v1732 = vadd.f32 %v1709, %v1731
      %1733 = vmatmul.f32.gmra.mxu0 %v1597
      %v1734 = vpop.f32.mrf.mxu0
      %v1735 = vadd.f32 %v1712, %v1734
      %1736 = vdwg.mxu0
      %1737 = vmatpush.msra.mxu0 %v1308
      %1738 = vmatpush.msra.mxu0 %v1304
      %1739 = vmatpush.msra.mxu0 %v1300
      %1740 = vmatpush.msra.mxu0 %v1296
      %1741 = vmatpush.msra.mxu0 %v1292
      %1742 = vmatpush.msra.mxu0 %v1288
      %1743 = vmatpush.msra.mxu0 %v1284
      %1744 = vmatpush.msra.mxu0 %v1280
      %1745 = vmatpush.msra.mxu0 %v1276
      %1746 = vmatpush.msra.mxu0 %v1272
      %1747 = vmatpush.msra.mxu0 %v1268
      %1748 = vmatpush.msra.mxu0 %v1264
      %1749 = vmatpush.msra.mxu0 %v1260
      %1750 = vmatpush.msra.mxu0 %v1256
      %1751 = vmatpush.msra.mxu0 %v1252
      %1752 = vmatpush.msra.mxu0 %v1248
      %1753 = vmatmul.f32.gmra.mxu0 %v1239
      %v1754 = vpop.f32.mrf.mxu0
      %v1755 = vadd.f32 %v1590, %v1754
      %1756 = vmatmul.f32.gmra.mxu0 %v1241
      %v1757 = vpop.f32.mrf.mxu0
      %v1758 = vadd.f32 %v1593, %v1757
      %1759 = vdwg.mxu0
      %1760 = vmatpush.msra.mxu0 0.0
      %1761 = vmatpush.msra.mxu0 0.0
      %1762 = vmatpush.msra.mxu0 0.0
      %1763 = vmatpush.msra.mxu0 0.0
      %1764 = vmatpush.msra.mxu0 0.0
      %1765 = vmatpush.msra.mxu0 0.0
      %1766 = vmatpush.msra.mxu0 0.0
      %1767 = vmatpush.msra.mxu0 0.0
      %1768 = vmatpush.msra.mxu0 0.0
      %1769 = vmatpush.msra.mxu0 0.0
      %1770 = vmatpush.msra.mxu0 0.0
      %1771 = vmatpush.msra.mxu0 0.0
      %1772 = vmatpush.msra.mxu0 0.0
      %1773 = vmatpush.msra.mxu0 0.0
      %1774 = vmatpush.msra.mxu0 %v1316
      %1775 = vmatpush.msra.mxu0 %v1312
      %1776 = vmatmul.f32.gmra.mxu0 %v1595
      %v1777 = vpop.f32.mrf.mxu0
      %v1778 = vadd.f32 %v1755, %v1777
      %1779 = vmatmul.f32.gmra.mxu0 %v1597
      %v1780 = vpop.f32.mrf.mxu0
      %v1781 = vadd.f32 %v1758, %v1780
      %1782 = vdwg.mxu0
      %v1783 = vld [vmem:[%s1128 + $0x8] sm:$0xff]
      %v1784 = vld [vmem:[%s1128 + $0x10] sm:$0xff]
      %v1785 = vld [vmem:[%s1128 + $0x18] sm:$0xff]
      %v1786 = vld [vmem:[%s1128 + $0x20] sm:$0xff]
      %v1787 = vld [vmem:[%s1128 + $0x60] sm:$0xff]
      %v1788 = vld [vmem:[%s1128 + $0x68] sm:$0xff]
      %v1789 = vld [vmem:[%s1128 + $0x70] sm:$0xff]
      %v1790 = vld [vmem:[%s1128 + $0x78] sm:$0xff]
      %v1791 = vld [vmem:[%s1128 + $0xb8] sm:$0xff]
      %v1792 = vld [vmem:[%s1128 + $0xc0] sm:$0xff]
      %v1793 = vld [vmem:[%s1128 + $0xc8] sm:$0xff]
      %v1794 = vld [vmem:[%s1128 + $0xd0] sm:$0xff]
      %v1795 = vld [vmem:[%s1128 + $0x110] sm:$0xff]
      %v1796 = vld [vmem:[%s1128 + $0x118] sm:$0xff]
      %v1797 = vld [vmem:[%s1128 + $0x120] sm:$0xff]
      %v1798 = vld [vmem:[%s1128 + $0x128] sm:$0xff]
      %v1799 = vld [vmem:[%s1128 + $0x168] sm:$0xff]
      %v1800 = vld [vmem:[%s1128 + $0x170] sm:$0xff]
      %v1801 = vld [vmem:[%s1128 + $0x178] sm:$0xff]
      %v1802 = vld [vmem:[%s1128 + $0x180] sm:$0xff]
      %v1803 = vld [vmem:[%s1128 + $0x1c0] sm:$0xff]
      %v1804 = vld [vmem:[%s1128 + $0x1c8] sm:$0xff]
      %v1805 = vld [vmem:[%s1128 + $0x1d0] sm:$0xff]
      %v1806 = vld [vmem:[%s1128 + $0x1d8] sm:$0xff]
      %v1807 = vld [vmem:[%s1128 + $0x218] sm:$0xff]
      %v1808 = vld [vmem:[%s1128 + $0x220] sm:$0xff]
      %v1809 = vld [vmem:[%s1128 + $0x228] sm:$0xff]
      %v1810 = vld [vmem:[%s1128 + $0x230] sm:$0xff]
      %v1811 = vld [vmem:[%s1128 + $0x270] sm:$0xff]
      %v1812 = vld [vmem:[%s1128 + $0x278] sm:$0xff]
      %v1813 = vld [vmem:[%s1128 + $0x280] sm:$0xff]
      %v1814 = vld [vmem:[%s1128 + $0x288] sm:$0xff]
      %v1815 = vld [vmem:[%s1128 + $0x2c8] sm:$0xff]
      %v1816 = vld [vmem:[%s1128 + $0x2d0] sm:$0xff]
      %v1817 = vld [vmem:[%s1128 + $0x2d8] sm:$0xff]
      %v1818 = vld [vmem:[%s1128 + $0x2e0] sm:$0xff]
      %v1819 = vld [vmem:[%s1128 + $0x320] sm:$0xff]
      %v1820 = vld [vmem:[%s1128 + $0x328] sm:$0xff]
      %v1821 = vld [vmem:[%s1128 + $0x330] sm:$0xff]
      %v1822 = vld [vmem:[%s1128 + $0x338] sm:$0xff]
      %v1823 = vld [vmem:[%s1128 + $0x378] sm:$0xff]
      %v1824 = vld [vmem:[%s1128 + $0x380] sm:$0xff]
      %v1825 = vld [vmem:[%s1128 + $0x388] sm:$0xff]
      %v1826 = vld [vmem:[%s1128 + $0x390] sm:$0xff]
      %v1827 = vld [vmem:[%s1128 + $0x3d0] sm:$0xff]
      %v1828 = vld [vmem:[%s1128 + $0x3d8] sm:$0xff]
      %v1829 = vld [vmem:[%s1128 + $0x3e0] sm:$0xff]
      %v1830 = vld [vmem:[%s1128 + $0x3e8] sm:$0xff]
      %v1831 = vld [vmem:[%s1128 + $0x428] sm:$0xff]
      %v1832 = vld [vmem:[%s1128 + $0x430] sm:$0xff]
      %v1833 = vld [vmem:[%s1128 + $0x438] sm:$0xff]
      %v1834 = vld [vmem:[%s1128 + $0x440] sm:$0xff]
      %v1835 = vld [vmem:[%s1128 + $0x480] sm:$0xff]
      %v1836 = vld [vmem:[%s1128 + $0x488] sm:$0xff]
      %v1837 = vld [vmem:[%s1128 + $0x490] sm:$0xff]
      %v1838 = vld [vmem:[%s1128 + $0x498] sm:$0xff]
      %v1839 = vld [vmem:[%s1128 + $0x4d8] sm:$0xff]
      %v1840 = vld [vmem:[%s1128 + $0x4e0] sm:$0xff]
      %v1841 = vld [vmem:[%s1128 + $0x4e8] sm:$0xff]
      %v1842 = vld [vmem:[%s1128 + $0x4f0] sm:$0xff]
      %v1843 = vld [vmem:[%s1128 + $0x530] sm:$0xff]
      %v1844 = vld [vmem:[%s1128 + $0x538] sm:$0xff]
      %v1845 = vld [vmem:[%s1128 + $0x540] sm:$0xff]
      %v1846 = vld [vmem:[%s1128 + $0x548] sm:$0xff]
      %v1847 = vld [vmem:[%s1128 + $0x588] sm:$0xff]
      %v1848 = vld [vmem:[%s1128 + $0x590] sm:$0xff]
      %v1849 = vld [vmem:[%s1128 + $0x598] sm:$0xff]
      %v1850 = vld [vmem:[%s1128 + $0x5a0] sm:$0xff]
      %v1851 = vld [vmem:[%s1128 + $0x5e0] sm:$0xff]
      %v1852 = vld [vmem:[%s1128 + $0x5e8] sm:$0xff]
      %v1853 = vld [vmem:[%s1128 + $0x5f0] sm:$0xff]
      %v1854 = vld [vmem:[%s1128 + $0x5f8] sm:$0xff]
      %v1855 = vrot.slane %v1239, 2
      %v1856 = vrot.slane %v1241, 2
      %v1857 = vsel %vm1147, %v1855, %v1856
      %v1858 = vrot.slane %v1240, 2
      %v1859 = vrot.slane %v1242, 2
      %v1860 = vsel %vm1147, %v1858, %v1859
      %v1861 = vrot.slane %v1243, 2
      %v1862 = vsel %vm1147, %v1856, %v1861
      %v1863 = vrot.slane %v1244, 2
      %v1864 = vsel %vm1147, %v1859, %v1863
      %v1867 = vsel %vm811, %v1860, 0
      %v1869 = vsel %vm811, %v1864, 0
      %1871 = vmatpush.msra.mxu0 %v1843
      %1872 = vmatpush.msra.mxu0 %v1839
      %1873 = vmatpush.msra.mxu0 %v1835
      %1874 = vmatpush.msra.mxu0 %v1831
      %1875 = vmatpush.msra.mxu0 %v1827
      %1876 = vmatpush.msra.mxu0 %v1823
      %1877 = vmatpush.msra.mxu0 %v1819
      %1878 = vmatpush.msra.mxu0 %v1815
      %1879 = vmatpush.msra.mxu0 %v1811
      %1880 = vmatpush.msra.mxu0 %v1807
      %1881 = vmatpush.msra.mxu0 %v1803
      %1882 = vmatpush.msra.mxu0 %v1799
      %1883 = vmatpush.msra.mxu0 %v1795
      %1884 = vmatpush.msra.mxu0 %v1791
      %1885 = vmatpush.msra.mxu0 %v1787
      %1886 = vmatpush.msra.mxu0 %v1783
      %1887 = vmatmul.f32.gmra.mxu0 %v1857
      %v1888 = vpop.f32.mrf.mxu0
      %v1889 = vadd.f32 0.0, %v1888
      %1890 = vmatmul.f32.gmra.mxu0 %v1862
      %v1891 = vpop.f32.mrf.mxu0
      %v1892 = vadd.f32 0.0, %v1891
      %1893 = vdwg.mxu0
      %1894 = vmatpush.msra.mxu0 0.0
      %1895 = vmatpush.msra.mxu0 0.0
      %1896 = vmatpush.msra.mxu0 0.0
      %1897 = vmatpush.msra.mxu0 0.0
      %1898 = vmatpush.msra.mxu0 0.0
      %1899 = vmatpush.msra.mxu0 0.0
      %1900 = vmatpush.msra.mxu0 0.0
      %1901 = vmatpush.msra.mxu0 0.0
      %1902 = vmatpush.msra.mxu0 0.0
      %1903 = vmatpush.msra.mxu0 0.0
      %1904 = vmatpush.msra.mxu0 0.0
      %1905 = vmatpush.msra.mxu0 0.0
      %1906 = vmatpush.msra.mxu0 0.0
      %1907 = vmatpush.msra.mxu0 0.0
      %1908 = vmatpush.msra.mxu0 %v1851
      %1909 = vmatpush.msra.mxu0 %v1847
      %1910 = vmatmul.f32.gmra.mxu0 %v1867
      %v1911 = vpop.f32.mrf.mxu0
      %v1912 = vadd.f32 %v1889, %v1911
      %1913 = vmatmul.f32.gmra.mxu0 %v1869
      %v1914 = vpop.f32.mrf.mxu0
      %v1915 = vadd.f32 %v1892, %v1914
      %1916 = vdwg.mxu0
      %1917 = vmatpush.msra.mxu0 %v1844
      %1918 = vmatpush.msra.mxu0 %v1840
      %1919 = vmatpush.msra.mxu0 %v1836
      %1920 = vmatpush.msra.mxu0 %v1832
      %1921 = vmatpush.msra.mxu0 %v1828
      %1922 = vmatpush.msra.mxu0 %v1824
      %1923 = vmatpush.msra.mxu0 %v1820
      %1924 = vmatpush.msra.mxu0 %v1816
      %1925 = vmatpush.msra.mxu0 %v1812
      %1926 = vmatpush.msra.mxu0 %v1808
      %1927 = vmatpush.msra.mxu0 %v1804
      %1928 = vmatpush.msra.mxu0 %v1800
      %1929 = vmatpush.msra.mxu0 %v1796
      %1930 = vmatpush.msra.mxu0 %v1792
      %1931 = vmatpush.msra.mxu0 %v1788
      %1932 = vmatpush.msra.mxu0 %v1784
      %1933 = vmatmul.f32.gmra.mxu0 %v1857
      %v1934 = vpop.f32.mrf.mxu0
      %v1935 = vadd.f32 0.0, %v1934
      %1936 = vmatmul.f32.gmra.mxu0 %v1862
      %v1937 = vpop.f32.mrf.mxu0
      %v1938 = vadd.f32 0.0, %v1937
      %1939 = vdwg.mxu0
      %1940 = vmatpush.msra.mxu0 0.0
      %1941 = vmatpush.msra.mxu0 0.0
      %1942 = vmatpush.msra.mxu0 0.0
      %1943 = vmatpush.msra.mxu0 0.0
      %1944 = vmatpush.msra.mxu0 0.0
      %1945 = vmatpush.msra.mxu0 0.0
      %1946 = vmatpush.msra.mxu0 0.0
      %1947 = vmatpush.msra.mxu0 0.0
      %1948 = vmatpush.msra.mxu0 0.0
      %1949 = vmatpush.msra.mxu0 0.0
      %1950 = vmatpush.msra.mxu0 0.0
      %1951 = vmatpush.msra.mxu0 0.0
      %1952 = vmatpush.msra.mxu0 0.0
      %1953 = vmatpush.msra.mxu0 0.0
      %1954 = vmatpush.msra.mxu0 %v1852
      %1955 = vmatpush.msra.mxu0 %v1848
      %1956 = vmatmul.f32.gmra.mxu0 %v1867
      %v1957 = vpop.f32.mrf.mxu0
      %v1958 = vadd.f32 %v1935, %v1957
      %1959 = vmatmul.f32.gmra.mxu0 %v1869
      %v1960 = vpop.f32.mrf.mxu0
      %v1961 = vadd.f32 %v1938, %v1960
      %1962 = vdwg.mxu0
      %1963 = vmatpush.msra.mxu0 %v1845
      %1964 = vmatpush.msra.mxu0 %v1841
      %1965 = vmatpush.msra.mxu0 %v1837
      %1966 = vmatpush.msra.mxu0 %v1833
      %1967 = vmatpush.msra.mxu0 %v1829
      %1968 = vmatpush.msra.mxu0 %v1825
      %1969 = vmatpush.msra.mxu0 %v1821
      %1970 = vmatpush.msra.mxu0 %v1817
      %1971 = vmatpush.msra.mxu0 %v1813
      %1972 = vmatpush.msra.mxu0 %v1809
      %1973 = vmatpush.msra.mxu0 %v1805
      %1974 = vmatpush.msra.mxu0 %v1801
      %1975 = vmatpush.msra.mxu0 %v1797
      %1976 = vmatpush.msra.mxu0 %v1793
      %1977 = vmatpush.msra.mxu0 %v1789
      %1978 = vmatpush.msra.mxu0 %v1785
      %1979 = vmatmul.f32.gmra.mxu0 %v1857
      %v1980 = vpop.f32.mrf.mxu0
      %v1981 = vadd.f32 0.0, %v1980
      %1982 = vmatmul.f32.gmra.mxu0 %v1862
      %v1983 = vpop.f32.mrf.mxu0
      %v1984 = vadd.f32 0.0, %v1983
      %1985 = vdwg.mxu0
      %1986 = vmatpush.msra.mxu0 0.0
      %1987 = vmatpush.msra.mxu0 0.0
      %1988 = vmatpush.msra.mxu0 0.0
      %1989 = vmatpush.msra.mxu0 0.0
      %1990 = vmatpush.msra.mxu0 0.0
      %1991 = vmatpush.msra.mxu0 0.0
      %1992 = vmatpush.msra.mxu0 0.0
      %1993 = vmatpush.msra.mxu0 0.0
      %1994 = vmatpush.msra.mxu0 0.0
      %1995 = vmatpush.msra.mxu0 0.0
      %1996 = vmatpush.msra.mxu0 0.0
      %1997 = vmatpush.msra.mxu0 0.0
      %1998 = vmatpush.msra.mxu0 0.0
      %1999 = vmatpush.msra.mxu0 0.0
      %2000 = vmatpush.msra.mxu0 %v1853
      %2001 = vmatpush.msra.mxu0 %v1849
      %2002 = vmatmul.f32.gmra.mxu0 %v1867
      %v2003 = vpop.f32.mrf.mxu0
      %v2004 = vadd.f32 %v1981, %v2003
      %2005 = vmatmul.f32.gmra.mxu0 %v1869
      %v2006 = vpop.f32.mrf.mxu0
      %v2007 = vadd.f32 %v1984, %v2006
      %2008 = vdwg.mxu0
      %2009 = vmatpush.msra.mxu0 %v1846
      %2010 = vmatpush.msra.mxu0 %v1842
      %2011 = vmatpush.msra.mxu0 %v1838
      %2012 = vmatpush.msra.mxu0 %v1834
      %2013 = vmatpush.msra.mxu0 %v1830
      %2014 = vmatpush.msra.mxu0 %v1826
      %2015 = vmatpush.msra.mxu0 %v1822
      %2016 = vmatpush.msra.mxu0 %v1818
      %2017 = vmatpush.msra.mxu0 %v1814
      %2018 = vmatpush.msra.mxu0 %v1810
      %2019 = vmatpush.msra.mxu0 %v1806
      %2020 = vmatpush.msra.mxu0 %v1802
      %2021 = vmatpush.msra.mxu0 %v1798
      %2022 = vmatpush.msra.mxu0 %v1794
      %2023 = vmatpush.msra.mxu0 %v1790
      %2024 = vmatpush.msra.mxu0 %v1786
      %2025 = vmatmul.f32.gmra.mxu0 %v1857
      %v2026 = vpop.f32.mrf.mxu0
      %v2027 = vadd.f32 0.0, %v2026
      %2028 = vmatmul.f32.gmra.mxu0 %v1862
      %v2029 = vpop.f32.mrf.mxu0
      %v2030 = vadd.f32 0.0, %v2029
      %2031 = vdwg.mxu0
      %2032 = vmatpush.msra.mxu0 0.0
      %2033 = vmatpush.msra.mxu0 0.0
      %2034 = vmatpush.msra.mxu0 0.0
      %2035 = vmatpush.msra.mxu0 0.0
      %2036 = vmatpush.msra.mxu0 0.0
      %2037 = vmatpush.msra.mxu0 0.0
      %2038 = vmatpush.msra.mxu0 0.0
      %2039 = vmatpush.msra.mxu0 0.0
      %2040 = vmatpush.msra.mxu0 0.0
      %2041 = vmatpush.msra.mxu0 0.0
      %2042 = vmatpush.msra.mxu0 0.0
      %2043 = vmatpush.msra.mxu0 0.0
      %2044 = vmatpush.msra.mxu0 0.0
      %2045 = vmatpush.msra.mxu0 0.0
      %2046 = vmatpush.msra.mxu0 %v1854
      %2047 = vmatpush.msra.mxu0 %v1850
      %2048 = vmatmul.f32.gmra.mxu0 %v1867
      %v2049 = vpop.f32.mrf.mxu0
      %v2050 = vadd.f32 %v2027, %v2049
      %2051 = vmatmul.f32.gmra.mxu0 %v1869
      %v2052 = vpop.f32.mrf.mxu0
      %v2053 = vadd.f32 %v2030, %v2052
      %2054 = vdwg.mxu0
      %v2055 = vadd.f32 %v1640, %v1912
      %v2056 = vadd.f32 %v1686, %v1958
      %v2057 = vadd.f32 %v1732, %v2004
      %v2058 = vadd.f32 %v1778, %v2050
      %v2059 = vadd.f32 %v1643, %v1915
      %v2060 = vadd.f32 %v1689, %v1961
      %v2061 = vadd.f32 %v1735, %v2007
      %v2062 = vadd.f32 %v1781, %v2053
      %v2063 = vld [vmem:[%s6 + $0x1] sm:$0x1]
      %v2064 = vperm.slane %v2063, 0
      %v2065 = vadd.f32 %v2055, %v2064
      %v2066 = vadd.f32 %v2059, %v2064
      %v2067 = vmax.f32 %v2065, 0.0
      %v2068 = vmax.f32 %v2066, 0.0
      %v2071 = vrot.slane %v2067, 7
      %v2072 = vrot.slane %v2068, 7
      %v2073 = vsel %vm942, %v2071, %v2072
      %2074 = vrot.lane.b32.xlu0 %v2071, 8
      %v2075 = vpop.permute.xlu0 %2074
      %2076 = vrot.lane.b32.xlu0 %v2073, 8
      %v2077 = vpop.permute.xlu0 %2076
      %2078 = vrot.lane.b32.xlu0 %v2072, 8
      %v2079 = vpop.permute.xlu0 %2078
      %s2083 = scalar_lea.vmem [#allocation2], 96
      %2084 = vst.msk [vmem:[%s2083] sm:$0xfe] %vm955, %v2075
      %2085 = vst.msk [vmem:[%s2083 + $0x8] sm:$0xfe] %vm957, %v2075
      %2086 = vst.msk [vmem:[%s2083 + $0x10] sm:$0xff] %vm959, %v2077
      %2087 = vst.msk [vmem:[%s2083 + $0x18] sm:$0xff] %vm343, %v2077
      %2088 = vst.msk [vmem:[%s2083 + $0x20] sm:$0x1] %vm962, %v2079
      %2089 = vst.msk [vmem:[%s2083 + $0x28] sm:$0x1] %vm964, %v2079
      %v2090 = vld [vmem:[%s2083] sm:$0xff]
      %v2091 = vld [vmem:[%s2083 + $0x8] sm:$0xff]
      %v2092 = vld [vmem:[%s2083 + $0x10] sm:$0xff]
      %v2093 = vld [vmem:[%s2083 + $0x18] sm:$0xff]
      %v2094 = vld [vmem:[%s2083 + $0x20] sm:$0x3]
      %v2095 = vld [vmem:[%s2083 + $0x28] sm:$0x3]
      %v2096 = vld [vmem:[%s4 + $0x28] sm:$0xff]
      %v2097 = vld [vmem:[%s4 + $0x30] sm:$0xff]
      %v2098 = vld [vmem:[%s4 + $0x38] sm:$0xff]
      %v2099 = vld [vmem:[%s4 + $0x80] sm:$0xff]
      %v2100 = vld [vmem:[%s4 + $0x88] sm:$0xff]
      %v2101 = vld [vmem:[%s4 + $0x90] sm:$0xff]
      %v2102 = vld [vmem:[%s4 + $0xd8] sm:$0xff]
      %v2103 = vld [vmem:[%s4 + $0xe0] sm:$0xff]
      %v2104 = vld [vmem:[%s4 + $0xe8] sm:$0xff]
      %v2105 = vld [vmem:[%s4 + $0x130] sm:$0xff]
      %v2106 = vld [vmem:[%s4 + $0x138] sm:$0xff]
      %v2107 = vld [vmem:[%s4 + $0x140] sm:$0xff]
      %v2108 = vld [vmem:[%s4 + $0x188] sm:$0xff]
      %v2109 = vld [vmem:[%s4 + $0x190] sm:$0xff]
      %v2110 = vld [vmem:[%s4 + $0x198] sm:$0xff]
      %v2111 = vld [vmem:[%s4 + $0x1e0] sm:$0xff]
      %v2112 = vld [vmem:[%s4 + $0x1e8] sm:$0xff]
      %v2113 = vld [vmem:[%s4 + $0x1f0] sm:$0xff]
      %v2114 = vld [vmem:[%s4 + $0x238] sm:$0xff]
      %v2115 = vld [vmem:[%s4 + $0x240] sm:$0xff]
      %v2116 = vld [vmem:[%s4 + $0x248] sm:$0xff]
      %v2117 = vld [vmem:[%s4 + $0x290] sm:$0xff]
      %v2118 = vld [vmem:[%s4 + $0x298] sm:$0xff]
      %v2119 = vld [vmem:[%s4 + $0x2a0] sm:$0xff]
      %v2120 = vld [vmem:[%s4 + $0x2e8] sm:$0xff]
      %v2121 = vld [vmem:[%s4 + $0x2f0] sm:$0xff]
      %v2122 = vld [vmem:[%s4 + $0x2f8] sm:$0xff]
      %v2123 = vld [vmem:[%s4 + $0x340] sm:$0xff]
      %v2124 = vld [vmem:[%s4 + $0x348] sm:$0xff]
      %v2125 = vld [vmem:[%s4 + $0x350] sm:$0xff]
      %v2126 = vld [vmem:[%s4 + $0x398] sm:$0xff]
      %v2127 = vld [vmem:[%s4 + $0x3a0] sm:$0xff]
      %v2128 = vld [vmem:[%s4 + $0x3a8] sm:$0xff]
      %v2129 = vld [vmem:[%s4 + $0x3f0] sm:$0xff]
      %v2130 = vld [vmem:[%s4 + $0x3f8] sm:$0xff]
      %v2131 = vld [vmem:[%s4 + $0x400] sm:$0xff]
      %v2132 = vld [vmem:[%s4 + $0x448] sm:$0xff]
      %v2133 = vld [vmem:[%s4 + $0x450] sm:$0xff]
      %v2134 = vld [vmem:[%s4 + $0x458] sm:$0xff]
      %v2135 = vld [vmem:[%s4 + $0x4a0] sm:$0xff]
      %v2136 = vld [vmem:[%s4 + $0x4a8] sm:$0xff]
      %v2137 = vld [vmem:[%s4 + $0x4b0] sm:$0xff]
      %v2138 = vld [vmem:[%s4 + $0x4f8] sm:$0xff]
      %v2139 = vld [vmem:[%s4 + $0x500] sm:$0xff]
      %v2140 = vld [vmem:[%s4 + $0x508] sm:$0xff]
      %v2141 = vld [vmem:[%s4 + $0x550] sm:$0xff]
      %v2142 = vld [vmem:[%s4 + $0x558] sm:$0xff]
      %v2143 = vld [vmem:[%s4 + $0x560] sm:$0xff]
      %v2144 = vld [vmem:[%s4 + $0x5a8] sm:$0xff]
      %v2145 = vld [vmem:[%s4 + $0x5b0] sm:$0xff]
      %v2146 = vld [vmem:[%s4 + $0x5b8] sm:$0xff]
      %v2147 = vld [vmem:[%s4 + $0x600] sm:$0xff]
      %v2148 = vld [vmem:[%s4 + $0x608] sm:$0xff]
      %v2149 = vld [vmem:[%s4 + $0x610] sm:$0xff]
      %v2150 = vld [vmem:[%s990 + $0x28] sm:$0xff]
      %v2151 = vld [vmem:[%s990 + $0x30] sm:$0xff]
      %v2152 = vld [vmem:[%s990 + $0x38] sm:$0xff]
      %v2153 = vld [vmem:[%s990 + $0x80] sm:$0xff]
      %v2154 = vld [vmem:[%s990 + $0x88] sm:$0xff]
      %v2155 = vld [vmem:[%s990 + $0x90] sm:$0xff]
      %v2156 = vld [vmem:[%s990 + $0xd8] sm:$0xff]
      %v2157 = vld [vmem:[%s990 + $0xe0] sm:$0xff]
      %v2158 = vld [vmem:[%s990 + $0xe8] sm:$0xff]
      %v2159 = vld [vmem:[%s990 + $0x130] sm:$0xff]
      %v2160 = vld [vmem:[%s990 + $0x138] sm:$0xff]
      %v2161 = vld [vmem:[%s990 + $0x140] sm:$0xff]
      %v2162 = vld [vmem:[%s990 + $0x188] sm:$0xff]
      %v2163 = vld [vmem:[%s990 + $0x190] sm:$0xff]
      %v2164 = vld [vmem:[%s990 + $0x198] sm:$0xff]
      %v2165 = vld [vmem:[%s990 + $0x1e0] sm:$0xff]
      %v2166 = vld [vmem:[%s990 + $0x1e8] sm:$0xff]
      %v2167 = vld [vmem:[%s990 + $0x1f0] sm:$0xff]
      %v2168 = vld [vmem:[%s990 + $0x238] sm:$0xff]
      %v2169 = vld [vmem:[%s990 + $0x240] sm:$0xff]
      %v2170 = vld [vmem:[%s990 + $0x248] sm:$0xff]
      %v2171 = vld [vmem:[%s990 + $0x290] sm:$0xff]
      %v2172 = vld [vmem:[%s990 + $0x298] sm:$0xff]
      %v2173 = vld [vmem:[%s990 + $0x2a0] sm:$0xff]
      %v2174 = vld [vmem:[%s990 + $0x2e8] sm:$0xff]
      %v2175 = vld [vmem:[%s990 + $0x2f0] sm:$0xff]
      %v2176 = vld [vmem:[%s990 + $0x2f8] sm:$0xff]
      %v2177 = vld [vmem:[%s990 + $0x340] sm:$0xff]
      %v2178 = vld [vmem:[%s990 + $0x348] sm:$0xff]
      %v2179 = vld [vmem:[%s990 + $0x350] sm:$0xff]
      %v2180 = vld [vmem:[%s990 + $0x398] sm:$0xff]
      %v2181 = vld [vmem:[%s990 + $0x3a0] sm:$0xff]
      %v2182 = vld [vmem:[%s990 + $0x3a8] sm:$0xff]
      %v2183 = vld [vmem:[%s990 + $0x3f0] sm:$0xff]
      %v2184 = vld [vmem:[%s990 + $0x3f8] sm:$0xff]
      %v2185 = vld [vmem:[%s990 + $0x400] sm:$0xff]
      %v2186 = vld [vmem:[%s990 + $0x448] sm:$0xff]
      %v2187 = vld [vmem:[%s990 + $0x450] sm:$0xff]
      %v2188 = vld [vmem:[%s990 + $0x458] sm:$0xff]
      %v2189 = vld [vmem:[%s990 + $0x4a0] sm:$0xff]
      %v2190 = vld [vmem:[%s990 + $0x4a8] sm:$0xff]
      %v2191 = vld [vmem:[%s990 + $0x4b0] sm:$0xff]
      %v2192 = vld [vmem:[%s990 + $0x4f8] sm:$0xff]
      %v2193 = vld [vmem:[%s990 + $0x500] sm:$0xff]
      %v2194 = vld [vmem:[%s990 + $0x508] sm:$0xff]
      %v2195 = vld [vmem:[%s990 + $0x550] sm:$0xff]
      %v2196 = vld [vmem:[%s990 + $0x558] sm:$0xff]
      %v2197 = vld [vmem:[%s990 + $0x560] sm:$0xff]
      %v2198 = vld [vmem:[%s990 + $0x5a8] sm:$0xff]
      %v2199 = vld [vmem:[%s990 + $0x5b0] sm:$0xff]
      %v2200 = vld [vmem:[%s990 + $0x5b8] sm:$0xff]
      %v2201 = vld [vmem:[%s990 + $0x600] sm:$0xff]
      %v2202 = vld [vmem:[%s990 + $0x608] sm:$0xff]
      %v2203 = vld [vmem:[%s990 + $0x610] sm:$0xff]
      %v2210 = vrot.slane %v2090, 1
      %v2211 = vrot.slane %v2092, 1
      %v2212 = vsel %vm1015, %v2210, %v2211
      %v2213 = vrot.slane %v2091, 1
      %v2214 = vrot.slane %v2093, 1
      %v2215 = vsel %vm1015, %v2213, %v2214
      %v2216 = vrot.slane %v2094, 1
      %v2217 = vsel %vm1015, %v2211, %v2216
      %v2218 = vrot.slane %v2095, 1
      %v2219 = vsel %vm1015, %v2214, %v2218
      %v2222 = vsel %vm811, %v2215, 0
      %v2224 = vsel %vm811, %v2219, 0
      %2226 = vmatpush.msra.mxu0 %v2195
      %2227 = vmatpush.msra.mxu0 %v2192
      %2228 = vmatpush.msra.mxu0 %v2189
      %2229 = vmatpush.msra.mxu0 %v2186
      %2230 = vmatpush.msra.mxu0 %v2183
      %2231 = vmatpush.msra.mxu0 %v2180
      %2232 = vmatpush.msra.mxu0 %v2177
      %2233 = vmatpush.msra.mxu0 %v2174
      %2234 = vmatpush.msra.mxu0 %v2171
      %2235 = vmatpush.msra.mxu0 %v2168
      %2236 = vmatpush.msra.mxu0 %v2165
      %2237 = vmatpush.msra.mxu0 %v2162
      %2238 = vmatpush.msra.mxu0 %v2159
      %2239 = vmatpush.msra.mxu0 %v2156
      %2240 = vmatpush.msra.mxu0 %v2153
      %2241 = vmatpush.msra.mxu0 %v2150
      %2242 = vmatmul.f32.gmra.mxu0 %v2212
      %v2243 = vpop.f32.mrf.mxu0
      %v2244 = vadd.f32 0.0, %v2243
      %2245 = vmatmul.f32.gmra.mxu0 %v2217
      %v2246 = vpop.f32.mrf.mxu0
      %v2247 = vadd.f32 0.0, %v2246
      %2248 = vdwg.mxu0
      %2249 = vmatpush.msra.mxu0 0.0
      %2250 = vmatpush.msra.mxu0 0.0
      %2251 = vmatpush.msra.mxu0 0.0
      %2252 = vmatpush.msra.mxu0 0.0
      %2253 = vmatpush.msra.mxu0 0.0
      %2254 = vmatpush.msra.mxu0 0.0
      %2255 = vmatpush.msra.mxu0 0.0
      %2256 = vmatpush.msra.mxu0 0.0
      %2257 = vmatpush.msra.mxu0 0.0
      %2258 = vmatpush.msra.mxu0 0.0
      %2259 = vmatpush.msra.mxu0 0.0
      %2260 = vmatpush.msra.mxu0 0.0
      %2261 = vmatpush.msra.mxu0 0.0
      %2262 = vmatpush.msra.mxu0 0.0
      %2263 = vmatpush.msra.mxu0 %v2201
      %2264 = vmatpush.msra.mxu0 %v2198
      %2265 = vmatmul.f32.gmra.mxu0 %v2222
      %v2266 = vpop.f32.mrf.mxu0
      %v2267 = vadd.f32 %v2244, %v2266
      %2268 = vmatmul.f32.gmra.mxu0 %v2224
      %v2269 = vpop.f32.mrf.mxu0
      %v2270 = vadd.f32 %v2247, %v2269
      %2271 = vdwg.mxu0
      %2272 = vmatpush.msra.mxu0 %v2196
      %2273 = vmatpush.msra.mxu0 %v2193
      %2274 = vmatpush.msra.mxu0 %v2190
      %2275 = vmatpush.msra.mxu0 %v2187
      %2276 = vmatpush.msra.mxu0 %v2184
      %2277 = vmatpush.msra.mxu0 %v2181
      %2278 = vmatpush.msra.mxu0 %v2178
      %2279 = vmatpush.msra.mxu0 %v2175
      %2280 = vmatpush.msra.mxu0 %v2172
      %2281 = vmatpush.msra.mxu0 %v2169
      %2282 = vmatpush.msra.mxu0 %v2166
      %2283 = vmatpush.msra.mxu0 %v2163
      %2284 = vmatpush.msra.mxu0 %v2160
      %2285 = vmatpush.msra.mxu0 %v2157
      %2286 = vmatpush.msra.mxu0 %v2154
      %2287 = vmatpush.msra.mxu0 %v2151
      %2288 = vmatmul.f32.gmra.mxu0 %v2212
      %v2289 = vpop.f32.mrf.mxu0
      %v2290 = vadd.f32 0.0, %v2289
      %2291 = vmatmul.f32.gmra.mxu0 %v2217
      %v2292 = vpop.f32.mrf.mxu0
      %v2293 = vadd.f32 0.0, %v2292
      %2294 = vdwg.mxu0
      %2295 = vmatpush.msra.mxu0 0.0
      %2296 = vmatpush.msra.mxu0 0.0
      %2297 = vmatpush.msra.mxu0 0.0
      %2298 = vmatpush.msra.mxu0 0.0
      %2299 = vmatpush.msra.mxu0 0.0
      %2300 = vmatpush.msra.mxu0 0.0
      %2301 = vmatpush.msra.mxu0 0.0
      %2302 = vmatpush.msra.mxu0 0.0
      %2303 = vmatpush.msra.mxu0 0.0
      %2304 = vmatpush.msra.mxu0 0.0
      %2305 = vmatpush.msra.mxu0 0.0
      %2306 = vmatpush.msra.mxu0 0.0
      %2307 = vmatpush.msra.mxu0 0.0
      %2308 = vmatpush.msra.mxu0 0.0
      %2309 = vmatpush.msra.mxu0 %v2202
      %2310 = vmatpush.msra.mxu0 %v2199
      %2311 = vmatmul.f32.gmra.mxu0 %v2222
      %v2312 = vpop.f32.mrf.mxu0
      %v2313 = vadd.f32 %v2290, %v2312
      %2314 = vmatmul.f32.gmra.mxu0 %v2224
      %v2315 = vpop.f32.mrf.mxu0
      %v2316 = vadd.f32 %v2293, %v2315
      %2317 = vdwg.mxu0
      %2318 = vmatpush.msra.mxu0 %v2197
      %2319 = vmatpush.msra.mxu0 %v2194
      %2320 = vmatpush.msra.mxu0 %v2191
      %2321 = vmatpush.msra.mxu0 %v2188
      %2322 = vmatpush.msra.mxu0 %v2185
      %2323 = vmatpush.msra.mxu0 %v2182
      %2324 = vmatpush.msra.mxu0 %v2179
      %2325 = vmatpush.msra.mxu0 %v2176
      %2326 = vmatpush.msra.mxu0 %v2173
      %2327 = vmatpush.msra.mxu0 %v2170
      %2328 = vmatpush.msra.mxu0 %v2167
      %2329 = vmatpush.msra.mxu0 %v2164
      %2330 = vmatpush.msra.mxu0 %v2161
      %2331 = vmatpush.msra.mxu0 %v2158
      %2332 = vmatpush.msra.mxu0 %v2155
      %2333 = vmatpush.msra.mxu0 %v2152
      %2334 = vmatmul.f32.gmra.mxu0 %v2212
      %v2335 = vpop.f32.mrf.mxu0
      %v2336 = vadd.f32 0.0, %v2335
      %2337 = vmatmul.f32.gmra.mxu0 %v2217
      %v2338 = vpop.f32.mrf.mxu0
      %v2339 = vadd.f32 0.0, %v2338
      %2340 = vdwg.mxu0
      %2341 = vmatpush.msra.mxu0 0.0
      %2342 = vmatpush.msra.mxu0 0.0
      %2343 = vmatpush.msra.mxu0 0.0
      %2344 = vmatpush.msra.mxu0 0.0
      %2345 = vmatpush.msra.mxu0 0.0
      %2346 = vmatpush.msra.mxu0 0.0
      %2347 = vmatpush.msra.mxu0 0.0
      %2348 = vmatpush.msra.mxu0 0.0
      %2349 = vmatpush.msra.mxu0 0.0
      %2350 = vmatpush.msra.mxu0 0.0
      %2351 = vmatpush.msra.mxu0 0.0
      %2352 = vmatpush.msra.mxu0 0.0
      %2353 = vmatpush.msra.mxu0 0.0
      %2354 = vmatpush.msra.mxu0 0.0
      %2355 = vmatpush.msra.mxu0 %v2203
      %2356 = vmatpush.msra.mxu0 %v2200
      %2357 = vmatmul.f32.gmra.mxu0 %v2222
      %v2358 = vpop.f32.mrf.mxu0
      %v2359 = vadd.f32 %v2336, %v2358
      %2360 = vmatmul.f32.gmra.mxu0 %v2224
      %v2361 = vpop.f32.mrf.mxu0
      %v2362 = vadd.f32 %v2339, %v2361
      %2363 = vdwg.mxu0
      %v2364 = vsel %vm811, %v2091, 0
      %v2366 = vsel %vm811, %v2093, 0
      %2368 = vmatpush.msra.mxu0 %v2141
      %2369 = vmatpush.msra.mxu0 %v2138
      %2370 = vmatpush.msra.mxu0 %v2135
      %2371 = vmatpush.msra.mxu0 %v2132
      %2372 = vmatpush.msra.mxu0 %v2129
      %2373 = vmatpush.msra.mxu0 %v2126
      %2374 = vmatpush.msra.mxu0 %v2123
      %2375 = vmatpush.msra.mxu0 %v2120
      %2376 = vmatpush.msra.mxu0 %v2117
      %2377 = vmatpush.msra.mxu0 %v2114
      %2378 = vmatpush.msra.mxu0 %v2111
      %2379 = vmatpush.msra.mxu0 %v2108
      %2380 = vmatpush.msra.mxu0 %v2105
      %2381 = vmatpush.msra.mxu0 %v2102
      %2382 = vmatpush.msra.mxu0 %v2099
      %2383 = vmatpush.msra.mxu0 %v2096
      %2384 = vmatmul.f32.gmra.mxu0 %v2090
      %v2385 = vpop.f32.mrf.mxu0
      %v2386 = vadd.f32 %v2267, %v2385
      %2387 = vmatmul.f32.gmra.mxu0 %v2092
      %v2388 = vpop.f32.mrf.mxu0
      %v2389 = vadd.f32 %v2270, %v2388
      %2390 = vdwg.mxu0
      %2391 = vmatpush.msra.mxu0 0.0
      %2392 = vmatpush.msra.mxu0 0.0
      %2393 = vmatpush.msra.mxu0 0.0
      %2394 = vmatpush.msra.mxu0 0.0
      %2395 = vmatpush.msra.mxu0 0.0
      %2396 = vmatpush.msra.mxu0 0.0
      %2397 = vmatpush.msra.mxu0 0.0
      %2398 = vmatpush.msra.mxu0 0.0
      %2399 = vmatpush.msra.mxu0 0.0
      %2400 = vmatpush.msra.mxu0 0.0
      %2401 = vmatpush.msra.mxu0 0.0
      %2402 = vmatpush.msra.mxu0 0.0
      %2403 = vmatpush.msra.mxu0 0.0
      %2404 = vmatpush.msra.mxu0 0.0
      %2405 = vmatpush.msra.mxu0 %v2147
      %2406 = vmatpush.msra.mxu0 %v2144
      %2407 = vmatmul.f32.gmra.mxu0 %v2364
      %v2408 = vpop.f32.mrf.mxu0
      %v2409 = vadd.f32 %v2386, %v2408
      %2410 = vmatmul.f32.gmra.mxu0 %v2366
      %v2411 = vpop.f32.mrf.mxu0
      %v2412 = vadd.f32 %v2389, %v2411
      %2413 = vdwg.mxu0
      %2414 = vmatpush.msra.mxu0 %v2142
      %2415 = vmatpush.msra.mxu0 %v2139
      %2416 = vmatpush.msra.mxu0 %v2136
      %2417 = vmatpush.msra.mxu0 %v2133
      %2418 = vmatpush.msra.mxu0 %v2130
      %2419 = vmatpush.msra.mxu0 %v2127
      %2420 = vmatpush.msra.mxu0 %v2124
      %2421 = vmatpush.msra.mxu0 %v2121
      %2422 = vmatpush.msra.mxu0 %v2118
      %2423 = vmatpush.msra.mxu0 %v2115
      %2424 = vmatpush.msra.mxu0 %v2112
      %2425 = vmatpush.msra.mxu0 %v2109
      %2426 = vmatpush.msra.mxu0 %v2106
      %2427 = vmatpush.msra.mxu0 %v2103
      %2428 = vmatpush.msra.mxu0 %v2100
      %2429 = vmatpush.msra.mxu0 %v2097
      %2430 = vmatmul.f32.gmra.mxu0 %v2090
      %v2431 = vpop.f32.mrf.mxu0
      %v2432 = vadd.f32 %v2313, %v2431
      %2433 = vmatmul.f32.gmra.mxu0 %v2092
      %v2434 = vpop.f32.mrf.mxu0
      %v2435 = vadd.f32 %v2316, %v2434
      %2436 = vdwg.mxu0
      %2437 = vmatpush.msra.mxu0 0.0
      %2438 = vmatpush.msra.mxu0 0.0
      %2439 = vmatpush.msra.mxu0 0.0
      %2440 = vmatpush.msra.mxu0 0.0
      %2441 = vmatpush.msra.mxu0 0.0
      %2442 = vmatpush.msra.mxu0 0.0
      %2443 = vmatpush.msra.mxu0 0.0
      %2444 = vmatpush.msra.mxu0 0.0
      %2445 = vmatpush.msra.mxu0 0.0
      %2446 = vmatpush.msra.mxu0 0.0
      %2447 = vmatpush.msra.mxu0 0.0
      %2448 = vmatpush.msra.mxu0 0.0
      %2449 = vmatpush.msra.mxu0 0.0
      %2450 = vmatpush.msra.mxu0 0.0
      %2451 = vmatpush.msra.mxu0 %v2148
      %2452 = vmatpush.msra.mxu0 %v2145
      %2453 = vmatmul.f32.gmra.mxu0 %v2364
      %v2454 = vpop.f32.mrf.mxu0
      %v2455 = vadd.f32 %v2432, %v2454
      %2456 = vmatmul.f32.gmra.mxu0 %v2366
      %v2457 = vpop.f32.mrf.mxu0
      %v2458 = vadd.f32 %v2435, %v2457
      %2459 = vdwg.mxu0
      %2460 = vmatpush.msra.mxu0 %v2143
      %2461 = vmatpush.msra.mxu0 %v2140
      %2462 = vmatpush.msra.mxu0 %v2137
      %2463 = vmatpush.msra.mxu0 %v2134
      %2464 = vmatpush.msra.mxu0 %v2131
      %2465 = vmatpush.msra.mxu0 %v2128
      %2466 = vmatpush.msra.mxu0 %v2125
      %2467 = vmatpush.msra.mxu0 %v2122
      %2468 = vmatpush.msra.mxu0 %v2119
      %2469 = vmatpush.msra.mxu0 %v2116
      %2470 = vmatpush.msra.mxu0 %v2113
      %2471 = vmatpush.msra.mxu0 %v2110
      %2472 = vmatpush.msra.mxu0 %v2107
      %2473 = vmatpush.msra.mxu0 %v2104
      %2474 = vmatpush.msra.mxu0 %v2101
      %2475 = vmatpush.msra.mxu0 %v2098
      %2476 = vmatmul.f32.gmra.mxu0 %v2090
      %v2477 = vpop.f32.mrf.mxu0
      %v2478 = vadd.f32 %v2359, %v2477
      %2479 = vmatmul.f32.gmra.mxu0 %v2092
      %v2480 = vpop.f32.mrf.mxu0
      %v2481 = vadd.f32 %v2362, %v2480
      %2482 = vdwg.mxu0
      %2483 = vmatpush.msra.mxu0 0.0
      %2484 = vmatpush.msra.mxu0 0.0
      %2485 = vmatpush.msra.mxu0 0.0
      %2486 = vmatpush.msra.mxu0 0.0
      %2487 = vmatpush.msra.mxu0 0.0
      %2488 = vmatpush.msra.mxu0 0.0
      %2489 = vmatpush.msra.mxu0 0.0
      %2490 = vmatpush.msra.mxu0 0.0
      %2491 = vmatpush.msra.mxu0 0.0
      %2492 = vmatpush.msra.mxu0 0.0
      %2493 = vmatpush.msra.mxu0 0.0
      %2494 = vmatpush.msra.mxu0 0.0
      %2495 = vmatpush.msra.mxu0 0.0
      %2496 = vmatpush.msra.mxu0 0.0
      %2497 = vmatpush.msra.mxu0 %v2149
      %2498 = vmatpush.msra.mxu0 %v2146
      %2499 = vmatmul.f32.gmra.mxu0 %v2364
      %v2500 = vpop.f32.mrf.mxu0
      %v2501 = vadd.f32 %v2478, %v2500
      %2502 = vmatmul.f32.gmra.mxu0 %v2366
      %v2503 = vpop.f32.mrf.mxu0
      %v2504 = vadd.f32 %v2481, %v2503
      %2505 = vdwg.mxu0
      %v2506 = vld [vmem:[%s1128 + $0x28] sm:$0xff]
      %v2507 = vld [vmem:[%s1128 + $0x30] sm:$0xff]
      %v2508 = vld [vmem:[%s1128 + $0x38] sm:$0xff]
      %v2509 = vld [vmem:[%s1128 + $0x80] sm:$0xff]
      %v2510 = vld [vmem:[%s1128 + $0x88] sm:$0xff]
      %v2511 = vld [vmem:[%s1128 + $0x90] sm:$0xff]
      %v2512 = vld [vmem:[%s1128 + $0xd8] sm:$0xff]
      %v2513 = vld [vmem:[%s1128 + $0xe0] sm:$0xff]
      %v2514 = vld [vmem:[%s1128 + $0xe8] sm:$0xff]
      %v2515 = vld [vmem:[%s1128 + $0x130] sm:$0xff]
      %v2516 = vld [vmem:[%s1128 + $0x138] sm:$0xff]
      %v2517 = vld [vmem:[%s1128 + $0x140] sm:$0xff]
      %v2518 = vld [vmem:[%s1128 + $0x188] sm:$0xff]
      %v2519 = vld [vmem:[%s1128 + $0x190] sm:$0xff]
      %v2520 = vld [vmem:[%s1128 + $0x198] sm:$0xff]
      %v2521 = vld [vmem:[%s1128 + $0x1e0] sm:$0xff]
      %v2522 = vld [vmem:[%s1128 + $0x1e8] sm:$0xff]
      %v2523 = vld [vmem:[%s1128 + $0x1f0] sm:$0xff]
      %v2524 = vld [vmem:[%s1128 + $0x238] sm:$0xff]
      %v2525 = vld [vmem:[%s1128 + $0x240] sm:$0xff]
      %v2526 = vld [vmem:[%s1128 + $0x248] sm:$0xff]
      %v2527 = vld [vmem:[%s1128 + $0x290] sm:$0xff]
      %v2528 = vld [vmem:[%s1128 + $0x298] sm:$0xff]
      %v2529 = vld [vmem:[%s1128 + $0x2a0] sm:$0xff]
      %v2530 = vld [vmem:[%s1128 + $0x2e8] sm:$0xff]
      %v2531 = vld [vmem:[%s1128 + $0x2f0] sm:$0xff]
      %v2532 = vld [vmem:[%s1128 + $0x2f8] sm:$0xff]
      %v2533 = vld [vmem:[%s1128 + $0x340] sm:$0xff]
      %v2534 = vld [vmem:[%s1128 + $0x348] sm:$0xff]
      %v2535 = vld [vmem:[%s1128 + $0x350] sm:$0xff]
      %v2536 = vld [vmem:[%s1128 + $0x398] sm:$0xff]
      %v2537 = vld [vmem:[%s1128 + $0x3a0] sm:$0xff]
      %v2538 = vld [vmem:[%s1128 + $0x3a8] sm:$0xff]
      %v2539 = vld [vmem:[%s1128 + $0x3f0] sm:$0xff]
      %v2540 = vld [vmem:[%s1128 + $0x3f8] sm:$0xff]
      %v2541 = vld [vmem:[%s1128 + $0x400] sm:$0xff]
      %v2542 = vld [vmem:[%s1128 + $0x448] sm:$0xff]
      %v2543 = vld [vmem:[%s1128 + $0x450] sm:$0xff]
      %v2544 = vld [vmem:[%s1128 + $0x458] sm:$0xff]
      %v2545 = vld [vmem:[%s1128 + $0x4a0] sm:$0xff]
      %v2546 = vld [vmem:[%s1128 + $0x4a8] sm:$0xff]
      %v2547 = vld [vmem:[%s1128 + $0x4b0] sm:$0xff]
      %v2548 = vld [vmem:[%s1128 + $0x4f8] sm:$0xff]
      %v2549 = vld [vmem:[%s1128 + $0x500] sm:$0xff]
      %v2550 = vld [vmem:[%s1128 + $0x508] sm:$0xff]
      %v2551 = vld [vmem:[%s1128 + $0x550] sm:$0xff]
      %v2552 = vld [vmem:[%s1128 + $0x558] sm:$0xff]
      %v2553 = vld [vmem:[%s1128 + $0x560] sm:$0xff]
      %v2554 = vld [vmem:[%s1128 + $0x5a8] sm:$0xff]
      %v2555 = vld [vmem:[%s1128 + $0x5b0] sm:$0xff]
      %v2556 = vld [vmem:[%s1128 + $0x5b8] sm:$0xff]
      %v2557 = vld [vmem:[%s1128 + $0x600] sm:$0xff]
      %v2558 = vld [vmem:[%s1128 + $0x608] sm:$0xff]
      %v2559 = vld [vmem:[%s1128 + $0x610] sm:$0xff]
      %v2560 = vrot.slane %v2090, 2
      %v2561 = vrot.slane %v2092, 2
      %v2562 = vsel %vm1147, %v2560, %v2561
      %v2563 = vrot.slane %v2091, 2
      %v2564 = vrot.slane %v2093, 2
      %v2565 = vsel %vm1147, %v2563, %v2564
      %v2566 = vrot.slane %v2094, 2
      %v2567 = vsel %vm1147, %v2561, %v2566
      %v2568 = vrot.slane %v2095, 2
      %v2569 = vsel %vm1147, %v2564, %v2568
      %v2572 = vsel %vm811, %v2565, 0
      %v2574 = vsel %vm811, %v2569, 0
      %2576 = vmatpush.msra.mxu0 %v2551
      %2577 = vmatpush.msra.mxu0 %v2548
      %2578 = vmatpush.msra.mxu0 %v2545
      %2579 = vmatpush.msra.mxu0 %v2542
      %2580 = vmatpush.msra.mxu0 %v2539
      %2581 = vmatpush.msra.mxu0 %v2536
      %2582 = vmatpush.msra.mxu0 %v2533
      %2583 = vmatpush.msra.mxu0 %v2530
      %2584 = vmatpush.msra.mxu0 %v2527
      %2585 = vmatpush.msra.mxu0 %v2524
      %2586 = vmatpush.msra.mxu0 %v2521
      %2587 = vmatpush.msra.mxu0 %v2518
      %2588 = vmatpush.msra.mxu0 %v2515
      %2589 = vmatpush.msra.mxu0 %v2512
      %2590 = vmatpush.msra.mxu0 %v2509
      %2591 = vmatpush.msra.mxu0 %v2506
      %2592 = vmatmul.f32.gmra.mxu0 %v2562
      %v2593 = vpop.f32.mrf.mxu0
      %v2594 = vadd.f32 0.0, %v2593
      %2595 = vmatmul.f32.gmra.mxu0 %v2567
      %v2596 = vpop.f32.mrf.mxu0
      %v2597 = vadd.f32 0.0, %v2596
      %2598 = vdwg.mxu0
      %2599 = vmatpush.msra.mxu0 0.0
      %2600 = vmatpush.msra.mxu0 0.0
      %2601 = vmatpush.msra.mxu0 0.0
      %2602 = vmatpush.msra.mxu0 0.0
      %2603 = vmatpush.msra.mxu0 0.0
      %2604 = vmatpush.msra.mxu0 0.0
      %2605 = vmatpush.msra.mxu0 0.0
      %2606 = vmatpush.msra.mxu0 0.0
      %2607 = vmatpush.msra.mxu0 0.0
      %2608 = vmatpush.msra.mxu0 0.0
      %2609 = vmatpush.msra.mxu0 0.0
      %2610 = vmatpush.msra.mxu0 0.0
      %2611 = vmatpush.msra.mxu0 0.0
      %2612 = vmatpush.msra.mxu0 0.0
      %2613 = vmatpush.msra.mxu0 %v2557
      %2614 = vmatpush.msra.mxu0 %v2554
      %2615 = vmatmul.f32.gmra.mxu0 %v2572
      %v2616 = vpop.f32.mrf.mxu0
      %v2617 = vadd.f32 %v2594, %v2616
      %2618 = vmatmul.f32.gmra.mxu0 %v2574
      %v2619 = vpop.f32.mrf.mxu0
      %v2620 = vadd.f32 %v2597, %v2619
      %2621 = vdwg.mxu0
      %2622 = vmatpush.msra.mxu0 %v2552
      %2623 = vmatpush.msra.mxu0 %v2549
      %2624 = vmatpush.msra.mxu0 %v2546
      %2625 = vmatpush.msra.mxu0 %v2543
      %2626 = vmatpush.msra.mxu0 %v2540
      %2627 = vmatpush.msra.mxu0 %v2537
      %2628 = vmatpush.msra.mxu0 %v2534
      %2629 = vmatpush.msra.mxu0 %v2531
      %2630 = vmatpush.msra.mxu0 %v2528
      %2631 = vmatpush.msra.mxu0 %v2525
      %2632 = vmatpush.msra.mxu0 %v2522
      %2633 = vmatpush.msra.mxu0 %v2519
      %2634 = vmatpush.msra.mxu0 %v2516
      %2635 = vmatpush.msra.mxu0 %v2513
      %2636 = vmatpush.msra.mxu0 %v2510
      %2637 = vmatpush.msra.mxu0 %v2507
      %2638 = vmatmul.f32.gmra.mxu0 %v2562
      %v2639 = vpop.f32.mrf.mxu0
      %v2640 = vadd.f32 0.0, %v2639
      %2641 = vmatmul.f32.gmra.mxu0 %v2567
      %v2642 = vpop.f32.mrf.mxu0
      %v2643 = vadd.f32 0.0, %v2642
      %2644 = vdwg.mxu0
      %2645 = vmatpush.msra.mxu0 0.0
      %2646 = vmatpush.msra.mxu0 0.0
      %2647 = vmatpush.msra.mxu0 0.0
      %2648 = vmatpush.msra.mxu0 0.0
      %2649 = vmatpush.msra.mxu0 0.0
      %2650 = vmatpush.msra.mxu0 0.0
      %2651 = vmatpush.msra.mxu0 0.0
      %2652 = vmatpush.msra.mxu0 0.0
      %2653 = vmatpush.msra.mxu0 0.0
      %2654 = vmatpush.msra.mxu0 0.0
      %2655 = vmatpush.msra.mxu0 0.0
      %2656 = vmatpush.msra.mxu0 0.0
      %2657 = vmatpush.msra.mxu0 0.0
      %2658 = vmatpush.msra.mxu0 0.0
      %2659 = vmatpush.msra.mxu0 %v2558
      %2660 = vmatpush.msra.mxu0 %v2555
      %2661 = vmatmul.f32.gmra.mxu0 %v2572
      %v2662 = vpop.f32.mrf.mxu0
      %v2663 = vadd.f32 %v2640, %v2662
      %2664 = vmatmul.f32.gmra.mxu0 %v2574
      %v2665 = vpop.f32.mrf.mxu0
      %v2666 = vadd.f32 %v2643, %v2665
      %2667 = vdwg.mxu0
      %2668 = vmatpush.msra.mxu0 %v2553
      %2669 = vmatpush.msra.mxu0 %v2550
      %2670 = vmatpush.msra.mxu0 %v2547
      %2671 = vmatpush.msra.mxu0 %v2544
      %2672 = vmatpush.msra.mxu0 %v2541
      %2673 = vmatpush.msra.mxu0 %v2538
      %2674 = vmatpush.msra.mxu0 %v2535
      %2675 = vmatpush.msra.mxu0 %v2532
      %2676 = vmatpush.msra.mxu0 %v2529
      %2677 = vmatpush.msra.mxu0 %v2526
      %2678 = vmatpush.msra.mxu0 %v2523
      %2679 = vmatpush.msra.mxu0 %v2520
      %2680 = vmatpush.msra.mxu0 %v2517
      %2681 = vmatpush.msra.mxu0 %v2514
      %2682 = vmatpush.msra.mxu0 %v2511
      %2683 = vmatpush.msra.mxu0 %v2508
      %2684 = vmatmul.f32.gmra.mxu0 %v2562
      %v2685 = vpop.f32.mrf.mxu0
      %v2686 = vadd.f32 0.0, %v2685
      %2687 = vmatmul.f32.gmra.mxu0 %v2567
      %v2688 = vpop.f32.mrf.mxu0
      %v2689 = vadd.f32 0.0, %v2688
      %2690 = vdwg.mxu0
      %2691 = vmatpush.msra.mxu0 0.0
      %2692 = vmatpush.msra.mxu0 0.0
      %2693 = vmatpush.msra.mxu0 0.0
      %2694 = vmatpush.msra.mxu0 0.0
      %2695 = vmatpush.msra.mxu0 0.0
      %2696 = vmatpush.msra.mxu0 0.0
      %2697 = vmatpush.msra.mxu0 0.0
      %2698 = vmatpush.msra.mxu0 0.0
      %2699 = vmatpush.msra.mxu0 0.0
      %2700 = vmatpush.msra.mxu0 0.0
      %2701 = vmatpush.msra.mxu0 0.0
      %2702 = vmatpush.msra.mxu0 0.0
      %2703 = vmatpush.msra.mxu0 0.0
      %2704 = vmatpush.msra.mxu0 0.0
      %2705 = vmatpush.msra.mxu0 %v2559
      %2706 = vmatpush.msra.mxu0 %v2556
      %2707 = vmatmul.f32.gmra.mxu0 %v2572
      %v2708 = vpop.f32.mrf.mxu0
      %v2709 = vadd.f32 %v2686, %v2708
      %2710 = vmatmul.f32.gmra.mxu0 %v2574
      %v2711 = vpop.f32.mrf.mxu0
      %v2712 = vadd.f32 %v2689, %v2711
      %2713 = vdwg.mxu0
      %v2714 = vadd.f32 %v2409, %v2617
      %v2715 = vadd.f32 %v2455, %v2663
      %v2716 = vadd.f32 %v2501, %v2709
      %v2717 = vadd.f32 %v2412, %v2620
      %v2718 = vadd.f32 %v2458, %v2666
      %v2719 = vadd.f32 %v2504, %v2712
      %v2720 = vadd.f32 %v2056, %v2714
      %v2721 = vadd.f32 %v2060, %v2717
      %v2722 = vadd.f32 %v2057, %v2715
      %v2723 = vadd.f32 %v2061, %v2718
      %v2724 = vadd.f32 %v2058, %v2716
      %v2725 = vadd.f32 %v2062, %v2719
      %v2726 = vld [vmem:[%s6 + $0x2] sm:$0x1]
      %v2727 = vperm.slane %v2726, 0
      %v2728 = vadd.f32 %v2720, %v2727
      %v2729 = vadd.f32 %v2721, %v2727
      %v2730 = vmax.f32 %v2728, 0.0
      %v2731 = vmax.f32 %v2729, 0.0
      %v2734 = vrot.slane %v2730, 7
      %v2735 = vrot.slane %v2731, 7
      %v2736 = vsel %vm942, %v2734, %v2735
      %2737 = vrot.lane.b32.xlu0 %v2734, 8
      %v2738 = vpop.permute.xlu0 %2737
      %2739 = vrot.lane.b32.xlu0 %v2736, 8
      %v2740 = vpop.permute.xlu0 %2739
      %2741 = vrot.lane.b32.xlu0 %v2735, 8
      %v2742 = vpop.permute.xlu0 %2741
      %s2746 = scalar_lea.vmem [#allocation2], 144
      %2747 = vst.msk [vmem:[%s2746] sm:$0xfe] %vm955, %v2738
      %2748 = vst.msk [vmem:[%s2746 + $0x8] sm:$0xfe] %vm957, %v2738
      %2749 = vst.msk [vmem:[%s2746 + $0x10] sm:$0xff] %vm959, %v2740
      %2750 = vst.msk [vmem:[%s2746 + $0x18] sm:$0xff] %vm343, %v2740
      %2751 = vst.msk [vmem:[%s2746 + $0x20] sm:$0x1] %vm962, %v2742
      %2752 = vst.msk [vmem:[%s2746 + $0x28] sm:$0x1] %vm964, %v2742
      %v2753 = vld [vmem:[%s2746] sm:$0xff]
      %v2754 = vld [vmem:[%s2746 + $0x8] sm:$0xff]
      %v2755 = vld [vmem:[%s2746 + $0x10] sm:$0xff]
      %v2756 = vld [vmem:[%s2746 + $0x18] sm:$0xff]
      %v2757 = vld [vmem:[%s2746 + $0x20] sm:$0x3]
      %v2758 = vld [vmem:[%s2746 + $0x28] sm:$0x3]
      %v2759 = vld [vmem:[%s4 + $0x40] sm:$0xff]
      %v2760 = vld [vmem:[%s4 + $0x48] sm:$0xff]
      %v2761 = vld [vmem:[%s4 + $0x98] sm:$0xff]
      %v2762 = vld [vmem:[%s4 + $0xa0] sm:$0xff]
      %v2763 = vld [vmem:[%s4 + $0xf0] sm:$0xff]
      %v2764 = vld [vmem:[%s4 + $0xf8] sm:$0xff]
      %v2765 = vld [vmem:[%s4 + $0x148] sm:$0xff]
      %v2766 = vld [vmem:[%s4 + $0x150] sm:$0xff]
      %v2767 = vld [vmem:[%s4 + $0x1a0] sm:$0xff]
      %v2768 = vld [vmem:[%s4 + $0x1a8] sm:$0xff]
      %v2769 = vld [vmem:[%s4 + $0x1f8] sm:$0xff]
      %v2770 = vld [vmem:[%s4 + $0x200] sm:$0xff]
      %v2771 = vld [vmem:[%s4 + $0x250] sm:$0xff]
      %v2772 = vld [vmem:[%s4 + $0x258] sm:$0xff]
      %v2773 = vld [vmem:[%s4 + $0x2a8] sm:$0xff]
      %v2774 = vld [vmem:[%s4 + $0x2b0] sm:$0xff]
      %v2775 = vld [vmem:[%s4 + $0x300] sm:$0xff]
      %v2776 = vld [vmem:[%s4 + $0x308] sm:$0xff]
      %v2777 = vld [vmem:[%s4 + $0x358] sm:$0xff]
      %v2778 = vld [vmem:[%s4 + $0x360] sm:$0xff]
      %v2779 = vld [vmem:[%s4 + $0x3b0] sm:$0xff]
      %v2780 = vld [vmem:[%s4 + $0x3b8] sm:$0xff]
      %v2781 = vld [vmem:[%s4 + $0x408] sm:$0xff]
      %v2782 = vld [vmem:[%s4 + $0x410] sm:$0xff]
      %v2783 = vld [vmem:[%s4 + $0x460] sm:$0xff]
      %v2784 = vld [vmem:[%s4 + $0x468] sm:$0xff]
      %v2785 = vld [vmem:[%s4 + $0x4b8] sm:$0xff]
      %v2786 = vld [vmem:[%s4 + $0x4c0] sm:$0xff]
      %v2787 = vld [vmem:[%s4 + $0x510] sm:$0xff]
      %v2788 = vld [vmem:[%s4 + $0x518] sm:$0xff]
      %v2789 = vld [vmem:[%s4 + $0x568] sm:$0xff]
      %v2790 = vld [vmem:[%s4 + $0x570] sm:$0xff]
      %v2791 = vld [vmem:[%s4 + $0x5c0] sm:$0xff]
      %v2792 = vld [vmem:[%s4 + $0x5c8] sm:$0xff]
      %v2793 = vld [vmem:[%s4 + $0x618] sm:$0xff]
      %v2794 = vld [vmem:[%s4 + $0x620] sm:$0xff]
      %v2795 = vld [vmem:[%s990 + $0x40] sm:$0xff]
      %v2796 = vld [vmem:[%s990 + $0x48] sm:$0xff]
      %v2797 = vld [vmem:[%s990 + $0x98] sm:$0xff]
      %v2798 = vld [vmem:[%s990 + $0xa0] sm:$0xff]
      %v2799 = vld [vmem:[%s990 + $0xf0] sm:$0xff]
      %v2800 = vld [vmem:[%s990 + $0xf8] sm:$0xff]
      %v2801 = vld [vmem:[%s990 + $0x148] sm:$0xff]
      %v2802 = vld [vmem:[%s990 + $0x150] sm:$0xff]
      %v2803 = vld [vmem:[%s990 + $0x1a0] sm:$0xff]
      %v2804 = vld [vmem:[%s990 + $0x1a8] sm:$0xff]
      %v2805 = vld [vmem:[%s990 + $0x1f8] sm:$0xff]
      %v2806 = vld [vmem:[%s990 + $0x200] sm:$0xff]
      %v2807 = vld [vmem:[%s990 + $0x250] sm:$0xff]
      %v2808 = vld [vmem:[%s990 + $0x258] sm:$0xff]
      %v2809 = vld [vmem:[%s990 + $0x2a8] sm:$0xff]
      %v2810 = vld [vmem:[%s990 + $0x2b0] sm:$0xff]
      %v2811 = vld [vmem:[%s990 + $0x300] sm:$0xff]
      %v2812 = vld [vmem:[%s990 + $0x308] sm:$0xff]
      %v2813 = vld [vmem:[%s990 + $0x358] sm:$0xff]
      %v2814 = vld [vmem:[%s990 + $0x360] sm:$0xff]
      %v2815 = vld [vmem:[%s990 + $0x3b0] sm:$0xff]
      %v2816 = vld [vmem:[%s990 + $0x3b8] sm:$0xff]
      %v2817 = vld [vmem:[%s990 + $0x408] sm:$0xff]
      %v2818 = vld [vmem:[%s990 + $0x410] sm:$0xff]
      %v2819 = vld [vmem:[%s990 + $0x460] sm:$0xff]
      %v2820 = vld [vmem:[%s990 + $0x468] sm:$0xff]
      %v2821 = vld [vmem:[%s990 + $0x4b8] sm:$0xff]
      %v2822 = vld [vmem:[%s990 + $0x4c0] sm:$0xff]
      %v2823 = vld [vmem:[%s990 + $0x510] sm:$0xff]
      %v2824 = vld [vmem:[%s990 + $0x518] sm:$0xff]
      %v2825 = vld [vmem:[%s990 + $0x568] sm:$0xff]
      %v2826 = vld [vmem:[%s990 + $0x570] sm:$0xff]
      %v2827 = vld [vmem:[%s990 + $0x5c0] sm:$0xff]
      %v2828 = vld [vmem:[%s990 + $0x5c8] sm:$0xff]
      %v2829 = vld [vmem:[%s990 + $0x618] sm:$0xff]
      %v2830 = vld [vmem:[%s990 + $0x620] sm:$0xff]
      %v2837 = vrot.slane %v2753, 1
      %v2838 = vrot.slane %v2755, 1
      %v2839 = vsel %vm1015, %v2837, %v2838
      %v2840 = vrot.slane %v2754, 1
      %v2841 = vrot.slane %v2756, 1
      %v2842 = vsel %vm1015, %v2840, %v2841
      %v2843 = vrot.slane %v2757, 1
      %v2844 = vsel %vm1015, %v2838, %v2843
      %v2845 = vrot.slane %v2758, 1
      %v2846 = vsel %vm1015, %v2841, %v2845
      %v2849 = vsel %vm811, %v2842, 0
      %v2851 = vsel %vm811, %v2846, 0
      %2853 = vmatpush.msra.mxu0 %v2825
      %2854 = vmatpush.msra.mxu0 %v2823
      %2855 = vmatpush.msra.mxu0 %v2821
      %2856 = vmatpush.msra.mxu0 %v2819
      %2857 = vmatpush.msra.mxu0 %v2817
      %2858 = vmatpush.msra.mxu0 %v2815
      %2859 = vmatpush.msra.mxu0 %v2813
      %2860 = vmatpush.msra.mxu0 %v2811
      %2861 = vmatpush.msra.mxu0 %v2809
      %2862 = vmatpush.msra.mxu0 %v2807
      %2863 = vmatpush.msra.mxu0 %v2805
      %2864 = vmatpush.msra.mxu0 %v2803
      %2865 = vmatpush.msra.mxu0 %v2801
      %2866 = vmatpush.msra.mxu0 %v2799
      %2867 = vmatpush.msra.mxu0 %v2797
      %2868 = vmatpush.msra.mxu0 %v2795
      %2869 = vmatmul.f32.gmra.mxu0 %v2839
      %v2870 = vpop.f32.mrf.mxu0
      %v2871 = vadd.f32 0.0, %v2870
      %2872 = vmatmul.f32.gmra.mxu0 %v2844
      %v2873 = vpop.f32.mrf.mxu0
      %v2874 = vadd.f32 0.0, %v2873
      %2875 = vdwg.mxu0
      %2876 = vmatpush.msra.mxu0 0.0
      %2877 = vmatpush.msra.mxu0 0.0
      %2878 = vmatpush.msra.mxu0 0.0
      %2879 = vmatpush.msra.mxu0 0.0
      %2880 = vmatpush.msra.mxu0 0.0
      %2881 = vmatpush.msra.mxu0 0.0
      %2882 = vmatpush.msra.mxu0 0.0
      %2883 = vmatpush.msra.mxu0 0.0
      %2884 = vmatpush.msra.mxu0 0.0
      %2885 = vmatpush.msra.mxu0 0.0
      %2886 = vmatpush.msra.mxu0 0.0
      %2887 = vmatpush.msra.mxu0 0.0
      %2888 = vmatpush.msra.mxu0 0.0
      %2889 = vmatpush.msra.mxu0 0.0
      %2890 = vmatpush.msra.mxu0 %v2829
      %2891 = vmatpush.msra.mxu0 %v2827
      %2892 = vmatmul.f32.gmra.mxu0 %v2849
      %v2893 = vpop.f32.mrf.mxu0
      %v2894 = vadd.f32 %v2871, %v2893
      %2895 = vmatmul.f32.gmra.mxu0 %v2851
      %v2896 = vpop.f32.mrf.mxu0
      %v2897 = vadd.f32 %v2874, %v2896
      %2898 = vdwg.mxu0
      %2899 = vmatpush.msra.mxu0 %v2826
      %2900 = vmatpush.msra.mxu0 %v2824
      %2901 = vmatpush.msra.mxu0 %v2822
      %2902 = vmatpush.msra.mxu0 %v2820
      %2903 = vmatpush.msra.mxu0 %v2818
      %2904 = vmatpush.msra.mxu0 %v2816
      %2905 = vmatpush.msra.mxu0 %v2814
      %2906 = vmatpush.msra.mxu0 %v2812
      %2907 = vmatpush.msra.mxu0 %v2810
      %2908 = vmatpush.msra.mxu0 %v2808
      %2909 = vmatpush.msra.mxu0 %v2806
      %2910 = vmatpush.msra.mxu0 %v2804
      %2911 = vmatpush.msra.mxu0 %v2802
      %2912 = vmatpush.msra.mxu0 %v2800
      %2913 = vmatpush.msra.mxu0 %v2798
      %2914 = vmatpush.msra.mxu0 %v2796
      %2915 = vmatmul.f32.gmra.mxu0 %v2839
      %v2916 = vpop.f32.mrf.mxu0
      %v2917 = vadd.f32 0.0, %v2916
      %2918 = vmatmul.f32.gmra.mxu0 %v2844
      %v2919 = vpop.f32.mrf.mxu0
      %v2920 = vadd.f32 0.0, %v2919
      %2921 = vdwg.mxu0
      %2922 = vmatpush.msra.mxu0 0.0
      %2923 = vmatpush.msra.mxu0 0.0
      %2924 = vmatpush.msra.mxu0 0.0
      %2925 = vmatpush.msra.mxu0 0.0
      %2926 = vmatpush.msra.mxu0 0.0
      %2927 = vmatpush.msra.mxu0 0.0
      %2928 = vmatpush.msra.mxu0 0.0
      %2929 = vmatpush.msra.mxu0 0.0
      %2930 = vmatpush.msra.mxu0 0.0
      %2931 = vmatpush.msra.mxu0 0.0
      %2932 = vmatpush.msra.mxu0 0.0
      %2933 = vmatpush.msra.mxu0 0.0
      %2934 = vmatpush.msra.mxu0 0.0
      %2935 = vmatpush.msra.mxu0 0.0
      %2936 = vmatpush.msra.mxu0 %v2830
      %2937 = vmatpush.msra.mxu0 %v2828
      %2938 = vmatmul.f32.gmra.mxu0 %v2849
      %v2939 = vpop.f32.mrf.mxu0
      %v2940 = vadd.f32 %v2917, %v2939
      %2941 = vmatmul.f32.gmra.mxu0 %v2851
      %v2942 = vpop.f32.mrf.mxu0
      %v2943 = vadd.f32 %v2920, %v2942
      %2944 = vdwg.mxu0
      %v2945 = vsel %vm811, %v2754, 0
      %v2947 = vsel %vm811, %v2756, 0
      %2949 = vmatpush.msra.mxu0 %v2789
      %2950 = vmatpush.msra.mxu0 %v2787
      %2951 = vmatpush.msra.mxu0 %v2785
      %2952 = vmatpush.msra.mxu0 %v2783
      %2953 = vmatpush.msra.mxu0 %v2781
      %2954 = vmatpush.msra.mxu0 %v2779
      %2955 = vmatpush.msra.mxu0 %v2777
      %2956 = vmatpush.msra.mxu0 %v2775
      %2957 = vmatpush.msra.mxu0 %v2773
      %2958 = vmatpush.msra.mxu0 %v2771
      %2959 = vmatpush.msra.mxu0 %v2769
      %2960 = vmatpush.msra.mxu0 %v2767
      %2961 = vmatpush.msra.mxu0 %v2765
      %2962 = vmatpush.msra.mxu0 %v2763
      %2963 = vmatpush.msra.mxu0 %v2761
      %2964 = vmatpush.msra.mxu0 %v2759
      %2965 = vmatmul.f32.gmra.mxu0 %v2753
      %v2966 = vpop.f32.mrf.mxu0
      %v2967 = vadd.f32 %v2894, %v2966
      %2968 = vmatmul.f32.gmra.mxu0 %v2755
      %v2969 = vpop.f32.mrf.mxu0
      %v2970 = vadd.f32 %v2897, %v2969
      %2971 = vdwg.mxu0
      %2972 = vmatpush.msra.mxu0 0.0
      %2973 = vmatpush.msra.mxu0 0.0
      %2974 = vmatpush.msra.mxu0 0.0
      %2975 = vmatpush.msra.mxu0 0.0
      %2976 = vmatpush.msra.mxu0 0.0
      %2977 = vmatpush.msra.mxu0 0.0
      %2978 = vmatpush.msra.mxu0 0.0
      %2979 = vmatpush.msra.mxu0 0.0
      %2980 = vmatpush.msra.mxu0 0.0
      %2981 = vmatpush.msra.mxu0 0.0
      %2982 = vmatpush.msra.mxu0 0.0
      %2983 = vmatpush.msra.mxu0 0.0
      %2984 = vmatpush.msra.mxu0 0.0
      %2985 = vmatpush.msra.mxu0 0.0
      %2986 = vmatpush.msra.mxu0 %v2793
      %2987 = vmatpush.msra.mxu0 %v2791
      %2988 = vmatmul.f32.gmra.mxu0 %v2945
      %v2989 = vpop.f32.mrf.mxu0
      %v2990 = vadd.f32 %v2967, %v2989
      %2991 = vmatmul.f32.gmra.mxu0 %v2947
      %v2992 = vpop.f32.mrf.mxu0
      %v2993 = vadd.f32 %v2970, %v2992
      %2994 = vdwg.mxu0
      %2995 = vmatpush.msra.mxu0 %v2790
      %2996 = vmatpush.msra.mxu0 %v2788
      %2997 = vmatpush.msra.mxu0 %v2786
      %2998 = vmatpush.msra.mxu0 %v2784
      %2999 = vmatpush.msra.mxu0 %v2782
      %3000 = vmatpush.msra.mxu0 %v2780
      %3001 = vmatpush.msra.mxu0 %v2778
      %3002 = vmatpush.msra.mxu0 %v2776
      %3003 = vmatpush.msra.mxu0 %v2774
      %3004 = vmatpush.msra.mxu0 %v2772
      %3005 = vmatpush.msra.mxu0 %v2770
      %3006 = vmatpush.msra.mxu0 %v2768
      %3007 = vmatpush.msra.mxu0 %v2766
      %3008 = vmatpush.msra.mxu0 %v2764
      %3009 = vmatpush.msra.mxu0 %v2762
      %3010 = vmatpush.msra.mxu0 %v2760
      %3011 = vmatmul.f32.gmra.mxu0 %v2753
      %v3012 = vpop.f32.mrf.mxu0
      %v3013 = vadd.f32 %v2940, %v3012
      %3014 = vmatmul.f32.gmra.mxu0 %v2755
      %v3015 = vpop.f32.mrf.mxu0
      %v3016 = vadd.f32 %v2943, %v3015
      %3017 = vdwg.mxu0
      %3018 = vmatpush.msra.mxu0 0.0
      %3019 = vmatpush.msra.mxu0 0.0
      %3020 = vmatpush.msra.mxu0 0.0
      %3021 = vmatpush.msra.mxu0 0.0
      %3022 = vmatpush.msra.mxu0 0.0
      %3023 = vmatpush.msra.mxu0 0.0
      %3024 = vmatpush.msra.mxu0 0.0
      %3025 = vmatpush.msra.mxu0 0.0
      %3026 = vmatpush.msra.mxu0 0.0
      %3027 = vmatpush.msra.mxu0 0.0
      %3028 = vmatpush.msra.mxu0 0.0
      %3029 = vmatpush.msra.mxu0 0.0
      %3030 = vmatpush.msra.mxu0 0.0
      %3031 = vmatpush.msra.mxu0 0.0
      %3032 = vmatpush.msra.mxu0 %v2794
      %3033 = vmatpush.msra.mxu0 %v2792
      %3034 = vmatmul.f32.gmra.mxu0 %v2945
      %v3035 = vpop.f32.mrf.mxu0
      %v3036 = vadd.f32 %v3013, %v3035
      %3037 = vmatmul.f32.gmra.mxu0 %v2947
      %v3038 = vpop.f32.mrf.mxu0
      %v3039 = vadd.f32 %v3016, %v3038
      %3040 = vdwg.mxu0
      %v3041 = vld [vmem:[%s1128 + $0x40] sm:$0xff]
      %v3042 = vld [vmem:[%s1128 + $0x48] sm:$0xff]
      %v3043 = vld [vmem:[%s1128 + $0x98] sm:$0xff]
      %v3044 = vld [vmem:[%s1128 + $0xa0] sm:$0xff]
      %v3045 = vld [vmem:[%s1128 + $0xf0] sm:$0xff]
      %v3046 = vld [vmem:[%s1128 + $0xf8] sm:$0xff]
      %v3047 = vld [vmem:[%s1128 + $0x148] sm:$0xff]
      %v3048 = vld [vmem:[%s1128 + $0x150] sm:$0xff]
      %v3049 = vld [vmem:[%s1128 + $0x1a0] sm:$0xff]
      %v3050 = vld [vmem:[%s1128 + $0x1a8] sm:$0xff]
      %v3051 = vld [vmem:[%s1128 + $0x1f8] sm:$0xff]
      %v3052 = vld [vmem:[%s1128 + $0x200] sm:$0xff]
      %v3053 = vld [vmem:[%s1128 + $0x250] sm:$0xff]
      %v3054 = vld [vmem:[%s1128 + $0x258] sm:$0xff]
      %v3055 = vld [vmem:[%s1128 + $0x2a8] sm:$0xff]
      %v3056 = vld [vmem:[%s1128 + $0x2b0] sm:$0xff]
      %v3057 = vld [vmem:[%s1128 + $0x300] sm:$0xff]
      %v3058 = vld [vmem:[%s1128 + $0x308] sm:$0xff]
      %v3059 = vld [vmem:[%s1128 + $0x358] sm:$0xff]
      %v3060 = vld [vmem:[%s1128 + $0x360] sm:$0xff]
      %v3061 = vld [vmem:[%s1128 + $0x3b0] sm:$0xff]
      %v3062 = vld [vmem:[%s1128 + $0x3b8] sm:$0xff]
      %v3063 = vld [vmem:[%s1128 + $0x408] sm:$0xff]
      %v3064 = vld [vmem:[%s1128 + $0x410] sm:$0xff]
      %v3065 = vld [vmem:[%s1128 + $0x460] sm:$0xff]
      %v3066 = vld [vmem:[%s1128 + $0x468] sm:$0xff]
      %v3067 = vld [vmem:[%s1128 + $0x4b8] sm:$0xff]
      %v3068 = vld [vmem:[%s1128 + $0x4c0] sm:$0xff]
      %v3069 = vld [vmem:[%s1128 + $0x510] sm:$0xff]
      %v3070 = vld [vmem:[%s1128 + $0x518] sm:$0xff]
      %v3071 = vld [vmem:[%s1128 + $0x568] sm:$0xff]
      %v3072 = vld [vmem:[%s1128 + $0x570] sm:$0xff]
      %v3073 = vld [vmem:[%s1128 + $0x5c0] sm:$0xff]
      %v3074 = vld [vmem:[%s1128 + $0x5c8] sm:$0xff]
      %v3075 = vld [vmem:[%s1128 + $0x618] sm:$0xff]
      %v3076 = vld [vmem:[%s1128 + $0x620] sm:$0xff]
      %v3077 = vrot.slane %v2753, 2
      %v3078 = vrot.slane %v2755, 2
      %v3079 = vsel %vm1147, %v3077, %v3078
      %v3080 = vrot.slane %v2754, 2
      %v3081 = vrot.slane %v2756, 2
      %v3082 = vsel %vm1147, %v3080, %v3081
      %v3083 = vrot.slane %v2757, 2
      %v3084 = vsel %vm1147, %v3078, %v3083
      %v3085 = vrot.slane %v2758, 2
      %v3086 = vsel %vm1147, %v3081, %v3085
      %v3089 = vsel %vm811, %v3082, 0
      %v3091 = vsel %vm811, %v3086, 0
      %3093 = vmatpush.msra.mxu0 %v3071
      %3094 = vmatpush.msra.mxu0 %v3069
      %3095 = vmatpush.msra.mxu0 %v3067
      %3096 = vmatpush.msra.mxu0 %v3065
      %3097 = vmatpush.msra.mxu0 %v3063
      %3098 = vmatpush.msra.mxu0 %v3061
      %3099 = vmatpush.msra.mxu0 %v3059
      %3100 = vmatpush.msra.mxu0 %v3057
      %3101 = vmatpush.msra.mxu0 %v3055
      %3102 = vmatpush.msra.mxu0 %v3053
      %3103 = vmatpush.msra.mxu0 %v3051
      %3104 = vmatpush.msra.mxu0 %v3049
      %3105 = vmatpush.msra.mxu0 %v3047
      %3106 = vmatpush.msra.mxu0 %v3045
      %3107 = vmatpush.msra.mxu0 %v3043
      %3108 = vmatpush.msra.mxu0 %v3041
      %3109 = vmatmul.f32.gmra.mxu0 %v3079
      %v3110 = vpop.f32.mrf.mxu0
      %v3111 = vadd.f32 0.0, %v3110
      %3112 = vmatmul.f32.gmra.mxu0 %v3084
      %v3113 = vpop.f32.mrf.mxu0
      %v3114 = vadd.f32 0.0, %v3113
      %3115 = vdwg.mxu0
      %3116 = vmatpush.msra.mxu0 0.0
      %3117 = vmatpush.msra.mxu0 0.0
      %3118 = vmatpush.msra.mxu0 0.0
      %3119 = vmatpush.msra.mxu0 0.0
      %3120 = vmatpush.msra.mxu0 0.0
      %3121 = vmatpush.msra.mxu0 0.0
      %3122 = vmatpush.msra.mxu0 0.0
      %3123 = vmatpush.msra.mxu0 0.0
      %3124 = vmatpush.msra.mxu0 0.0
      %3125 = vmatpush.msra.mxu0 0.0
      %3126 = vmatpush.msra.mxu0 0.0
      %3127 = vmatpush.msra.mxu0 0.0
      %3128 = vmatpush.msra.mxu0 0.0
      %3129 = vmatpush.msra.mxu0 0.0
      %3130 = vmatpush.msra.mxu0 %v3075
      %3131 = vmatpush.msra.mxu0 %v3073
      %3132 = vmatmul.f32.gmra.mxu0 %v3089
      %v3133 = vpop.f32.mrf.mxu0
      %v3134 = vadd.f32 %v3111, %v3133
      %3135 = vmatmul.f32.gmra.mxu0 %v3091
      %v3136 = vpop.f32.mrf.mxu0
      %v3137 = vadd.f32 %v3114, %v3136
      %3138 = vdwg.mxu0
      %3139 = vmatpush.msra.mxu0 %v3072
      %3140 = vmatpush.msra.mxu0 %v3070
      %3141 = vmatpush.msra.mxu0 %v3068
      %3142 = vmatpush.msra.mxu0 %v3066
      %3143 = vmatpush.msra.mxu0 %v3064
      %3144 = vmatpush.msra.mxu0 %v3062
      %3145 = vmatpush.msra.mxu0 %v3060
      %3146 = vmatpush.msra.mxu0 %v3058
      %3147 = vmatpush.msra.mxu0 %v3056
      %3148 = vmatpush.msra.mxu0 %v3054
      %3149 = vmatpush.msra.mxu0 %v3052
      %3150 = vmatpush.msra.mxu0 %v3050
      %3151 = vmatpush.msra.mxu0 %v3048
      %3152 = vmatpush.msra.mxu0 %v3046
      %3153 = vmatpush.msra.mxu0 %v3044
      %3154 = vmatpush.msra.mxu0 %v3042
      %3155 = vmatmul.f32.gmra.mxu0 %v3079
      %v3156 = vpop.f32.mrf.mxu0
      %v3157 = vadd.f32 0.0, %v3156
      %3158 = vmatmul.f32.gmra.mxu0 %v3084
      %v3159 = vpop.f32.mrf.mxu0
      %v3160 = vadd.f32 0.0, %v3159
      %3161 = vdwg.mxu0
      %3162 = vmatpush.msra.mxu0 0.0
      %3163 = vmatpush.msra.mxu0 0.0
      %3164 = vmatpush.msra.mxu0 0.0
      %3165 = vmatpush.msra.mxu0 0.0
      %3166 = vmatpush.msra.mxu0 0.0
      %3167 = vmatpush.msra.mxu0 0.0
      %3168 = vmatpush.msra.mxu0 0.0
      %3169 = vmatpush.msra.mxu0 0.0
      %3170 = vmatpush.msra.mxu0 0.0
      %3171 = vmatpush.msra.mxu0 0.0
      %3172 = vmatpush.msra.mxu0 0.0
      %3173 = vmatpush.msra.mxu0 0.0
      %3174 = vmatpush.msra.mxu0 0.0
      %3175 = vmatpush.msra.mxu0 0.0
      %3176 = vmatpush.msra.mxu0 %v3076
      %3177 = vmatpush.msra.mxu0 %v3074
      %3178 = vmatmul.f32.gmra.mxu0 %v3089
      %v3179 = vpop.f32.mrf.mxu0
      %v3180 = vadd.f32 %v3157, %v3179
      %3181 = vmatmul.f32.gmra.mxu0 %v3091
      %v3182 = vpop.f32.mrf.mxu0
      %v3183 = vadd.f32 %v3160, %v3182
      %3184 = vdwg.mxu0
      %v3185 = vadd.f32 %v2990, %v3134
      %v3186 = vadd.f32 %v3036, %v3180
      %v3187 = vadd.f32 %v2993, %v3137
      %v3188 = vadd.f32 %v3039, %v3183
      %v3189 = vadd.f32 %v2722, %v3185
      %v3190 = vadd.f32 %v2723, %v3187
      %v3191 = vadd.f32 %v2724, %v3186
      %v3192 = vadd.f32 %v2725, %v3188
      %v3193 = vld [vmem:[%s6 + $0x3] sm:$0x1]
      %v3194 = vperm.slane %v3193, 0
      %v3195 = vadd.f32 %v3189, %v3194
      %v3196 = vadd.f32 %v3190, %v3194
      %v3197 = vmax.f32 %v3195, 0.0
      %v3198 = vmax.f32 %v3196, 0.0
      %v3201 = vrot.slane %v3197, 7
      %v3202 = vrot.slane %v3198, 7
      %v3203 = vsel %vm942, %v3201, %v3202
      %3204 = vrot.lane.b32.xlu0 %v3201, 8
      %v3205 = vpop.permute.xlu0 %3204
      %3206 = vrot.lane.b32.xlu0 %v3203, 8
      %v3207 = vpop.permute.xlu0 %3206
      %3208 = vrot.lane.b32.xlu0 %v3202, 8
      %v3209 = vpop.permute.xlu0 %3208
      %s3213 = scalar_lea.vmem [#allocation2], 192
      %3214 = vst.msk [vmem:[%s3213] sm:$0xfe] %vm955, %v3205
      %3215 = vst.msk [vmem:[%s3213 + $0x8] sm:$0xfe] %vm957, %v3205
      %3216 = vst.msk [vmem:[%s3213 + $0x10] sm:$0xff] %vm959, %v3207
      %3217 = vst.msk [vmem:[%s3213 + $0x18] sm:$0xff] %vm343, %v3207
      %3218 = vst.msk [vmem:[%s3213 + $0x20] sm:$0x1] %vm962, %v3209
      %3219 = vst.msk [vmem:[%s3213 + $0x28] sm:$0x1] %vm964, %v3209
      %v3220 = vld [vmem:[%s3213] sm:$0xff]
      %v3221 = vld [vmem:[%s3213 + $0x8] sm:$0xff]
      %v3222 = vld [vmem:[%s3213 + $0x10] sm:$0xff]
      %v3223 = vld [vmem:[%s3213 + $0x18] sm:$0xff]
      %v3224 = vld [vmem:[%s3213 + $0x20] sm:$0x3]
      %v3225 = vld [vmem:[%s3213 + $0x28] sm:$0x3]
      %v3226 = vld [vmem:[%s4 + $0x50] sm:$0xff]
      %v3227 = vld [vmem:[%s4 + $0xa8] sm:$0xff]
      %v3228 = vld [vmem:[%s4 + $0x100] sm:$0xff]
      %v3229 = vld [vmem:[%s4 + $0x158] sm:$0xff]
      %v3230 = vld [vmem:[%s4 + $0x1b0] sm:$0xff]
      %v3231 = vld [vmem:[%s4 + $0x208] sm:$0xff]
      %v3232 = vld [vmem:[%s4 + $0x260] sm:$0xff]
      %v3233 = vld [vmem:[%s4 + $0x2b8] sm:$0xff]
      %v3234 = vld [vmem:[%s4 + $0x310] sm:$0xff]
      %v3235 = vld [vmem:[%s4 + $0x368] sm:$0xff]
      %v3236 = vld [vmem:[%s4 + $0x3c0] sm:$0xff]
      %v3237 = vld [vmem:[%s4 + $0x418] sm:$0xff]
      %v3238 = vld [vmem:[%s4 + $0x470] sm:$0xff]
      %v3239 = vld [vmem:[%s4 + $0x4c8] sm:$0xff]
      %v3240 = vld [vmem:[%s4 + $0x520] sm:$0xff]
      %v3241 = vld [vmem:[%s4 + $0x578] sm:$0xff]
      %v3242 = vld [vmem:[%s4 + $0x5d0] sm:$0xff]
      %v3243 = vld [vmem:[%s4 + $0x628] sm:$0xff]
      %v3244 = vld [vmem:[%s990 + $0x50] sm:$0xff]
      %v3245 = vld [vmem:[%s990 + $0xa8] sm:$0xff]
      %v3246 = vld [vmem:[%s990 + $0x100] sm:$0xff]
      %v3247 = vld [vmem:[%s990 + $0x158] sm:$0xff]
      %v3248 = vld [vmem:[%s990 + $0x1b0] sm:$0xff]
      %v3249 = vld [vmem:[%s990 + $0x208] sm:$0xff]
      %v3250 = vld [vmem:[%s990 + $0x260] sm:$0xff]
      %v3251 = vld [vmem:[%s990 + $0x2b8] sm:$0xff]
      %v3252 = vld [vmem:[%s990 + $0x310] sm:$0xff]
      %v3253 = vld [vmem:[%s990 + $0x368] sm:$0xff]
      %v3254 = vld [vmem:[%s990 + $0x3c0] sm:$0xff]
      %v3255 = vld [vmem:[%s990 + $0x418] sm:$0xff]
      %v3256 = vld [vmem:[%s990 + $0x470] sm:$0xff]
      %v3257 = vld [vmem:[%s990 + $0x4c8] sm:$0xff]
      %v3258 = vld [vmem:[%s990 + $0x520] sm:$0xff]
      %v3259 = vld [vmem:[%s990 + $0x578] sm:$0xff]
      %v3260 = vld [vmem:[%s990 + $0x5d0] sm:$0xff]
      %v3261 = vld [vmem:[%s990 + $0x628] sm:$0xff]
      %v3268 = vrot.slane %v3220, 1
      %v3269 = vrot.slane %v3222, 1
      %v3270 = vsel %vm1015, %v3268, %v3269
      %v3271 = vrot.slane %v3221, 1
      %v3272 = vrot.slane %v3223, 1
      %v3273 = vsel %vm1015, %v3271, %v3272
      %v3274 = vrot.slane %v3224, 1
      %v3275 = vsel %vm1015, %v3269, %v3274
      %v3276 = vrot.slane %v3225, 1
      %v3277 = vsel %vm1015, %v3272, %v3276
      %v3280 = vsel %vm811, %v3273, 0
      %v3282 = vsel %vm811, %v3277, 0
      %3284 = vmatpush.msra.mxu0 %v3259
      %3285 = vmatpush.msra.mxu0 %v3258
      %3286 = vmatpush.msra.mxu0 %v3257
      %3287 = vmatpush.msra.mxu0 %v3256
      %3288 = vmatpush.msra.mxu0 %v3255
      %3289 = vmatpush.msra.mxu0 %v3254
      %3290 = vmatpush.msra.mxu0 %v3253
      %3291 = vmatpush.msra.mxu0 %v3252
      %3292 = vmatpush.msra.mxu0 %v3251
      %3293 = vmatpush.msra.mxu0 %v3250
      %3294 = vmatpush.msra.mxu0 %v3249
      %3295 = vmatpush.msra.mxu0 %v3248
      %3296 = vmatpush.msra.mxu0 %v3247
      %3297 = vmatpush.msra.mxu0 %v3246
      %3298 = vmatpush.msra.mxu0 %v3245
      %3299 = vmatpush.msra.mxu0 %v3244
      %3300 = vmatmul.f32.gmra.mxu0 %v3270
      %v3301 = vpop.f32.mrf.mxu0
      %v3302 = vadd.f32 0.0, %v3301
      %3303 = vmatmul.f32.gmra.mxu0 %v3275
      %v3304 = vpop.f32.mrf.mxu0
      %v3305 = vadd.f32 0.0, %v3304
      %3306 = vdwg.mxu0
      %3307 = vmatpush.msra.mxu0 0.0
      %3308 = vmatpush.msra.mxu0 0.0
      %3309 = vmatpush.msra.mxu0 0.0
      %3310 = vmatpush.msra.mxu0 0.0
      %3311 = vmatpush.msra.mxu0 0.0
      %3312 = vmatpush.msra.mxu0 0.0
      %3313 = vmatpush.msra.mxu0 0.0
      %3314 = vmatpush.msra.mxu0 0.0
      %3315 = vmatpush.msra.mxu0 0.0
      %3316 = vmatpush.msra.mxu0 0.0
      %3317 = vmatpush.msra.mxu0 0.0
      %3318 = vmatpush.msra.mxu0 0.0
      %3319 = vmatpush.msra.mxu0 0.0
      %3320 = vmatpush.msra.mxu0 0.0
      %3321 = vmatpush.msra.mxu0 %v3261
      %3322 = vmatpush.msra.mxu0 %v3260
      %3323 = vmatmul.f32.gmra.mxu0 %v3280
      %v3324 = vpop.f32.mrf.mxu0
      %v3325 = vadd.f32 %v3302, %v3324
      %3326 = vmatmul.f32.gmra.mxu0 %v3282
      %v3327 = vpop.f32.mrf.mxu0
      %v3328 = vadd.f32 %v3305, %v3327
      %3329 = vdwg.mxu0
      %v3330 = vsel %vm811, %v3221, 0
      %v3332 = vsel %vm811, %v3223, 0
      %3334 = vmatpush.msra.mxu0 %v3241
      %3335 = vmatpush.msra.mxu0 %v3240
      %3336 = vmatpush.msra.mxu0 %v3239
      %3337 = vmatpush.msra.mxu0 %v3238
      %3338 = vmatpush.msra.mxu0 %v3237
      %3339 = vmatpush.msra.mxu0 %v3236
      %3340 = vmatpush.msra.mxu0 %v3235
      %3341 = vmatpush.msra.mxu0 %v3234
      %3342 = vmatpush.msra.mxu0 %v3233
      %3343 = vmatpush.msra.mxu0 %v3232
      %3344 = vmatpush.msra.mxu0 %v3231
      %3345 = vmatpush.msra.mxu0 %v3230
      %3346 = vmatpush.msra.mxu0 %v3229
      %3347 = vmatpush.msra.mxu0 %v3228
      %3348 = vmatpush.msra.mxu0 %v3227
      %3349 = vmatpush.msra.mxu0 %v3226
      %3350 = vmatmul.f32.gmra.mxu0 %v3220
      %v3351 = vpop.f32.mrf.mxu0
      %v3352 = vadd.f32 %v3325, %v3351
      %3353 = vmatmul.f32.gmra.mxu0 %v3222
      %v3354 = vpop.f32.mrf.mxu0
      %v3355 = vadd.f32 %v3328, %v3354
      %3356 = vdwg.mxu0
      %3357 = vmatpush.msra.mxu0 0.0
      %3358 = vmatpush.msra.mxu0 0.0
      %3359 = vmatpush.msra.mxu0 0.0
      %3360 = vmatpush.msra.mxu0 0.0
      %3361 = vmatpush.msra.mxu0 0.0
      %3362 = vmatpush.msra.mxu0 0.0
      %3363 = vmatpush.msra.mxu0 0.0
      %3364 = vmatpush.msra.mxu0 0.0
      %3365 = vmatpush.msra.mxu0 0.0
      %3366 = vmatpush.msra.mxu0 0.0
      %3367 = vmatpush.msra.mxu0 0.0
      %3368 = vmatpush.msra.mxu0 0.0
      %3369 = vmatpush.msra.mxu0 0.0
      %3370 = vmatpush.msra.mxu0 0.0
      %3371 = vmatpush.msra.mxu0 %v3243
      %3372 = vmatpush.msra.mxu0 %v3242
      %3373 = vmatmul.f32.gmra.mxu0 %v3330
      %v3374 = vpop.f32.mrf.mxu0
      %v3375 = vadd.f32 %v3352, %v3374
      %3376 = vmatmul.f32.gmra.mxu0 %v3332
      %v3377 = vpop.f32.mrf.mxu0
      %v3378 = vadd.f32 %v3355, %v3377
      %3379 = vdwg.mxu0
      %v3380 = vld [vmem:[%s1128 + $0x50] sm:$0xff]
      %v3381 = vld [vmem:[%s1128 + $0xa8] sm:$0xff]
      %v3382 = vld [vmem:[%s1128 + $0x100] sm:$0xff]
      %v3383 = vld [vmem:[%s1128 + $0x158] sm:$0xff]
      %v3384 = vld [vmem:[%s1128 + $0x1b0] sm:$0xff]
      %v3385 = vld [vmem:[%s1128 + $0x208] sm:$0xff]
      %v3386 = vld [vmem:[%s1128 + $0x260] sm:$0xff]
      %v3387 = vld [vmem:[%s1128 + $0x2b8] sm:$0xff]
      %v3388 = vld [vmem:[%s1128 + $0x310] sm:$0xff]
      %v3389 = vld [vmem:[%s1128 + $0x368] sm:$0xff]
      %v3390 = vld [vmem:[%s1128 + $0x3c0] sm:$0xff]
      %v3391 = vld [vmem:[%s1128 + $0x418] sm:$0xff]
      %v3392 = vld [vmem:[%s1128 + $0x470] sm:$0xff]
      %v3393 = vld [vmem:[%s1128 + $0x4c8] sm:$0xff]
      %v3394 = vld [vmem:[%s1128 + $0x520] sm:$0xff]
      %v3395 = vld [vmem:[%s1128 + $0x578] sm:$0xff]
      %v3396 = vld [vmem:[%s1128 + $0x5d0] sm:$0xff]
      %v3397 = vld [vmem:[%s1128 + $0x628] sm:$0xff]
      %v3398 = vrot.slane %v3220, 2
      %v3399 = vrot.slane %v3222, 2
      %v3400 = vsel %vm1147, %v3398, %v3399
      %v3401 = vrot.slane %v3221, 2
      %v3402 = vrot.slane %v3223, 2
      %v3403 = vsel %vm1147, %v3401, %v3402
      %v3404 = vrot.slane %v3224, 2
      %v3405 = vsel %vm1147, %v3399, %v3404
      %v3406 = vrot.slane %v3225, 2
      %v3407 = vsel %vm1147, %v3402, %v3406
      %v3410 = vsel %vm811, %v3403, 0
      %v3412 = vsel %vm811, %v3407, 0
      %3414 = vmatpush.msra.mxu0 %v3395
      %3415 = vmatpush.msra.mxu0 %v3394
      %3416 = vmatpush.msra.mxu0 %v3393
      %3417 = vmatpush.msra.mxu0 %v3392
      %3418 = vmatpush.msra.mxu0 %v3391
      %3419 = vmatpush.msra.mxu0 %v3390
      %3420 = vmatpush.msra.mxu0 %v3389
      %3421 = vmatpush.msra.mxu0 %v3388
      %3422 = vmatpush.msra.mxu0 %v3387
      %3423 = vmatpush.msra.mxu0 %v3386
      %3424 = vmatpush.msra.mxu0 %v3385
      %3425 = vmatpush.msra.mxu0 %v3384
      %3426 = vmatpush.msra.mxu0 %v3383
      %3427 = vmatpush.msra.mxu0 %v3382
      %3428 = vmatpush.msra.mxu0 %v3381
      %3429 = vmatpush.msra.mxu0 %v3380
      %3430 = vmatmul.f32.gmra.mxu0 %v3400
      %v3431 = vpop.f32.mrf.mxu0
      %v3432 = vadd.f32 0.0, %v3431
      %3433 = vmatmul.f32.gmra.mxu0 %v3405
      %v3434 = vpop.f32.mrf.mxu0
      %v3435 = vadd.f32 0.0, %v3434
      %3436 = vdwg.mxu0
      %3437 = vmatpush.msra.mxu0 0.0
      %3438 = vmatpush.msra.mxu0 0.0
      %3439 = vmatpush.msra.mxu0 0.0
      %3440 = vmatpush.msra.mxu0 0.0
      %3441 = vmatpush.msra.mxu0 0.0
      %3442 = vmatpush.msra.mxu0 0.0
      %3443 = vmatpush.msra.mxu0 0.0
      %3444 = vmatpush.msra.mxu0 0.0
      %3445 = vmatpush.msra.mxu0 0.0
      %3446 = vmatpush.msra.mxu0 0.0
      %3447 = vmatpush.msra.mxu0 0.0
      %3448 = vmatpush.msra.mxu0 0.0
      %3449 = vmatpush.msra.mxu0 0.0
      %3450 = vmatpush.msra.mxu0 0.0
      %3451 = vmatpush.msra.mxu0 %v3397
      %3452 = vmatpush.msra.mxu0 %v3396
      %3453 = vmatmul.f32.gmra.mxu0 %v3410
      %v3454 = vpop.f32.mrf.mxu0
      %v3455 = vadd.f32 %v3432, %v3454
      %3456 = vmatmul.f32.gmra.mxu0 %v3412
      %v3457 = vpop.f32.mrf.mxu0
      %v3458 = vadd.f32 %v3435, %v3457
      %3459 = vdwg.mxu0
      %v3460 = vadd.f32 %v3375, %v3455
      %v3461 = vadd.f32 %v3378, %v3458
      %v3462 = vadd.f32 %v3191, %v3460
      %v3463 = vadd.f32 %v3192, %v3461
      %v3464 = vld [vmem:[%s6 + $0x4] sm:$0x1]
      %v3465 = vperm.slane %v3464, 0
      %v3466 = vadd.f32 %v3462, %v3465
      %v3467 = vadd.f32 %v3463, %v3465
      %v3468 = vmax.f32 %v3466, 0.0
      %v3469 = vmax.f32 %v3467, 0.0
      %v3470 = vld [vmem:[%s5] sm:$0xff]
      %v3471 = vld [vmem:[%s5 + $0x8] sm:$0xff]
      %v3472 = vld [vmem:[%s5 + $0x10] sm:$0xff]
      %v3473 = vld [vmem:[%s5 + $0x18] sm:$0xff]
      %v3474 = vld [vmem:[%s5 + $0x20] sm:$0xff]
      %v3475 = vld [vmem:[%s5 + $0x28] sm:$0xff]
      %v3476 = vld [vmem:[%s5 + $0x30] sm:$0xff]
      %v3477 = vld [vmem:[%s5 + $0x38] sm:$0xff]
      %v3478 = vld [vmem:[%s5 + $0x40] sm:$0xff]
      %v3479 = vld [vmem:[%s5 + $0x48] sm:$0xff]
      %v3480 = vld [vmem:[%s5 + $0x50] sm:$0xff]
      %v3481 = vld [vmem:[%s5 + $0x58] sm:$0xff]
      %v3482 = vld [vmem:[%s5 + $0x60] sm:$0xff]
      %v3483 = vld [vmem:[%s5 + $0x68] sm:$0xff]
      %v3484 = vld [vmem:[%s5 + $0x70] sm:$0xff]
      %v3485 = vld [vmem:[%s5 + $0x78] sm:$0xff]
      %s3486 = scalar_lea.vmem %s5, 128
      %v3487 = vld [vmem:[%s3486] sm:$0xff]
      %v3488 = vld [vmem:[%s3486 + $0x8] sm:$0xff]
      %v3489 = vld [vmem:[%s3486 + $0x10] sm:$0xff]
      %v3490 = vld [vmem:[%s3486 + $0x18] sm:$0xff]
      %v3491 = vld [vmem:[%s3486 + $0x20] sm:$0xff]
      %v3492 = vld [vmem:[%s3486 + $0x28] sm:$0xff]
      %v3493 = vld [vmem:[%s3486 + $0x30] sm:$0xff]
      %v3494 = vld [vmem:[%s3486 + $0x38] sm:$0xff]
      %v3495 = vld [vmem:[%s3486 + $0x40] sm:$0xff]
      %v3496 = vld [vmem:[%s3486 + $0x48] sm:$0xff]
      %v3497 = vld [vmem:[%s3486 + $0x50] sm:$0xff]
      %v3498 = vld [vmem:[%s3486 + $0x58] sm:$0xff]
      %v3499 = vld [vmem:[%s3486 + $0x60] sm:$0xff]
      %v3500 = vld [vmem:[%s3486 + $0x68] sm:$0xff]
      %v3501 = vld [vmem:[%s3486 + $0x70] sm:$0xff]
      %v3502 = vld [vmem:[%s3486 + $0x78] sm:$0xff]
      %3503 = vmatpush.msra.mxu0 %v3502
      %3504 = vmatpush.msra.mxu0 %v3501
      %3505 = vmatpush.msra.mxu0 %v3500
      %3506 = vmatpush.msra.mxu0 %v3499
      %3507 = vmatpush.msra.mxu0 %v3498
      %3508 = vmatpush.msra.mxu0 %v3497
      %3509 = vmatpush.msra.mxu0 %v3496
      %3510 = vmatpush.msra.mxu0 %v3495
      %3511 = vmatpush.msra.mxu0 %v3494
      %3512 = vmatpush.msra.mxu0 %v3493
      %3513 = vmatpush.msra.mxu0 %v3492
      %3514 = vmatpush.msra.mxu0 %v3491
      %3515 = vmatpush.msra.mxu0 %v3490
      %3516 = vmatpush.msra.mxu0 %v3489
      %3517 = vmatpush.msra.mxu0 %v3488
      %3518 = vmatpush.msra.mxu0 %v3487
      %3519 = vmatmul.f32.gmra.mxu0 %v2067
      %v3520 = vpop.f32.mrf.mxu0
      %v3521 = vadd.f32 0.0, %v3520
      %3522 = vmatmul.f32.gmra.mxu0 %v2068
      %v3523 = vpop.f32.mrf.mxu0
      %v3524 = vadd.f32 0.0, %v3523
      %3525 = vdwg.mxu0
      %3526 = vmatpush.msra.mxu0 %v3485
      %3527 = vmatpush.msra.mxu0 %v3484
      %3528 = vmatpush.msra.mxu0 %v3483
      %3529 = vmatpush.msra.mxu0 %v3482
      %3530 = vmatpush.msra.mxu0 %v3481
      %3531 = vmatpush.msra.mxu0 %v3480
      %3532 = vmatpush.msra.mxu0 %v3479
      %3533 = vmatpush.msra.mxu0 %v3478
      %3534 = vmatpush.msra.mxu0 %v3477
      %3535 = vmatpush.msra.mxu0 %v3476
      %3536 = vmatpush.msra.mxu0 %v3475
      %3537 = vmatpush.msra.mxu0 %v3474
      %3538 = vmatpush.msra.mxu0 %v3473
      %3539 = vmatpush.msra.mxu0 %v3472
      %3540 = vmatpush.msra.mxu0 %v3471
      %3541 = vmatpush.msra.mxu0 %v3470
      %3542 = vmatmul.f32.gmra.mxu0 %v1216
      %v3543 = vpop.f32.mrf.mxu0
      %v3544 = vadd.f32 %v3521, %v3543
      %3545 = vmatmul.f32.gmra.mxu0 %v1217
      %v3546 = vpop.f32.mrf.mxu0
      %v3547 = vadd.f32 %v3524, %v3546
      %3548 = vdwg.mxu0
      %s3549 = scalar_lea.vmem %s5, 256
      %v3550 = vld [vmem:[%s3549] sm:$0xff]
      %v3551 = vld [vmem:[%s3549 + $0x8] sm:$0xff]
      %v3552 = vld [vmem:[%s3549 + $0x10] sm:$0xff]
      %v3553 = vld [vmem:[%s3549 + $0x18] sm:$0xff]
      %v3554 = vld [vmem:[%s3549 + $0x20] sm:$0xff]
      %v3555 = vld [vmem:[%s3549 + $0x28] sm:$0xff]
      %v3556 = vld [vmem:[%s3549 + $0x30] sm:$0xff]
      %v3557 = vld [vmem:[%s3549 + $0x38] sm:$0xff]
      %v3558 = vld [vmem:[%s3549 + $0x40] sm:$0xff]
      %v3559 = vld [vmem:[%s3549 + $0x48] sm:$0xff]
      %v3560 = vld [vmem:[%s3549 + $0x50] sm:$0xff]
      %v3561 = vld [vmem:[%s3549 + $0x58] sm:$0xff]
      %v3562 = vld [vmem:[%s3549 + $0x60] sm:$0xff]
      %v3563 = vld [vmem:[%s3549 + $0x68] sm:$0xff]
      %v3564 = vld [vmem:[%s3549 + $0x70] sm:$0xff]
      %v3565 = vld [vmem:[%s3549 + $0x78] sm:$0xff]
      %3566 = vmatpush.msra.mxu0 %v3565
      %3567 = vmatpush.msra.mxu0 %v3564
      %3568 = vmatpush.msra.mxu0 %v3563
      %3569 = vmatpush.msra.mxu0 %v3562
      %3570 = vmatpush.msra.mxu0 %v3561
      %3571 = vmatpush.msra.mxu0 %v3560
      %3572 = vmatpush.msra.mxu0 %v3559
      %3573 = vmatpush.msra.mxu0 %v3558
      %3574 = vmatpush.msra.mxu0 %v3557
      %3575 = vmatpush.msra.mxu0 %v3556
      %3576 = vmatpush.msra.mxu0 %v3555
      %3577 = vmatpush.msra.mxu0 %v3554
      %3578 = vmatpush.msra.mxu0 %v3553
      %3579 = vmatpush.msra.mxu0 %v3552
      %3580 = vmatpush.msra.mxu0 %v3551
      %3581 = vmatpush.msra.mxu0 %v3550
      %3582 = vmatmul.f32.gmra.mxu0 %v2730
      %v3583 = vpop.f32.mrf.mxu0
      %v3584 = vadd.f32 0.0, %v3583
      %3585 = vmatmul.f32.gmra.mxu0 %v2731
      %v3586 = vpop.f32.mrf.mxu0
      %v3587 = vadd.f32 0.0, %v3586
      %3588 = vdwg.mxu0
      %v3589 = vadd.f32 %v3544, %v3584
      %v3590 = vadd.f32 %v3547, %v3587
      %s3591 = scalar_lea.vmem %s5, 384
      %v3592 = vld [vmem:[%s3591] sm:$0xff]
      %v3593 = vld [vmem:[%s3591 + $0x8] sm:$0xff]
      %v3594 = vld [vmem:[%s3591 + $0x10] sm:$0xff]
      %v3595 = vld [vmem:[%s3591 + $0x18] sm:$0xff]
      %v3596 = vld [vmem:[%s3591 + $0x20] sm:$0xff]
      %v3597 = vld [vmem:[%s3591 + $0x28] sm:$0xff]
      %v3598 = vld [vmem:[%s3591 + $0x30] sm:$0xff]
      %v3599 = vld [vmem:[%s3591 + $0x38] sm:$0xff]
      %v3600 = vld [vmem:[%s3591 + $0x40] sm:$0xff]
      %v3601 = vld [vmem:[%s3591 + $0x48] sm:$0xff]
      %v3602 = vld [vmem:[%s3591 + $0x50] sm:$0xff]
      %v3603 = vld [vmem:[%s3591 + $0x58] sm:$0xff]
      %v3604 = vld [vmem:[%s3591 + $0x60] sm:$0xff]
      %v3605 = vld [vmem:[%s3591 + $0x68] sm:$0xff]
      %v3606 = vld [vmem:[%s3591 + $0x70] sm:$0xff]
      %v3607 = vld [vmem:[%s3591 + $0x78] sm:$0xff]
      %3608 = vmatpush.msra.mxu0 %v3607
      %3609 = vmatpush.msra.mxu0 %v3606
      %3610 = vmatpush.msra.mxu0 %v3605
      %3611 = vmatpush.msra.mxu0 %v3604
      %3612 = vmatpush.msra.mxu0 %v3603
      %3613 = vmatpush.msra.mxu0 %v3602
      %3614 = vmatpush.msra.mxu0 %v3601
      %3615 = vmatpush.msra.mxu0 %v3600
      %3616 = vmatpush.msra.mxu0 %v3599
      %3617 = vmatpush.msra.mxu0 %v3598
      %3618 = vmatpush.msra.mxu0 %v3597
      %3619 = vmatpush.msra.mxu0 %v3596
      %3620 = vmatpush.msra.mxu0 %v3595
      %3621 = vmatpush.msra.mxu0 %v3594
      %3622 = vmatpush.msra.mxu0 %v3593
      %3623 = vmatpush.msra.mxu0 %v3592
      %3624 = vmatmul.f32.gmra.mxu0 %v3197
      %v3625 = vpop.f32.mrf.mxu0
      %v3626 = vadd.f32 0.0, %v3625
      %3627 = vmatmul.f32.gmra.mxu0 %v3198
      %v3628 = vpop.f32.mrf.mxu0
      %v3629 = vadd.f32 0.0, %v3628
      %3630 = vdwg.mxu0
      %v3631 = vadd.f32 %v3589, %v3626
      %v3632 = vadd.f32 %v3590, %v3629
      %s3633 = scalar_lea.vmem %s5, 512
      %v3634 = vld [vmem:[%s3633] sm:$0xff]
      %v3635 = vld [vmem:[%s3633 + $0x8] sm:$0xff]
      %v3636 = vld [vmem:[%s3633 + $0x10] sm:$0xff]
      %v3637 = vld [vmem:[%s3633 + $0x18] sm:$0xff]
      %v3638 = vld [vmem:[%s3633 + $0x20] sm:$0xff]
      %v3639 = vld [vmem:[%s3633 + $0x28] sm:$0xff]
      %v3640 = vld [vmem:[%s3633 + $0x30] sm:$0xff]
      %v3641 = vld [vmem:[%s3633 + $0x38] sm:$0xff]
      %v3642 = vld [vmem:[%s3633 + $0x40] sm:$0xff]
      %v3643 = vld [vmem:[%s3633 + $0x48] sm:$0xff]
      %v3644 = vld [vmem:[%s3633 + $0x50] sm:$0xff]
      %v3645 = vld [vmem:[%s3633 + $0x58] sm:$0xff]
      %v3646 = vld [vmem:[%s3633 + $0x60] sm:$0xff]
      %v3647 = vld [vmem:[%s3633 + $0x68] sm:$0xff]
      %v3648 = vld [vmem:[%s3633 + $0x70] sm:$0xff]
      %v3649 = vld [vmem:[%s3633 + $0x78] sm:$0xff]
      %3650 = vmatpush.msra.mxu0 %v3649
      %3651 = vmatpush.msra.mxu0 %v3648
      %3652 = vmatpush.msra.mxu0 %v3647
      %3653 = vmatpush.msra.mxu0 %v3646
      %3654 = vmatpush.msra.mxu0 %v3645
      %3655 = vmatpush.msra.mxu0 %v3644
      %3656 = vmatpush.msra.mxu0 %v3643
      %3657 = vmatpush.msra.mxu0 %v3642
      %3658 = vmatpush.msra.mxu0 %v3641
      %3659 = vmatpush.msra.mxu0 %v3640
      %3660 = vmatpush.msra.mxu0 %v3639
      %3661 = vmatpush.msra.mxu0 %v3638
      %3662 = vmatpush.msra.mxu0 %v3637
      %3663 = vmatpush.msra.mxu0 %v3636
      %3664 = vmatpush.msra.mxu0 %v3635
      %3665 = vmatpush.msra.mxu0 %v3634
      %3666 = vmatmul.f32.gmra.mxu0 %v3468
      %v3667 = vpop.f32.mrf.mxu0
      %v3668 = vadd.f32 0.0, %v3667
      %3669 = vmatmul.f32.gmra.mxu0 %v3469
      %v3670 = vpop.f32.mrf.mxu0
      %v3671 = vadd.f32 0.0, %v3670
      %3672 = vdwg.mxu0
      %v3673 = vadd.f32 %v3631, %v3668
      %v3674 = vadd.f32 %v3632, %v3671
      %v3675 = vld [vmem:[%s6 + $0x5] sm:$0x1]
      %v3676 = vperm.slane %v3675, 0
      %v3677 = vadd.f32 %v3673, %v3676
      %v3678 = vadd.f32 %v3674, %v3676
      %3679 = vst [vmem:[%s278] sm:$0xff] %v3677
      %3680 = vst [vmem:[%s278 + $0x8] sm:$0xff] %v3678
      %p3681 = scmp.lt.s32.totalorder %s18, 1
      %s3682 = scalar_select %p3681, %s18, 1
      %s3683 = smul.addr %s3682, 2
      %s3684 = smul.addr %s3683, 8
      %s3685 = scalar_lea.vmem %s7, %s3684
      // Predicated region
      $region49: #{densenet_forward.1} parent=47 // pred_check
        %p3686 = pneg %p188
      $region50: #{densenet_forward.1} parent=47 // pred_check_branch
        %3688 = sbr.rel (%p3686) target = $region52
      $region51: #{densenet_forward.1} parent=47 // pred_region
        _
      $region52: #{densenet_forward.1} parent=47 // pred_fallthru
        _
    $region48: #{densenet_forward.1} parent=5 // pred_fallthru
      _
    %p3689 = scmp.le.s32.totalorder 2, %s13
    // Predicated region
    $region53: #{densenet_forward.1} parent=5 // pred_check
      %p3690 = pneg %p3689
    $region54: #{densenet_forward.1} parent=5 // pred_check_branch
      %3692 = sbr.rel (%p3690) target = $region56
    $region55: #{densenet_forward.1} parent=5 // pred_region
      %s3693 = ssub.s32 %s13, 2
      // Predicated region
      $region57: #{densenet_forward.1} parent=55 // pred_check
        %p3694 = pneg %p194
      $region58: #{densenet_forward.1} parent=55 // pred_check_branch
        %3696 = sbr.rel (%p3694) target = $region60
      $region59: #{densenet_forward.1} parent=55 // pred_region
        %p3697 = scmp.lt.s32.totalorder %s19, 1
        %s3698 = scalar_select %p3697, %s19, 1
        %s3699 = smul.addr %s3698, 2
        %s3700 = smul.addr %s3699, 8
        %s3701 = scalar_lea.vmem %s7, %s3700
      $region60: #{densenet_forward.1} parent=55 // pred_fallthru
        _
    $region56: #{densenet_forward.1} parent=5 // pred_fallthru
      _
  $region6: #{densenet_forward.1} parent=0 // loop_footer
    %s17 = sadd.s32 1, %s13
  $region7: #{densenet_forward.1} parent=0 // loop_footer_branch
    %12 = sbr.rel target = $region3
  $region8: #{densenet_forward.1} parent=0 // loop_exit
    _

</llo_original>
